<compile_context>
chip_gen: v7x
topology: tpu7x:2x2x1
jax: 0.10.0
libtpu: 0.0.40
codegen_flags: <defaults>
</compile_context>

<pallas_src>
import jax
import jax.numpy as jnp
from jax.experimental import pallas as pl
from jax.experimental.pallas import tpu as pltpu

_LPAD = 16  # bf16 (16,128)-tile-aligned left margin in the y1 scratch; col _LPAD-1 is the zero pad


def _round_up(x, m):
    return (x + m - 1) // m * m


def _resblock_kernel(x_ref, w1_ref, b1_ref, w2_ref, b2_ref, out_ref, ypad_ref):
    # x_ref:    (TH+4, W+2, Cp) f32   row-tile of the zero-padded input (2-row / 1-col halo)
    # w{1,2}:   (9, Cp, Cp)     bf16  per-tap conv weights, tap t -> (dy, dx) = divmod(t, 3)
    # b{1,2}:   (1, Cp)         f32
    # out_ref:  (TH, W, Cp)     f32
    # ypad_ref: (TH+2, WP, Cp)  bf16  relu(conv1) staged with a zero border for conv2's halo
    TH, W, Cp = out_ref.shape
    WP = ypad_ref.shape[1]

    # ---- conv1: relu(x) once, cast to bf16 once, 9 per-tap K=Cp matmuls, f32 accumulation ----
    a = jnp.maximum(x_ref[...], 0.0).astype(jnp.bfloat16)      # (TH+4, W+2, Cp)
    a_dx = [a[:, dx:dx + W, :] for dx in range(3)]              # hoisted dx shifts (3, not 9)
    acc1 = None
    for t in range(9):
        dy, dx = divmod(t, 3)
        tap = a_dx[dx][dy:dy + TH + 2].reshape((TH + 2) * W, Cp)
        d = jnp.dot(tap, w1_ref[t], preferred_element_type=jnp.float32)
        acc1 = d if acc1 is None else acc1 + d
    y1 = jnp.maximum(acc1 + b1_ref[...], 0.0)                   # bias + relu in f32

    # ---- stage relu(conv1) (TH rows + 1 halo row each side) in the bf16 scratch ----
    # Margins are rewritten every step; the left margin / interior stores are (16,128)-aligned
    # when W % 16 == 0 (otherwise they degrade to masked stores, correctness unaffected).
    ypad_ref[:, 0:_LPAD, :] = jnp.zeros((TH + 2, _LPAD, Cp), jnp.bfloat16)
    ypad_ref[:, _LPAD + W:, :] = jnp.zeros((TH + 2, WP - (_LPAD + W), Cp), jnp.bfloat16)
    ypad_ref[:, _LPAD:_LPAD + W, :] = y1.astype(jnp.bfloat16).reshape(TH + 2, W, Cp)

    # conv2's zero padding where the halo rows fall outside the image (first / last row tile).
    row = pl.program_id(1)

    @pl.when(row == 0)
    def _():
        ypad_ref[0] = jnp.zeros((WP, Cp), jnp.bfloat16)

    @pl.when(row == pl.num_programs(1) - 1)
    def _():
        ypad_ref[TH + 1] = jnp.zeros((WP, Cp), jnp.bfloat16)

    # ---- conv2: 9 per-tap K=Cp matmuls over the zero-bordered bf16 scratch ----
    c0 = _LPAD - 1
    p_dx = [ypad_ref[:, c0 + dx:c0 + dx + W, :] for dx in range(3)]   # hoisted dx shifts
    acc2 = None
    for t in range(9):
        dy, dx = divmod(t, 3)
        tap = p_dx[dx][dy:dy + TH].reshape(TH * W, Cp)
        d = jnp.dot(tap, w2_ref[t], preferred_element_type=jnp.float32)
        acc2 = d if acc2 is None else acc2 + d
    y2 = (acc2 + b2_ref[...]).reshape(TH, W, Cp)

    # residual add with the ORIGINAL (un-relu'd) f32 input (tile interior)
    out_ref[...] = (y2 + x_ref[2:TH + 2, 1:W + 1, :]).astype(out_ref.dtype)


def _vmem_per_step_bytes(th, W, Cp):
    wp = _LPAD + _round_up(W + 1, 16)
    x_tile = (th + 4) * (W + 2) * Cp * 4          # f32 input block
    out_tile = th * W * Cp * 4                    # f32 output block
    ypad = (th + 2) * wp * Cp * 2                 # bf16 scratch
    a_bf16 = (th + 4) * (W + 2) * Cp * 2          # relu(x) cast
    dx_planes = 3 * (th + 4) * W * Cp * 2         # hoisted dx shift copies (bf16)
    acc = (th + 2) * W * Cp * 4                   # f32 accumulator
    weights = 2 * (9 * Cp * Cp * 2 + Cp * 4)      # one copy of w1/b1/w2/b2
    return 2 * (x_tile + out_tile + weights) + ypad + a_bf16 + dx_planes + 2 * acc


def _pick_row_tile(H, W, Cp, budget=16 * 1024 * 1024):
    th = 1
    for cand in range(1, H + 1):
        if H % cand == 0 and _vmem_per_step_bytes(cand, W, Cp) <= budget:
            th = cand
    return th


@jax.jit
def residual_block_pallas(x_nchw, w1, b1, w2, b2):
    """x_nchw: (N, C, H, W) f32. w*: (3, 3, Cin, Cout) HWIO, b*: (C,). Returns (N, C, H, W)."""
    N, C, H, W = x_nchw.shape
    Cp = _round_up(C, 128)                         # lane-dense channel padding
    WP = _LPAD + _round_up(W + 1, 16)              # scratch width (bf16-tile-aligned margins)
    TH = _pick_row_tile(H, W, Cp)
    n_th = H // TH

    # NCHW -> NHWC, then one fused pad: 2-row top/bottom halo (5x5 receptive field), 1-col
    # left/right halo, channel pad to the 128-lane boundary.
    x = jnp.transpose(x_nchw, (0, 2, 3, 1)).astype(jnp.float32)
    xpp = jnp.pad(x, ((0, 0), (2, 2), (1, 1), (0, Cp - C)))            # (N, H+4, W+2, Cp)

    if n_th == 1:
        x_tiles = xpp[:, None]                                          # no duplication
    else:
        x_tiles = jnp.stack([xpp[:, s:s + TH + 4] for s in range(0, H, TH)], axis=1)

    def prep_w(w):   # (3,3,C,C) HWIO -> (9, Cp, Cp) bf16, tap index t = dy*3 + dx
        wp = jnp.pad(w.astype(jnp.float32), ((0, 0), (0, 0), (0, Cp - C), (0, Cp - C)))
        return wp.reshape(9, Cp, Cp).astype(jnp.bfloat16)

    def prep_b(b):
        return jnp.pad(b.astype(jnp.float32), (0, Cp - C)).reshape(1, Cp)

    flops = 2 * 2 * 9 * N * H * W * Cp * Cp
    bytes_accessed = int(x_tiles.size) * 4 + N * H * W * Cp * 4 + 2 * (9 * Cp * Cp * 2 + Cp * 4)

    out = pl.pallas_call(
        _resblock_kernel,
        out_shape=jax.ShapeDtypeStruct((N, H, W, Cp), jnp.float32),
        grid_spec=pltpu.PrefetchScalarGridSpec(
            num_scalar_prefetch=0,
            grid=(N, n_th),
            in_specs=[
                pl.BlockSpec((None, None, TH + 4, W + 2, Cp), lambda n, i: (n, i, 0, 0, 0)),
                # weights / biases: grid-invariant blocks, fetched once by the pipeline
                pl.BlockSpec((9, Cp, Cp), lambda n, i: (0, 0, 0)),
                pl.BlockSpec((1, Cp), lambda n, i: (0, 0)),
                pl.BlockSpec((9, Cp, Cp), lambda n, i: (0, 0, 0)),
                pl.BlockSpec((1, Cp), lambda n, i: (0, 0)),
            ],
            out_specs=pl.BlockSpec((None, TH, W, Cp), lambda n, i: (n, i, 0, 0)),
            scratch_shapes=[pltpu.VMEM((TH + 2, WP, Cp), jnp.bfloat16)],
        ),
        compiler_params=pltpu.CompilerParams(
            dimension_semantics=("parallel", "parallel"),
            vmem_limit_bytes=48 * 1024 * 1024),
        cost_estimate=pl.CostEstimate(flops=flops, transcendentals=0,
                                      bytes_accessed=bytes_accessed),
    )(x_tiles, prep_w(w1), prep_b(b1), prep_w(w2), prep_b(b2))

    # strip channel padding, NHWC -> NCHW (interface requirement of the PyTorch module)
    return jnp.transpose(out[..., :C], (0, 3, 1, 2))


def _reference(x_nchw, w1, b1, w2, b2):
    # Pure-JAX reference (NCHW, OIHW like PyTorch) for correctness checking.
    w1_oihw = jnp.transpose(w1, (3, 2, 0, 1))
    w2_oihw = jnp.transpose(w2, (3, 2, 0, 1))

    def conv(x, w, b):
        y = jax.lax.conv_general_dilated(
            x, w, window_strides=(1, 1), padding=((1, 1), (1, 1)),
            dimension_numbers=("NCHW", "OIHW", "NCHW"))
        return y + b.reshape(1, -1, 1, 1)

    h = conv(jax.nn.relu(x_nchw), w1_oihw, b1)
    h = conv(jax.nn.relu(h), w2_oihw, b2)
    return h + x_nchw


if __name__ == "__main__":
    N, C, H, W = 2, 4, 16, 16
    key = jax.random.PRNGKey(0)
    kx, kw1, kb1, kw2, kb2 = jax.random.split(key, 5)

    x = jax.random.normal(kx, (N, C, H, W), dtype=jnp.float32)

    # Deterministic param init (PyTorch Conv2d-like kaiming-uniform bound)
    fan_in = C * 3 * 3
    bound = 1.0 / jnp.sqrt(fan_in)
    w1 = jax.random.uniform(kw1, (3, 3, C, C), jnp.float32, -bound, bound)
    b1 = jax.random.uniform(kb1, (C,), jnp.float32, -bound, bound)
    w2 = jax.random.uniform(kw2, (3, 3, C, C), jnp.float32, -bound, bound)
    b2 = jax.random.uniform(kb2, (C,), jnp.float32, -bound, bound)

    out = residual_block_pallas(x, w1, b1, w2, b2)
    out = jax.block_until_ready(out)

    ref = _reference(x, w1, b1, w2, b2)
    assert out.shape == (N, C, H, W)
    # bf16 MXU operands + bf16 staging of relu(conv1) with f32 accumulation -> loose tolerance
    assert jnp.allclose(out, ref, atol=5e-2, rtol=5e-2), "mismatch vs reference"

    print("KERNEL_OK")
</pallas_src>

<mosaic_0001>
module attributes {stable_mosaic.version = 11 : i64} {
  func.func @_resblock_kernel(%arg0: i32, %arg1: i32, %arg2: memref<1x1x20x18x128xf32, #tpu.memory_space<vmem>>, %arg3: memref<9x128x128xbf16, #tpu.memory_space<vmem>>, %arg4: memref<1x128xf32, #tpu.memory_space<vmem>>, %arg5: memref<9x128x128xbf16, #tpu.memory_space<vmem>>, %arg6: memref<1x128xf32, #tpu.memory_space<vmem>>, %arg7: memref<1x16x16x128xf32, #tpu.memory_space<vmem>>, %arg8: memref<18x48x128xbf16, #tpu.memory_space<vmem>>) attributes {dimension_semantics = [#tpu.dimension_semantics<parallel>, #tpu.dimension_semantics<parallel>], iteration_bounds = array<i64: 2, 1>, scalar_prefetch = 0 : i64, scratch_operands = 1 : i64, tpu.core_type = #tpu.core_type<tc>, window_params = [{transform_indices = @transform_0, window_bounds = array<i64: 1, 1, 20, 18, 128>}, {pipeline_mode = #tpu.pipeline_mode<synchronous>, transform_indices = @transform_1, window_bounds = array<i64: 9, 128, 128>}, {pipeline_mode = #tpu.pipeline_mode<synchronous>, transform_indices = @transform_2, window_bounds = array<i64: 1, 128>}, {pipeline_mode = #tpu.pipeline_mode<synchronous>, transform_indices = @transform_3, window_bounds = array<i64: 9, 128, 128>}, {pipeline_mode = #tpu.pipeline_mode<synchronous>, transform_indices = @transform_4, window_bounds = array<i64: 1, 128>}, {transform_indices = @transform_5, window_bounds = array<i64: 1, 16, 16, 128>}]} {
    %c0 = arith.constant 0 : index
    %c0_0 = arith.constant 0 : index
    %c0_1 = arith.constant 0 : index
    %c0_2 = arith.constant 0 : index
    %c0_3 = arith.constant 0 : index
    %0 = vector.load %arg2[%c0, %c0_0, %c0_1, %c0_2, %c0_3] : memref<1x1x20x18x128xf32, #tpu.memory_space<vmem>>, vector<1x1x20x18x128xf32>
    %1 = vector.shape_cast %0 : vector<1x1x20x18x128xf32> to vector<20x18x128xf32>
    %cst = arith.constant 0.000000e+00 : f32
    %2 = vector.broadcast %cst : f32 to vector<20x18x128xf32>
    %3 = arith.maximumf %1, %2 : vector<20x18x128xf32>
    %4 = arith.truncf %3 : vector<20x18x128xf32> to vector<20x18x128xbf16>
    %5 = vector.extract_strided_slice %4 {offsets = [0, 0, 0], sizes = [20, 16, 128], strides = [1, 1, 1]} : vector<20x18x128xbf16> to vector<20x16x128xbf16>
    %6 = vector.extract_strided_slice %4 {offsets = [0, 1, 0], sizes = [20, 16, 128], strides = [1, 1, 1]} : vector<20x18x128xbf16> to vector<20x16x128xbf16>
    %7 = vector.extract_strided_slice %4 {offsets = [0, 2, 0], sizes = [20, 16, 128], strides = [1, 1, 1]} : vector<20x18x128xbf16> to vector<20x16x128xbf16>
    %8 = vector.extract_strided_slice %5 {offsets = [0, 0, 0], sizes = [18, 16, 128], strides = [1, 1, 1]} : vector<20x16x128xbf16> to vector<18x16x128xbf16>
    %9 = vector.shape_cast %8 : vector<18x16x128xbf16> to vector<288x128xbf16>
    %c0_4 = arith.constant 0 : index
    %c0_5 = arith.constant 0 : index
    %c0_6 = arith.constant 0 : index
    %10 = vector.load %arg3[%c0_4, %c0_5, %c0_6] : memref<9x128x128xbf16, #tpu.memory_space<vmem>>, vector<1x128x128xbf16>
    %11 = vector.shape_cast %10 : vector<1x128x128xbf16> to vector<128x128xbf16>
    %cst_7 = arith.constant dense<0.000000e+00> : vector<288x128xf32>
    %12 = tpu.matmul %9, %11, %cst_7 {dimension_numbers = #tpu.dot_dimension_numbers<[1], [0], [0], [1], [0, 0, 1, 1], [], []>} : vector<288x128xbf16>, vector<128x128xbf16>, vector<288x128xf32> -> vector<288x128xf32>
    %13 = vector.extract_strided_slice %6 {offsets = [0, 0, 0], sizes = [18, 16, 128], strides = [1, 1, 1]} : vector<20x16x128xbf16> to vector<18x16x128xbf16>
    %14 = vector.shape_cast %13 : vector<18x16x128xbf16> to vector<288x128xbf16>
    %c1 = arith.constant 1 : index
    %c0_8 = arith.constant 0 : index
    %c0_9 = arith.constant 0 : index
    %15 = vector.load %arg3[%c1, %c0_8, %c0_9] : memref<9x128x128xbf16, #tpu.memory_space<vmem>>, vector<1x128x128xbf16>
    %16 = vector.shape_cast %15 : vector<1x128x128xbf16> to vector<128x128xbf16>
    %cst_10 = arith.constant dense<0.000000e+00> : vector<288x128xf32>
    %17 = tpu.matmul %14, %16, %cst_10 {dimension_numbers = #tpu.dot_dimension_numbers<[1], [0], [0], [1], [0, 0, 1, 1], [], []>} : vector<288x128xbf16>, vector<128x128xbf16>, vector<288x128xf32> -> vector<288x128xf32>
    %18 = arith.addf %12, %17 : vector<288x128xf32>
    %19 = vector.extract_strided_slice %7 {offsets = [0, 0, 0], sizes = [18, 16, 128], strides = [1, 1, 1]} : vector<20x16x128xbf16> to vector<18x16x128xbf16>
    %20 = vector.shape_cast %19 : vector<18x16x128xbf16> to vector<288x128xbf16>
    %c2 = arith.constant 2 : index
    %c0_11 = arith.constant 0 : index
    %c0_12 = arith.constant 0 : index
    %21 = vector.load %arg3[%c2, %c0_11, %c0_12] : memref<9x128x128xbf16, #tpu.memory_space<vmem>>, vector<1x128x128xbf16>
    %22 = vector.shape_cast %21 : vector<1x128x128xbf16> to vector<128x128xbf16>
    %cst_13 = arith.constant dense<0.000000e+00> : vector<288x128xf32>
    %23 = tpu.matmul %20, %22, %cst_13 {dimension_numbers = #tpu.dot_dimension_numbers<[1], [0], [0], [1], [0, 0, 1, 1], [], []>} : vector<288x128xbf16>, vector<128x128xbf16>, vector<288x128xf32> -> vector<288x128xf32>
    %24 = arith.addf %18, %23 : vector<288x128xf32>
    %25 = vector.extract_strided_slice %5 {offsets = [1, 0, 0], sizes = [18, 16, 128], strides = [1, 1, 1]} : vector<20x16x128xbf16> to vector<18x16x128xbf16>
    %26 = vector.shape_cast %25 : vector<18x16x128xbf16> to vector<288x128xbf16>
    %c3 = arith.constant 3 : index
    %c0_14 = arith.constant 0 : index
    %c0_15 = arith.constant 0 : index
    %27 = vector.load %arg3[%c3, %c0_14, %c0_15] : memref<9x128x128xbf16, #tpu.memory_space<vmem>>, vector<1x128x128xbf16>
    %28 = vector.shape_cast %27 : vector<1x128x128xbf16> to vector<128x128xbf16>
    %cst_16 = arith.constant dense<0.000000e+00> : vector<288x128xf32>
    %29 = tpu.matmul %26, %28, %cst_16 {dimension_numbers = #tpu.dot_dimension_numbers<[1], [0], [0], [1], [0, 0, 1, 1], [], []>} : vector<288x128xbf16>, vector<128x128xbf16>, vector<288x128xf32> -> vector<288x128xf32>
    %30 = arith.addf %24, %29 : vector<288x128xf32>
    %31 = vector.extract_strided_slice %6 {offsets = [1, 0, 0], sizes = [18, 16, 128], strides = [1, 1, 1]} : vector<20x16x128xbf16> to vector<18x16x128xbf16>
    %32 = vector.shape_cast %31 : vector<18x16x128xbf16> to vector<288x128xbf16>
    %c4 = arith.constant 4 : index
    %c0_17 = arith.constant 0 : index
    %c0_18 = arith.constant 0 : index
    %33 = vector.load %arg3[%c4, %c0_17, %c0_18] : memref<9x128x128xbf16, #tpu.memory_space<vmem>>, vector<1x128x128xbf16>
    %34 = vector.shape_cast %33 : vector<1x128x128xbf16> to vector<128x128xbf16>
    %cst_19 = arith.constant dense<0.000000e+00> : vector<288x128xf32>
    %35 = tpu.matmul %32, %34, %cst_19 {dimension_numbers = #tpu.dot_dimension_numbers<[1], [0], [0], [1], [0, 0, 1, 1], [], []>} : vector<288x128xbf16>, vector<128x128xbf16>, vector<288x128xf32> -> vector<288x128xf32>
    %36 = arith.addf %30, %35 : vector<288x128xf32>
    %37 = vector.extract_strided_slice %7 {offsets = [1, 0, 0], sizes = [18, 16, 128], strides = [1, 1, 1]} : vector<20x16x128xbf16> to vector<18x16x128xbf16>
    %38 = vector.shape_cast %37 : vector<18x16x128xbf16> to vector<288x128xbf16>
    %c5 = arith.constant 5 : index
    %c0_20 = arith.constant 0 : index
    %c0_21 = arith.constant 0 : index
    %39 = vector.load %arg3[%c5, %c0_20, %c0_21] : memref<9x128x128xbf16, #tpu.memory_space<vmem>>, vector<1x128x128xbf16>
    %40 = vector.shape_cast %39 : vector<1x128x128xbf16> to vector<128x128xbf16>
    %cst_22 = arith.constant dense<0.000000e+00> : vector<288x128xf32>
    %41 = tpu.matmul %38, %40, %cst_22 {dimension_numbers = #tpu.dot_dimension_numbers<[1], [0], [0], [1], [0, 0, 1, 1], [], []>} : vector<288x128xbf16>, vector<128x128xbf16>, vector<288x128xf32> -> vector<288x128xf32>
    %42 = arith.addf %36, %41 : vector<288x128xf32>
    %43 = vector.extract_strided_slice %5 {offsets = [2, 0, 0], sizes = [18, 16, 128], strides = [1, 1, 1]} : vector<20x16x128xbf16> to vector<18x16x128xbf16>
    %44 = vector.shape_cast %43 : vector<18x16x128xbf16> to vector<288x128xbf16>
    %c6 = arith.constant 6 : index
    %c0_23 = arith.constant 0 : index
    %c0_24 = arith.constant 0 : index
    %45 = vector.load %arg3[%c6, %c0_23, %c0_24] : memref<9x128x128xbf16, #tpu.memory_space<vmem>>, vector<1x128x128xbf16>
    %46 = vector.shape_cast %45 : vector<1x128x128xbf16> to vector<128x128xbf16>
    %cst_25 = arith.constant dense<0.000000e+00> : vector<288x128xf32>
    %47 = tpu.matmul %44, %46, %cst_25 {dimension_numbers = #tpu.dot_dimension_numbers<[1], [0], [0], [1], [0, 0, 1, 1], [], []>} : vector<288x128xbf16>, vector<128x128xbf16>, vector<288x128xf32> -> vector<288x128xf32>
    %48 = arith.addf %42, %47 : vector<288x128xf32>
    %49 = vector.extract_strided_slice %6 {offsets = [2, 0, 0], sizes = [18, 16, 128], strides = [1, 1, 1]} : vector<20x16x128xbf16> to vector<18x16x128xbf16>
    %50 = vector.shape_cast %49 : vector<18x16x128xbf16> to vector<288x128xbf16>
    %c7 = arith.constant 7 : index
    %c0_26 = arith.constant 0 : index
    %c0_27 = arith.constant 0 : index
    %51 = vector.load %arg3[%c7, %c0_26, %c0_27] : memref<9x128x128xbf16, #tpu.memory_space<vmem>>, vector<1x128x128xbf16>
    %52 = vector.shape_cast %51 : vector<1x128x128xbf16> to vector<128x128xbf16>
    %cst_28 = arith.constant dense<0.000000e+00> : vector<288x128xf32>
    %53 = tpu.matmul %50, %52, %cst_28 {dimension_numbers = #tpu.dot_dimension_numbers<[1], [0], [0], [1], [0, 0, 1, 1], [], []>} : vector<288x128xbf16>, vector<128x128xbf16>, vector<288x128xf32> -> vector<288x128xf32>
    %54 = arith.addf %48, %53 : vector<288x128xf32>
    %55 = vector.extract_strided_slice %7 {offsets = [2, 0, 0], sizes = [18, 16, 128], strides = [1, 1, 1]} : vector<20x16x128xbf16> to vector<18x16x128xbf16>
    %56 = vector.shape_cast %55 : vector<18x16x128xbf16> to vector<288x128xbf16>
    %c8 = arith.constant 8 : index
    %c0_29 = arith.constant 0 : index
    %c0_30 = arith.constant 0 : index
    %57 = vector.load %arg3[%c8, %c0_29, %c0_30] : memref<9x128x128xbf16, #tpu.memory_space<vmem>>, vector<1x128x128xbf16>
    %58 = vector.shape_cast %57 : vector<1x128x128xbf16> to vector<128x128xbf16>
    %cst_31 = arith.constant dense<0.000000e+00> : vector<288x128xf32>
    %59 = tpu.matmul %56, %58, %cst_31 {dimension_numbers = #tpu.dot_dimension_numbers<[1], [0], [0], [1], [0, 0, 1, 1], [], []>} : vector<288x128xbf16>, vector<128x128xbf16>, vector<288x128xf32> -> vector<288x128xf32>
    %60 = arith.addf %54, %59 : vector<288x128xf32>
    %c0_32 = arith.constant 0 : index
    %c0_33 = arith.constant 0 : index
    %61 = vector.load %arg4[%c0_32, %c0_33] : memref<1x128xf32, #tpu.memory_space<vmem>>, vector<1x128xf32>
    %62 = vector.broadcast %61 : vector<1x128xf32> to vector<288x128xf32>
    %63 = arith.addf %60, %62 : vector<288x128xf32>
    %cst_34 = arith.constant 0.000000e+00 : f32
    %64 = vector.broadcast %cst_34 : f32 to vector<288x128xf32>
    %65 = arith.maximumf %63, %64 : vector<288x128xf32>
    %cst_35 = arith.constant 0.000000e+00 : bf16
    %66 = vector.broadcast %cst_35 : bf16 to vector<18x16x128xbf16>
    %c0_36 = arith.constant 0 : index
    %c0_37 = arith.constant 0 : index
    %c0_38 = arith.constant 0 : index
    %67 = vector.load %arg8[%c0_36, %c0_37, %c0_38] : memref<18x48x128xbf16, #tpu.memory_space<vmem>>, vector<18x16x128xbf16>
    tpu.vector_store %arg8[%c0_36, %c0_37, %c0_38], %66 {strides = array<i32>} : memref<18x48x128xbf16, #tpu.memory_space<vmem>>, vector<18x16x128xbf16>,
    %cst_39 = arith.constant 0.000000e+00 : bf16
    %68 = vector.broadcast %cst_39 : bf16 to vector<18x16x128xbf16>
    %c0_40 = arith.constant 0 : index
    %c32 = arith.constant 32 : index
    %c0_41 = arith.constant 0 : index
    %69 = vector.load %arg8[%c0_40, %c32, %c0_41] : memref<18x48x128xbf16, #tpu.memory_space<vmem>>, vector<18x16x128xbf16>
    tpu.vector_store %arg8[%c0_40, %c32, %c0_41], %68 {strides = array<i32>} : memref<18x48x128xbf16, #tpu.memory_space<vmem>>, vector<18x16x128xbf16>,
    %70 = arith.truncf %65 : vector<288x128xf32> to vector<288x128xbf16>
    %71 = vector.shape_cast %70 : vector<288x128xbf16> to vector<18x16x128xbf16>
    %c0_42 = arith.constant 0 : index
    %c16 = arith.constant 16 : index
    %c0_43 = arith.constant 0 : index
    %72 = vector.load %arg8[%c0_42, %c16, %c0_43] : memref<18x48x128xbf16, #tpu.memory_space<vmem>>, vector<18x16x128xbf16>
    tpu.vector_store %arg8[%c0_42, %c16, %c0_43], %71 {strides = array<i32>} : memref<18x48x128xbf16, #tpu.memory_space<vmem>>, vector<18x16x128xbf16>,
    %c0_i32 = arith.constant 0 : i32
    %73 = arith.cmpi eq, %arg1, %c0_i32 : i32
    %74 = arith.extui %73 : i1 to i32
    %c0_i32_44 = arith.constant 0 : i32
    %75 = arith.cmpi ne, %74, %c0_i32_44 : i32
    scf.if %75 {
      %cst_101 = arith.constant 0.000000e+00 : bf16
      %145 = vector.broadcast %cst_101 : bf16 to vector<48x128xbf16>
      %c0_102 = arith.constant 0 : index
      %c0_103 = arith.constant 0 : index
      %c0_104 = arith.constant 0 : index
      %146 = vector.load %arg8[%c0_102, %c0_103, %c0_104] : memref<18x48x128xbf16, #tpu.memory_space<vmem>>, vector<1x48x128xbf16>
      %147 = vector.shape_cast %146 : vector<1x48x128xbf16> to vector<48x128xbf16>
      %148 = vector.shape_cast %145 : vector<48x128xbf16> to vector<1x48x128xbf16>
      tpu.vector_store %arg8[%c0_102, %c0_103, %c0_104], %148 {strides = array<i32>} : memref<18x48x128xbf16, #tpu.memory_space<vmem>>, vector<1x48x128xbf16>,
    } else {
    }
    %c0_i32_45 = arith.constant 0 : i32
    %76 = arith.cmpi eq, %arg1, %c0_i32_45 : i32
    %77 = arith.extui %76 : i1 to i32
    %c0_i32_46 = arith.constant 0 : i32
    %78 = arith.cmpi ne, %77, %c0_i32_46 : i32
    scf.if %78 {
      %cst_101 = arith.constant 0.000000e+00 : bf16
      %145 = vector.broadcast %cst_101 : bf16 to vector<48x128xbf16>
      %c17_102 = arith.constant 17 : index
      %c0_103 = arith.constant 0 : index
      %c0_104 = arith.constant 0 : index
      %146 = vector.load %arg8[%c17_102, %c0_103, %c0_104] : memref<18x48x128xbf16, #tpu.memory_space<vmem>>, vector<1x48x128xbf16>
      %147 = vector.shape_cast %146 : vector<1x48x128xbf16> to vector<48x128xbf16>
      %148 = vector.shape_cast %145 : vector<48x128xbf16> to vector<1x48x128xbf16>
      tpu.vector_store %arg8[%c17_102, %c0_103, %c0_104], %148 {strides = array<i32>} : memref<18x48x128xbf16, #tpu.memory_space<vmem>>, vector<1x48x128xbf16>,
    } else {
    }
    %c0_47 = arith.constant 0 : index
    %c15 = arith.constant 15 : index
    %c0_48 = arith.constant 0 : index
    %79 = vector.load %arg8[%c0_47, %c15, %c0_48] : memref<18x48x128xbf16, #tpu.memory_space<vmem>>, vector<18x16x128xbf16>
    %c0_49 = arith.constant 0 : index
    %c16_50 = arith.constant 16 : index
    %c0_51 = arith.constant 0 : index
    %80 = vector.load %arg8[%c0_49, %c16_50, %c0_51] : memref<18x48x128xbf16, #tpu.memory_space<vmem>>, vector<18x16x128xbf16>
    %c0_52 = arith.constant 0 : index
    %c17 = arith.constant 17 : index
    %c0_53 = arith.constant 0 : index
    %81 = vector.load %arg8[%c0_52, %c17, %c0_53] : memref<18x48x128xbf16, #tpu.memory_space<vmem>>, vector<18x16x128xbf16>
    %82 = vector.extract_strided_slice %79 {offsets = [0, 0, 0], sizes = [16, 16, 128], strides = [1, 1, 1]} : vector<18x16x128xbf16> to vector<16x16x128xbf16>
    %83 = vector.shape_cast %82 : vector<16x16x128xbf16> to vector<256x128xbf16>
    %c0_54 = arith.constant 0 : index
    %c0_55 = arith.constant 0 : index
    %c0_56 = arith.constant 0 : index
    %84 = vector.load %arg5[%c0_54, %c0_55, %c0_56] : memref<9x128x128xbf16, #tpu.memory_space<vmem>>, vector<1x128x128xbf16>
    %85 = vector.shape_cast %84 : vector<1x128x128xbf16> to vector<128x128xbf16>
    %cst_57 = arith.constant dense<0.000000e+00> : vector<256x128xf32>
    %86 = tpu.matmul %83, %85, %cst_57 {dimension_numbers = #tpu.dot_dimension_numbers<[1], [0], [0], [1], [0, 0, 1, 1], [], []>} : vector<256x128xbf16>, vector<128x128xbf16>, vector<256x128xf32> -> vector<256x128xf32>
    %87 = vector.extract_strided_slice %80 {offsets = [0, 0, 0], sizes = [16, 16, 128], strides = [1, 1, 1]} : vector<18x16x128xbf16> to vector<16x16x128xbf16>
    %88 = vector.shape_cast %87 : vector<16x16x128xbf16> to vector<256x128xbf16>
    %c1_58 = arith.constant 1 : index
    %c0_59 = arith.constant 0 : index
    %c0_60 = arith.constant 0 : index
    %89 = vector.load %arg5[%c1_58, %c0_59, %c0_60] : memref<9x128x128xbf16, #tpu.memory_space<vmem>>, vector<1x128x128xbf16>
    %90 = vector.shape_cast %89 : vector<1x128x128xbf16> to vector<128x128xbf16>
    %cst_61 = arith.constant dense<0.000000e+00> : vector<256x128xf32>
    %91 = tpu.matmul %88, %90, %cst_61 {dimension_numbers = #tpu.dot_dimension_numbers<[1], [0], [0], [1], [0, 0, 1, 1], [], []>} : vector<256x128xbf16>, vector<128x128xbf16>, vector<256x128xf32> -> vector<256x128xf32>
    %92 = arith.addf %86, %91 : vector<256x128xf32>
    %93 = vector.extract_strided_slice %81 {offsets = [0, 0, 0], sizes = [16, 16, 128], strides = [1, 1, 1]} : vector<18x16x128xbf16> to vector<16x16x128xbf16>
    %94 = vector.shape_cast %93 : vector<16x16x128xbf16> to vector<256x128xbf16>
    %c2_62 = arith.constant 2 : index
    %c0_63 = arith.constant 0 : index
    %c0_64 = arith.constant 0 : index
    %95 = vector.load %arg5[%c2_62, %c0_63, %c0_64] : memref<9x128x128xbf16, #tpu.memory_space<vmem>>, vector<1x128x128xbf16>
    %96 = vector.shape_cast %95 : vector<1x128x128xbf16> to vector<128x128xbf16>
    %cst_65 = arith.constant dense<0.000000e+00> : vector<256x128xf32>
    %97 = tpu.matmul %94, %96, %cst_65 {dimension_numbers = #tpu.dot_dimension_numbers<[1], [0], [0], [1], [0, 0, 1, 1], [], []>} : vector<256x128xbf16>, vector<128x128xbf16>, vector<256x128xf32> -> vector<256x128xf32>
    %98 = arith.addf %92, %97 : vector<256x128xf32>
    %99 = vector.extract_strided_slice %79 {offsets = [1, 0, 0], sizes = [16, 16, 128], strides = [1, 1, 1]} : vector<18x16x128xbf16> to vector<16x16x128xbf16>
    %100 = vector.shape_cast %99 : vector<16x16x128xbf16> to vector<256x128xbf16>
    %c3_66 = arith.constant 3 : index
    %c0_67 = arith.constant 0 : index
    %c0_68 = arith.constant 0 : index
    %101 = vector.load %arg5[%c3_66, %c0_67, %c0_68] : memref<9x128x128xbf16, #tpu.memory_space<vmem>>, vector<1x128x128xbf16>
    %102 = vector.shape_cast %101 : vector<1x128x128xbf16> to vector<128x128xbf16>
    %cst_69 = arith.constant dense<0.000000e+00> : vector<256x128xf32>
    %103 = tpu.matmul %100, %102, %cst_69 {dimension_numbers = #tpu.dot_dimension_numbers<[1], [0], [0], [1], [0, 0, 1, 1], [], []>} : vector<256x128xbf16>, vector<128x128xbf16>, vector<256x128xf32> -> vector<256x128xf32>
    %104 = arith.addf %98, %103 : vector<256x128xf32>
    %105 = vector.extract_strided_slice %80 {offsets = [1, 0, 0], sizes = [16, 16, 128], strides = [1, 1, 1]} : vector<18x16x128xbf16> to vector<16x16x128xbf16>
    %106 = vector.shape_cast %105 : vector<16x16x128xbf16> to vector<256x128xbf16>
    %c4_70 = arith.constant 4 : index
    %c0_71 = arith.constant 0 : index
    %c0_72 = arith.constant 0 : index
    %107 = vector.load %arg5[%c4_70, %c0_71, %c0_72] : memref<9x128x128xbf16, #tpu.memory_space<vmem>>, vector<1x128x128xbf16>
    %108 = vector.shape_cast %107 : vector<1x128x128xbf16> to vector<128x128xbf16>
    %cst_73 = arith.constant dense<0.000000e+00> : vector<256x128xf32>
    %109 = tpu.matmul %106, %108, %cst_73 {dimension_numbers = #tpu.dot_dimension_numbers<[1], [0], [0], [1], [0, 0, 1, 1], [], []>} : vector<256x128xbf16>, vector<128x128xbf16>, vector<256x128xf32> -> vector<256x128xf32>
    %110 = arith.addf %104, %109 : vector<256x128xf32>
    %111 = vector.extract_strided_slice %81 {offsets = [1, 0, 0], sizes = [16, 16, 128], strides = [1, 1, 1]} : vector<18x16x128xbf16> to vector<16x16x128xbf16>
    %112 = vector.shape_cast %111 : vector<16x16x128xbf16> to vector<256x128xbf16>
    %c5_74 = arith.constant 5 : index
    %c0_75 = arith.constant 0 : index
    %c0_76 = arith.constant 0 : index
    %113 = vector.load %arg5[%c5_74, %c0_75, %c0_76] : memref<9x128x128xbf16, #tpu.memory_space<vmem>>, vector<1x128x128xbf16>
    %114 = vector.shape_cast %113 : vector<1x128x128xbf16> to vector<128x128xbf16>
    %cst_77 = arith.constant dense<0.000000e+00> : vector<256x128xf32>
    %115 = tpu.matmul %112, %114, %cst_77 {dimension_numbers = #tpu.dot_dimension_numbers<[1], [0], [0], [1], [0, 0, 1, 1], [], []>} : vector<256x128xbf16>, vector<128x128xbf16>, vector<256x128xf32> -> vector<256x128xf32>
    %116 = arith.addf %110, %115 : vector<256x128xf32>
    %117 = vector.extract_strided_slice %79 {offsets = [2, 0, 0], sizes = [16, 16, 128], strides = [1, 1, 1]} : vector<18x16x128xbf16> to vector<16x16x128xbf16>
    %118 = vector.shape_cast %117 : vector<16x16x128xbf16> to vector<256x128xbf16>
    %c6_78 = arith.constant 6 : index
    %c0_79 = arith.constant 0 : index
    %c0_80 = arith.constant 0 : index
    %119 = vector.load %arg5[%c6_78, %c0_79, %c0_80] : memref<9x128x128xbf16, #tpu.memory_space<vmem>>, vector<1x128x128xbf16>
    %120 = vector.shape_cast %119 : vector<1x128x128xbf16> to vector<128x128xbf16>
    %cst_81 = arith.constant dense<0.000000e+00> : vector<256x128xf32>
    %121 = tpu.matmul %118, %120, %cst_81 {dimension_numbers = #tpu.dot_dimension_numbers<[1], [0], [0], [1], [0, 0, 1, 1], [], []>} : vector<256x128xbf16>, vector<128x128xbf16>, vector<256x128xf32> -> vector<256x128xf32>
    %122 = arith.addf %116, %121 : vector<256x128xf32>
    %123 = vector.extract_strided_slice %80 {offsets = [2, 0, 0], sizes = [16, 16, 128], strides = [1, 1, 1]} : vector<18x16x128xbf16> to vector<16x16x128xbf16>
    %124 = vector.shape_cast %123 : vector<16x16x128xbf16> to vector<256x128xbf16>
    %c7_82 = arith.constant 7 : index
    %c0_83 = arith.constant 0 : index
    %c0_84 = arith.constant 0 : index
    %125 = vector.load %arg5[%c7_82, %c0_83, %c0_84] : memref<9x128x128xbf16, #tpu.memory_space<vmem>>, vector<1x128x128xbf16>
    %126 = vector.shape_cast %125 : vector<1x128x128xbf16> to vector<128x128xbf16>
    %cst_85 = arith.constant dense<0.000000e+00> : vector<256x128xf32>
    %127 = tpu.matmul %124, %126, %cst_85 {dimension_numbers = #tpu.dot_dimension_numbers<[1], [0], [0], [1], [0, 0, 1, 1], [], []>} : vector<256x128xbf16>, vector<128x128xbf16>, vector<256x128xf32> -> vector<256x128xf32>
    %128 = arith.addf %122, %127 : vector<256x128xf32>
    %129 = vector.extract_strided_slice %81 {offsets = [2, 0, 0], sizes = [16, 16, 128], strides = [1, 1, 1]} : vector<18x16x128xbf16> to vector<16x16x128xbf16>
    %130 = vector.shape_cast %129 : vector<16x16x128xbf16> to vector<256x128xbf16>
    %c8_86 = arith.constant 8 : index
    %c0_87 = arith.constant 0 : index
    %c0_88 = arith.constant 0 : index
    %131 = vector.load %arg5[%c8_86, %c0_87, %c0_88] : memref<9x128x128xbf16, #tpu.memory_space<vmem>>, vector<1x128x128xbf16>
    %132 = vector.shape_cast %131 : vector<1x128x128xbf16> to vector<128x128xbf16>
    %cst_89 = arith.constant dense<0.000000e+00> : vector<256x128xf32>
    %133 = tpu.matmul %130, %132, %cst_89 {dimension_numbers = #tpu.dot_dimension_numbers<[1], [0], [0], [1], [0, 0, 1, 1], [], []>} : vector<256x128xbf16>, vector<128x128xbf16>, vector<256x128xf32> -> vector<256x128xf32>
    %134 = arith.addf %128, %133 : vector<256x128xf32>
    %c0_90 = arith.constant 0 : index
    %c0_91 = arith.constant 0 : index
    %135 = vector.load %arg6[%c0_90, %c0_91] : memref<1x128xf32, #tpu.memory_space<vmem>>, vector<1x128xf32>
    %136 = vector.broadcast %135 : vector<1x128xf32> to vector<256x128xf32>
    %137 = arith.addf %134, %136 : vector<256x128xf32>
    %138 = vector.shape_cast %137 : vector<256x128xf32> to vector<16x16x128xf32>
    %c0_92 = arith.constant 0 : index
    %c0_93 = arith.constant 0 : index
    %c2_94 = arith.constant 2 : index
    %c1_95 = arith.constant 1 : index
    %c0_96 = arith.constant 0 : index
    %139 = vector.load %arg2[%c0_92, %c0_93, %c2_94, %c1_95, %c0_96] : memref<1x1x20x18x128xf32, #tpu.memory_space<vmem>>, vector<1x1x16x16x128xf32>
    %140 = vector.shape_cast %139 : vector<1x1x16x16x128xf32> to vector<16x16x128xf32>
    %141 = arith.addf %138, %140 : vector<16x16x128xf32>
    %c0_97 = arith.constant 0 : index
    %c0_98 = arith.constant 0 : index
    %c0_99 = arith.constant 0 : index
    %c0_100 = arith.constant 0 : index
    %142 = vector.load %arg7[%c0_97, %c0_98, %c0_99, %c0_100] : memref<1x16x16x128xf32, #tpu.memory_space<vmem>>, vector<1x16x16x128xf32>
    %143 = vector.shape_cast %142 : vector<1x16x16x128xf32> to vector<16x16x128xf32>
    %144 = vector.shape_cast %141 : vector<16x16x128xf32> to vector<1x16x16x128xf32>
    tpu.vector_store %arg7[%c0_97, %c0_98, %c0_99, %c0_100], %144 {strides = array<i32>} : memref<1x16x16x128xf32, #tpu.memory_space<vmem>>, vector<1x16x16x128xf32>,
    return
  }
  func.func @transform_0(%arg0: i32, %arg1: i32) -> (i32, i32, i32, i32, i32) {
    %c0_i32 = arith.constant 0 : i32
    %c0_i32_0 = arith.constant 0 : i32
    %c0_i32_1 = arith.constant 0 : i32
    %c0_i32_2 = arith.constant 0 : i32
    return %arg0, %arg1, %c0_i32, %c0_i32_0, %c0_i32_1 : i32, i32, i32, i32, i32
  }
  func.func @transform_1(%arg0: i32, %arg1: i32) -> (i32, i32, i32) {
    %c0_i32 = arith.constant 0 : i32
    %c0_i32_0 = arith.constant 0 : i32
    %c0_i32_1 = arith.constant 0 : i32
    %c0_i32_2 = arith.constant 0 : i32
    return %c0_i32, %c0_i32_0, %c0_i32_1 : i32, i32, i32
  }
  func.func @transform_2(%arg0: i32, %arg1: i32) -> (i32, i32) {
    %c0_i32 = arith.constant 0 : i32
    %c0_i32_0 = arith.constant 0 : i32
    %c0_i32_1 = arith.constant 0 : i32
    return %c0_i32, %c0_i32_0 : i32, i32
  }
  func.func @transform_3(%arg0: i32, %arg1: i32) -> (i32, i32, i32) {
    %c0_i32 = arith.constant 0 : i32
    %c0_i32_0 = arith.constant 0 : i32
    %c0_i32_1 = arith.constant 0 : i32
    %c0_i32_2 = arith.constant 0 : i32
    return %c0_i32, %c0_i32_0, %c0_i32_1 : i32, i32, i32
  }
  func.func @transform_4(%arg0: i32, %arg1: i32) -> (i32, i32) {
    %c0_i32 = arith.constant 0 : i32
    %c0_i32_0 = arith.constant 0 : i32
    %c0_i32_1 = arith.constant 0 : i32
    return %c0_i32, %c0_i32_0 : i32, i32
  }
  func.func @transform_5(%arg0: i32, %arg1: i32) -> (i32, i32, i32, i32) {
    %c0_i32 = arith.constant 0 : i32
    %c0_i32_0 = arith.constant 0 : i32
    %c0_i32_1 = arith.constant 0 : i32
    return %arg0, %arg1, %c0_i32, %c0_i32_0 : i32, i32, i32, i32
  }
}

</mosaic_0001>

<llo_original>
// kernel: residual_block_pallas.1
$region0: #{residual_block_pallas.1}
  #allocation0 [shape = 'u32[]', space=smem, size = 0x4, offset = 0x4, fixed_abs, tag = 'smem constant byte address 0x4 - core index']
  #allocation1 [shape = 'u32[144,128]{1,0:T(1,128)}', space=vmem, size = 0x12000, scoped, tag = 'internal scratch']
  #allocation2 [shape = 'bf16[18,48,128]{2,1,0:T(16,128)(2,1)}', space=vmem, size = 0x36000, scoped, tag = 'scratch operand']
  %s0 = inlined_call_operand.vmem [shape: f32[2,1,20,18,128], index: 0, kind: input, shape index: {}]
  %s1 = inlined_call_operand.vmem [shape: bf16[9,128,128], index: 1, kind: input, shape index: {}]
  %s2 = inlined_call_operand.vmem [shape: f32[1,128], index: 2, kind: input, shape index: {}]
  %s3 = inlined_call_operand.vmem [shape: bf16[9,128,128], index: 3, kind: input, shape index: {}]
  %s4 = inlined_call_operand.vmem [shape: f32[1,128], index: 4, kind: input, shape index: {}]
  %s5 = inlined_call_operand.vmem [shape: f32[2,16,16,128], index: 5, kind: output, shape index: {}]
  %s6 = sld [smem:[#allocation0]]
  $region57: #{residual_block_pallas.1} parent=0
    _
  %s8 = ssub.s32 1, %s6
  %s9 = scalar_select 0, %s8, %s6
  loop: start=0, step=1, limit=4
  $region2: #{residual_block_pallas.1} parent=0 // loop_pre_header
    _
  $region3: #{residual_block_pallas.1} parent=0 // loop_header
    %s11 = sphi 0, %s15
    %p12 = scmp.ge.s32.totalorder %s11, 4
    %s18 = sphi 0, %s30
    %s19 = sphi 0, %s26
    %s20 = sphi 0, %s18
    %s21 = sphi 0, %s19
    %s22 = sphi 0, %s20
    %s23 = sphi 0, %s21
    %s35 = sphi 0, %s37
    %s38 = sphi 0, %s35
    %s39 = sphi 0, %s38
    %s55 = sphi 0, %s39
    %s59 = sphi 0, %s59
    %s61 = sphi 0, %s59
    %s62 = sphi 0, %s61
    %s76 = sphi 0, %s62
    %s80 = sphi 0, %s80
    %s82 = sphi 0, %s80
    %s83 = sphi 0, %s82
    %s97 = sphi 0, %s83
    %s101 = sphi 0, %s101
    %s103 = sphi 0, %s101
    %s104 = sphi 0, %s103
    %s118 = sphi 0, %s104
    %s122 = sphi 0, %s122
    %s124 = sphi 0, %s122
    %s125 = sphi 0, %s124
    %s139 = sphi 0, %s125
    %s147 = sphi 0, %s149
    %s150 = sphi 0, %s147
    %s151 = sphi 0, %s150
    %s167 = sphi 0, %s151
  $region4: #{residual_block_pallas.1} parent=0 // loop_header_branch
    %14 = sbr.rel (%p12) target = $region8
  $region5: #{residual_block_pallas.1} parent=0 // loop_body
    %s16 = ssub.s32 %s11, 1
    %s17 = ssub.s32 %s11, 2
    %s24 = sadd.s32 1, %s19
    %p25 = scmp.ge.s32.totalorder %s24, 1
    %s26 = scalar_select %p25, 0, %s24
    %s27 = sadd.s32 1, %s18
    %s28 = scalar_select %p25, %s27, %s18
    %p29 = scmp.ge.s32.totalorder %s28, 2
    %s30 = scalar_select %p29, 0, %s28
    %s31 = ssub.s32 %s18, %s30
    %s32 = ssub.s32 %s19, %s26
    %s33 = sor.u32 %s31, %s32
    %p34 = scmp.eq.s32.totalorder %s33, 0
    %s36 = sadd.s32 %s35, 1
    %s37 = scalar_select %p34, %s35, %s36
    %p40 = pneg %p34
    %p41 = scmp.eq.s32.totalorder %s11, 1
    %p42 = por %p40, %p41
    %p43 = scmp.ne.s32.totalorder %s35, %s38
    %p44 = scmp.eq.s32.totalorder %s11, 0
    %p45 = por %p43, %p44
    %p46 = scmp.ne.s32.totalorder %s35, %s38
    %p47 = scmp.eq.s32.totalorder %s16, 1
    %p48 = por %p46, %p47
    %p49 = scmp.ne.s32.totalorder %s38, %s39
    %p50 = scmp.eq.s32.totalorder %s16, 0
    %p51 = por %p49, %p50
    %p52 = scmp.ne.s32.totalorder %s38, %s39
    %p53 = scmp.eq.s32.totalorder %s17, 1
    %p54 = por %p52, %p53
    %p56 = scmp.ne.s32.totalorder %s39, %s55
    %p57 = scmp.eq.s32.totalorder %s17, 0
    %p58 = por %p56, %p57
    %s60 = sadd.s32 %s59, 1
    %p63 = scmp.eq.s32.totalorder %s11, 1
    %p64 = scmp.ne.s32.totalorder %s59, %s61
    %p65 = scmp.eq.s32.totalorder %s11, 0
    %p66 = por %p64, %p65
    %p67 = scmp.ne.s32.totalorder %s59, %s61
    %p68 = scmp.eq.s32.totalorder %s16, 1
    %p69 = por %p67, %p68
    %p70 = scmp.ne.s32.totalorder %s61, %s62
    %p71 = scmp.eq.s32.totalorder %s16, 0
    %p72 = por %p70, %p71
    %p73 = scmp.ne.s32.totalorder %s61, %s62
    %p74 = scmp.eq.s32.totalorder %s17, 1
    %p75 = por %p73, %p74
    %p77 = scmp.ne.s32.totalorder %s62, %s76
    %p78 = scmp.eq.s32.totalorder %s17, 0
    %p79 = por %p77, %p78
    %s81 = sadd.s32 %s80, 1
    %p84 = scmp.eq.s32.totalorder %s11, 1
    %p85 = scmp.ne.s32.totalorder %s80, %s82
    %p86 = scmp.eq.s32.totalorder %s11, 0
    %p87 = por %p85, %p86
    %p88 = scmp.ne.s32.totalorder %s80, %s82
    %p89 = scmp.eq.s32.totalorder %s16, 1
    %p90 = por %p88, %p89
    %p91 = scmp.ne.s32.totalorder %s82, %s83
    %p92 = scmp.eq.s32.totalorder %s16, 0
    %p93 = por %p91, %p92
    %p94 = scmp.ne.s32.totalorder %s82, %s83
    %p95 = scmp.eq.s32.totalorder %s17, 1
    %p96 = por %p94, %p95
    %p98 = scmp.ne.s32.totalorder %s83, %s97
    %p99 = scmp.eq.s32.totalorder %s17, 0
    %p100 = por %p98, %p99
    %s102 = sadd.s32 %s101, 1
    %p105 = scmp.eq.s32.totalorder %s11, 1
    %p106 = scmp.ne.s32.totalorder %s101, %s103
    %p107 = scmp.eq.s32.totalorder %s11, 0
    %p108 = por %p106, %p107
    %p109 = scmp.ne.s32.totalorder %s101, %s103
    %p110 = scmp.eq.s32.totalorder %s16, 1
    %p111 = por %p109, %p110
    %p112 = scmp.ne.s32.totalorder %s103, %s104
    %p113 = scmp.eq.s32.totalorder %s16, 0
    %p114 = por %p112, %p113
    %p115 = scmp.ne.s32.totalorder %s103, %s104
    %p116 = scmp.eq.s32.totalorder %s17, 1
    %p117 = por %p115, %p116
    %p119 = scmp.ne.s32.totalorder %s104, %s118
    %p120 = scmp.eq.s32.totalorder %s17, 0
    %p121 = por %p119, %p120
    %s123 = sadd.s32 %s122, 1
    %p126 = scmp.eq.s32.totalorder %s11, 1
    %p127 = scmp.ne.s32.totalorder %s122, %s124
    %p128 = scmp.eq.s32.totalorder %s11, 0
    %p129 = por %p127, %p128
    %p130 = scmp.ne.s32.totalorder %s122, %s124
    %p131 = scmp.eq.s32.totalorder %s16, 1
    %p132 = por %p130, %p131
    %p133 = scmp.ne.s32.totalorder %s124, %s125
    %p134 = scmp.eq.s32.totalorder %s16, 0
    %p135 = por %p133, %p134
    %p136 = scmp.ne.s32.totalorder %s124, %s125
    %p137 = scmp.eq.s32.totalorder %s17, 1
    %p138 = por %p136, %p137
    %p140 = scmp.ne.s32.totalorder %s125, %s139
    %p141 = scmp.eq.s32.totalorder %s17, 0
    %p142 = por %p140, %p141
    %s143 = ssub.s32 %s18, %s30
    %s144 = ssub.s32 %s19, %s26
    %s145 = sor.u32 %s143, %s144
    %p146 = scmp.eq.s32.totalorder %s145, 0
    %s148 = sadd.s32 %s147, 1
    %s149 = scalar_select %p146, %s147, %s148
    %p152 = pneg %p146
    %p153 = scmp.eq.s32.totalorder %s11, 1
    %p154 = por %p152, %p153
    %p155 = scmp.ne.s32.totalorder %s147, %s150
    %p156 = scmp.eq.s32.totalorder %s11, 0
    %p157 = por %p155, %p156
    %p158 = scmp.ne.s32.totalorder %s147, %s150
    %p159 = scmp.eq.s32.totalorder %s16, 1
    %p160 = por %p158, %p159
    %p161 = scmp.ne.s32.totalorder %s150, %s151
    %p162 = scmp.eq.s32.totalorder %s16, 0
    %p163 = por %p161, %p162
    %p164 = scmp.ne.s32.totalorder %s150, %s151
    %p165 = scmp.eq.s32.totalorder %s17, 1
    %p166 = por %p164, %p165
    %p168 = scmp.ne.s32.totalorder %s151, %s167
    %p169 = scmp.eq.s32.totalorder %s17, 0
    %p170 = por %p168, %p169
    %p171 = scmp.le.s32.totalorder 1, %s11
    %p172 = scmp.lt.s32.totalorder %s11, 3
    %p173 = pnand %p171, %p172
    %p174 = pneg %p173
    // Predicated region
    $region9: #{residual_block_pallas.1} parent=5 // pred_check
      _
    $region10: #{residual_block_pallas.1} parent=5 // pred_check_branch
      %176 = sbr.rel (%p173) target = $region12
    $region11: #{residual_block_pallas.1} parent=5 // pred_region
      %s177 = ssub.s32 %s11, 1
      // Predicated region
      $region13: #{residual_block_pallas.1} parent=11 // pred_check
        %p178 = pneg %p72
      $region14: #{residual_block_pallas.1} parent=11 // pred_check_branch
        %180 = sbr.rel (%p178) target = $region16
      $region15: #{residual_block_pallas.1} parent=11 // pred_region
        _
      $region16: #{residual_block_pallas.1} parent=11 // pred_fallthru
        _
      // Predicated region
      $region17: #{residual_block_pallas.1} parent=11 // pred_check
        %p181 = pneg %p93
      $region18: #{residual_block_pallas.1} parent=11 // pred_check_branch
        %183 = sbr.rel (%p181) target = $region20
      $region19: #{residual_block_pallas.1} parent=11 // pred_region
        _
      $region20: #{residual_block_pallas.1} parent=11 // pred_fallthru
        _
      // Predicated region
      $region21: #{residual_block_pallas.1} parent=11 // pred_check
        %p184 = pneg %p114
      $region22: #{residual_block_pallas.1} parent=11 // pred_check_branch
        %186 = sbr.rel (%p184) target = $region24
      $region23: #{residual_block_pallas.1} parent=11 // pred_region
        _
      $region24: #{residual_block_pallas.1} parent=11 // pred_fallthru
        _
      // Predicated region
      $region25: #{residual_block_pallas.1} parent=11 // pred_check
        %p187 = pneg %p135
      $region26: #{residual_block_pallas.1} parent=11 // pred_check_branch
        %189 = sbr.rel (%p187) target = $region28
      $region27: #{residual_block_pallas.1} parent=11 // pred_region
        _
      $region28: #{residual_block_pallas.1} parent=11 // pred_fallthru
        _
    $region12: #{residual_block_pallas.1} parent=5 // pred_fallthru
      _
    %p190 = scmp.lt.s32.totalorder %s11, 2
    // Predicated region
    $region29: #{residual_block_pallas.1} parent=5 // pred_check
      %p191 = pneg %p190
    $region30: #{residual_block_pallas.1} parent=5 // pred_check_branch
      %193 = sbr.rel (%p191) target = $region32
    $region31: #{residual_block_pallas.1} parent=5 // pred_region
      // Predicated region
      $region33: #{residual_block_pallas.1} parent=31 // pred_check
        %p194 = pneg %p45
      $region34: #{residual_block_pallas.1} parent=31 // pred_check_branch
        %196 = sbr.rel (%p194) target = $region36
      $region35: #{residual_block_pallas.1} parent=31 // pred_region
        %p197 = scmp.lt.s32.totalorder %s18, 1
        %s198 = scalar_select %p197, %s18, 1
        %p199 = scmp.lt.s32.totalorder %s19, 0
        %s200 = scalar_select %p199, %s19, 0
        %s201 = smul.addr %s200, 60
        %s202 = smul.addr %s198, 60
        %s203 = sadd.s32 %s201, %s202
        %s204 = smul.addr %s203, 8
        %s205 = scalar_lea.vmem %s0, %s204
      $region36: #{residual_block_pallas.1} parent=31 // pred_fallthru
        _
    $region32: #{residual_block_pallas.1} parent=5 // pred_fallthru
      _
    %p206 = scmp.le.s32.totalorder 1, %s11
    %p207 = scmp.lt.s32.totalorder %s11, 3
    %p208 = pnand %p206, %p207
    %p209 = pneg %p208
    // Predicated region
    $region37: #{residual_block_pallas.1} parent=5 // pred_check
      _
    $region38: #{residual_block_pallas.1} parent=5 // pred_check_branch
      %211 = sbr.rel (%p208) target = $region40
    $region39: #{residual_block_pallas.1} parent=5 // pred_region
      %s212 = ssub.s32 %s11, 1
      %p213 = scmp.lt.s32.totalorder %s20, 1
      %s214 = scalar_select %p213, %s20, 1
      %p215 = scmp.lt.s32.totalorder %s21, 0
      %s216 = scalar_select %p215, %s21, 0
      %s217 = smul.addr %s216, 60
      %s218 = smul.addr %s214, 60
      %s219 = sadd.s32 %s217, %s218
      %s220 = smul.addr %s219, 8
      %s221 = scalar_lea.vmem %s0, %s220
      %p222 = pneg %p51
      %p223 = pneg %p48
      %p224 = pneg %p72
      %p225 = pneg %p69
      %p226 = pneg %p93
      %p227 = pneg %p90
      %p228 = pneg %p114
      %p229 = pneg %p111
      %p230 = pneg %p135
      %p231 = pneg %p132
      %p232 = pneg %p163
      %p233 = pneg %p160
      %s234 = smul.u32 16, %s21
      %p235 = scmp.lt.s32.totalorder %s20, 1
      %s236 = scalar_select %p235, %s20, 1
      %p237 = scmp.lt.s32.totalorder %s234, 15
      %s238 = scalar_select %p237, %s234, 15
      %s239 = smul.addr %s238, 2
      %s240 = smul.addr %s236, 32
      %s241 = sadd.s32 %s239, %s240
      %s242 = smul.addr %s241, 8
      %s243 = scalar_lea.vmem %s5, %s242
      %p244 = scmp.lt.s32.totalorder %s20, 1
      %s245 = scalar_select %p244, %s20, 1
      %p246 = scmp.lt.s32.totalorder %s21, 0
      %s247 = scalar_select %p246, %s21, 0
      %s248 = smul.addr %s247, 60
      %s249 = smul.addr %s245, 60
      %s250 = sadd.s32 %s248, %s249
      %s251 = smul.addr %s250, 8
      %s252 = scalar_lea.vmem %s0, %s251
      %s253 = smul.u32 16, %s21
      %p254 = scmp.lt.s32.totalorder %s20, 1
      %s255 = scalar_select %p254, %s20, 1
      %p256 = scmp.lt.s32.totalorder %s253, 15
      %s257 = scalar_select %p256, %s253, 15
      %s258 = smul.addr %s257, 2
      %s259 = smul.addr %s255, 32
      %s260 = sadd.s32 %s258, %s259
      %s261 = smul.addr %s260, 8
      %s262 = scalar_lea.vmem %s5, %s261
      %s263 = smul.u32 16, %s21
      %v265 = vld [vmem:[%s252] sm:$0xff]
      %v266 = vld [vmem:[%s252 + $0x8] sm:$0xff]
      %v267 = vld [vmem:[%s252 + $0x10] sm:$0x3]
      %v268 = vld [vmem:[%s252 + $0x18] sm:$0xff]
      %v269 = vld [vmem:[%s252 + $0x20] sm:$0xff]
      %v270 = vld [vmem:[%s252 + $0x28] sm:$0x3]
      %v271 = vld [vmem:[%s252 + $0x30] sm:$0xff]
      %v272 = vld [vmem:[%s252 + $0x38] sm:$0xff]
      %v273 = vld [vmem:[%s252 + $0x40] sm:$0x3]
      %v274 = vld [vmem:[%s252 + $0x48] sm:$0xff]
      %v275 = vld [vmem:[%s252 + $0x50] sm:$0xff]
      %v276 = vld [vmem:[%s252 + $0x58] sm:$0x3]
      %v277 = vld [vmem:[%s252 + $0x60] sm:$0xff]
      %v278 = vld [vmem:[%s252 + $0x68] sm:$0xff]
      %v279 = vld [vmem:[%s252 + $0x70] sm:$0x3]
      %v280 = vld [vmem:[%s252 + $0x78] sm:$0xff]
      %v281 = vld [vmem:[%s252 + $0x80] sm:$0xff]
      %v282 = vld [vmem:[%s252 + $0x88] sm:$0x3]
      %v283 = vld [vmem:[%s252 + $0x90] sm:$0xff]
      %v284 = vld [vmem:[%s252 + $0x98] sm:$0xff]
      %v285 = vld [vmem:[%s252 + $0xa0] sm:$0x3]
      %v286 = vld [vmem:[%s252 + $0xa8] sm:$0xff]
      %v287 = vld [vmem:[%s252 + $0xb0] sm:$0xff]
      %v288 = vld [vmem:[%s252 + $0xb8] sm:$0x3]
      %v289 = vld [vmem:[%s252 + $0xc0] sm:$0xff]
      %v290 = vld [vmem:[%s252 + $0xc8] sm:$0xff]
      %v291 = vld [vmem:[%s252 + $0xd0] sm:$0x3]
      %v292 = vld [vmem:[%s252 + $0xd8] sm:$0xff]
      %v293 = vld [vmem:[%s252 + $0xe0] sm:$0xff]
      %v294 = vld [vmem:[%s252 + $0xe8] sm:$0x3]
      %v295 = vld [vmem:[%s252 + $0xf0] sm:$0xff]
      %v296 = vld [vmem:[%s252 + $0xf8] sm:$0xff]
      %v297 = vld [vmem:[%s252 + $0x100] sm:$0x3]
      %v298 = vld [vmem:[%s252 + $0x108] sm:$0xff]
      %v299 = vld [vmem:[%s252 + $0x110] sm:$0xff]
      %v300 = vld [vmem:[%s252 + $0x118] sm:$0x3]
      %v301 = vld [vmem:[%s252 + $0x120] sm:$0xff]
      %v302 = vld [vmem:[%s252 + $0x128] sm:$0xff]
      %v303 = vld [vmem:[%s252 + $0x130] sm:$0x3]
      %v304 = vld [vmem:[%s252 + $0x138] sm:$0xff]
      %v305 = vld [vmem:[%s252 + $0x140] sm:$0xff]
      %v306 = vld [vmem:[%s252 + $0x148] sm:$0x3]
      %v307 = vld [vmem:[%s252 + $0x150] sm:$0xff]
      %v308 = vld [vmem:[%s252 + $0x158] sm:$0xff]
      %v309 = vld [vmem:[%s252 + $0x160] sm:$0x3]
      %v310 = vld [vmem:[%s252 + $0x168] sm:$0xff]
      %v311 = vld [vmem:[%s252 + $0x170] sm:$0xff]
      %v312 = vld [vmem:[%s252 + $0x178] sm:$0x3]
      %v313 = vld [vmem:[%s252 + $0x180] sm:$0xff]
      %v314 = vld [vmem:[%s252 + $0x188] sm:$0xff]
      %v315 = vld [vmem:[%s252 + $0x190] sm:$0x3]
      %v316 = vld [vmem:[%s252 + $0x198] sm:$0xff]
      %v317 = vld [vmem:[%s252 + $0x1a0] sm:$0xff]
      %v318 = vld [vmem:[%s252 + $0x1a8] sm:$0x3]
      %v319 = vld [vmem:[%s252 + $0x1b0] sm:$0xff]
      %v320 = vld [vmem:[%s252 + $0x1b8] sm:$0xff]
      %v321 = vld [vmem:[%s252 + $0x1c0] sm:$0x3]
      %v322 = vld [vmem:[%s252 + $0x1c8] sm:$0xff]
      %v323 = vld [vmem:[%s252 + $0x1d0] sm:$0xff]
      %v324 = vld [vmem:[%s252 + $0x1d8] sm:$0x3]
      %v325 = vmax.f32 %v265, 0.0
      %v326 = vmax.f32 %v266, 0.0
      %v327 = vmax.f32 %v267, 0.0
      %v328 = vmax.f32 %v268, 0.0
      %v329 = vmax.f32 %v269, 0.0
      %v330 = vmax.f32 %v270, 0.0
      %v331 = vmax.f32 %v271, 0.0
      %v332 = vmax.f32 %v272, 0.0
      %v333 = vmax.f32 %v273, 0.0
      %v334 = vmax.f32 %v274, 0.0
      %v335 = vmax.f32 %v275, 0.0
      %v336 = vmax.f32 %v276, 0.0
      %v337 = vmax.f32 %v277, 0.0
      %v338 = vmax.f32 %v278, 0.0
      %v339 = vmax.f32 %v279, 0.0
      %v340 = vmax.f32 %v280, 0.0
      %v341 = vmax.f32 %v281, 0.0
      %v342 = vmax.f32 %v282, 0.0
      %v343 = vmax.f32 %v283, 0.0
      %v344 = vmax.f32 %v284, 0.0
      %v345 = vmax.f32 %v285, 0.0
      %v346 = vmax.f32 %v286, 0.0
      %v347 = vmax.f32 %v287, 0.0
      %v348 = vmax.f32 %v288, 0.0
      %v349 = vmax.f32 %v289, 0.0
      %v350 = vmax.f32 %v290, 0.0
      %v351 = vmax.f32 %v291, 0.0
      %v352 = vmax.f32 %v292, 0.0
      %v353 = vmax.f32 %v293, 0.0
      %v354 = vmax.f32 %v294, 0.0
      %v355 = vmax.f32 %v295, 0.0
      %v356 = vmax.f32 %v296, 0.0
      %v357 = vmax.f32 %v297, 0.0
      %v358 = vmax.f32 %v298, 0.0
      %v359 = vmax.f32 %v299, 0.0
      %v360 = vmax.f32 %v300, 0.0
      %v361 = vmax.f32 %v301, 0.0
      %v362 = vmax.f32 %v302, 0.0
      %v363 = vmax.f32 %v303, 0.0
      %v364 = vmax.f32 %v304, 0.0
      %v365 = vmax.f32 %v305, 0.0
      %v366 = vmax.f32 %v306, 0.0
      %v367 = vmax.f32 %v307, 0.0
      %v368 = vmax.f32 %v308, 0.0
      %v369 = vmax.f32 %v309, 0.0
      %v370 = vmax.f32 %v310, 0.0
      %v371 = vmax.f32 %v311, 0.0
      %v372 = vmax.f32 %v312, 0.0
      %v373 = vmax.f32 %v313, 0.0
      %v374 = vmax.f32 %v314, 0.0
      %v375 = vmax.f32 %v315, 0.0
      %v376 = vmax.f32 %v316, 0.0
      %v377 = vmax.f32 %v317, 0.0
      %v378 = vmax.f32 %v318, 0.0
      %v379 = vmax.f32 %v319, 0.0
      %v380 = vmax.f32 %v320, 0.0
      %v381 = vmax.f32 %v321, 0.0
      %v382 = vmax.f32 %v322, 0.0
      %v383 = vmax.f32 %v323, 0.0
      %v384 = vmax.f32 %v324, 0.0
      %v385 = vpack.c.bf16 %v326, %v325
      %v386 = vpack.c.bf16 %v327, %v327
      %v387 = vpack.c.bf16 %v329, %v328
      %v388 = vpack.c.bf16 %v330, %v330
      %v389 = vpack.c.bf16 %v332, %v331
      %v390 = vpack.c.bf16 %v333, %v333
      %v391 = vpack.c.bf16 %v335, %v334
      %v392 = vpack.c.bf16 %v336, %v336
      %v393 = vpack.c.bf16 %v338, %v337
      %v394 = vpack.c.bf16 %v339, %v339
      %v395 = vpack.c.bf16 %v341, %v340
      %v396 = vpack.c.bf16 %v342, %v342
      %v397 = vpack.c.bf16 %v344, %v343
      %v398 = vpack.c.bf16 %v345, %v345
      %v399 = vpack.c.bf16 %v347, %v346
      %v400 = vpack.c.bf16 %v348, %v348
      %v401 = vpack.c.bf16 %v350, %v349
      %v402 = vpack.c.bf16 %v351, %v351
      %v403 = vpack.c.bf16 %v353, %v352
      %v404 = vpack.c.bf16 %v354, %v354
      %v405 = vpack.c.bf16 %v356, %v355
      %v406 = vpack.c.bf16 %v357, %v357
      %v407 = vpack.c.bf16 %v359, %v358
      %v408 = vpack.c.bf16 %v360, %v360
      %v409 = vpack.c.bf16 %v362, %v361
      %v410 = vpack.c.bf16 %v363, %v363
      %v411 = vpack.c.bf16 %v365, %v364
      %v412 = vpack.c.bf16 %v366, %v366
      %v413 = vpack.c.bf16 %v368, %v367
      %v414 = vpack.c.bf16 %v369, %v369
      %v415 = vpack.c.bf16 %v371, %v370
      %v416 = vpack.c.bf16 %v372, %v372
      %v417 = vpack.c.bf16 %v374, %v373
      %v418 = vpack.c.bf16 %v375, %v375
      %v419 = vpack.c.bf16 %v377, %v376
      %v420 = vpack.c.bf16 %v378, %v378
      %v421 = vpack.c.bf16 %v380, %v379
      %v422 = vpack.c.bf16 %v381, %v381
      %v423 = vpack.c.bf16 %v383, %v382
      %v424 = vpack.c.bf16 %v384, %v384
      %v425 = vld [vmem:[%s1] sm:$0xf]
      %v426 = vld [vmem:[%s1 + $0x4] sm:$0xf]
      %v427 = vld [vmem:[%s1 + $0x8] sm:$0xf]
      %v428 = vld [vmem:[%s1 + $0xc] sm:$0xf]
      %v429 = vld [vmem:[%s1 + $0x10] sm:$0xf]
      %v430 = vld [vmem:[%s1 + $0x14] sm:$0xf]
      %v431 = vld [vmem:[%s1 + $0x18] sm:$0xf]
      %v432 = vld [vmem:[%s1 + $0x1c] sm:$0xf]
      %v433 = vld [vmem:[%s1 + $0x20] sm:$0xf]
      %v434 = vld [vmem:[%s1 + $0x24] sm:$0xf]
      %v435 = vld [vmem:[%s1 + $0x28] sm:$0xf]
      %v436 = vld [vmem:[%s1 + $0x2c] sm:$0xf]
      %v437 = vld [vmem:[%s1 + $0x30] sm:$0xf]
      %v438 = vld [vmem:[%s1 + $0x34] sm:$0xf]
      %v439 = vld [vmem:[%s1 + $0x38] sm:$0xf]
      %v440 = vld [vmem:[%s1 + $0x3c] sm:$0xf]
      %vm441 = vsmask.f32 7424
      %v443 = vshrl.u32 %v385, 16
      %v445 = vshll.u32 %v385, 16
      %v447 = vrot.slane %v445, 1
      %v448 = vor.u32 %v443, %v447
      %v450 = vshll.u32 %v386, 16
      %v452 = vrot.slane %v450, 1
      %v453 = vsel %vm441, %v448, %v452
      %v455 = vshrl.u32 %v387, 16
      %v457 = vshll.u32 %v387, 16
      %v459 = vrot.slane %v457, 1
      %v460 = vor.u32 %v455, %v459
      %v462 = vshll.u32 %v388, 16
      %v464 = vrot.slane %v462, 1
      %v465 = vsel %vm441, %v460, %v464
      %v467 = vshrl.u32 %v389, 16
      %v469 = vshll.u32 %v389, 16
      %v471 = vrot.slane %v469, 1
      %v472 = vor.u32 %v467, %v471
      %v474 = vshll.u32 %v390, 16
      %v476 = vrot.slane %v474, 1
      %v477 = vsel %vm441, %v472, %v476
      %v479 = vshrl.u32 %v391, 16
      %v481 = vshll.u32 %v391, 16
      %v483 = vrot.slane %v481, 1
      %v484 = vor.u32 %v479, %v483
      %v486 = vshll.u32 %v392, 16
      %v488 = vrot.slane %v486, 1
      %v489 = vsel %vm441, %v484, %v488
      %v491 = vshrl.u32 %v393, 16
      %v493 = vshll.u32 %v393, 16
      %v495 = vrot.slane %v493, 1
      %v496 = vor.u32 %v491, %v495
      %v498 = vshll.u32 %v394, 16
      %v500 = vrot.slane %v498, 1
      %v501 = vsel %vm441, %v496, %v500
      %v503 = vshrl.u32 %v395, 16
      %v505 = vshll.u32 %v395, 16
      %v507 = vrot.slane %v505, 1
      %v508 = vor.u32 %v503, %v507
      %v510 = vshll.u32 %v396, 16
      %v512 = vrot.slane %v510, 1
      %v513 = vsel %vm441, %v508, %v512
      %v515 = vshrl.u32 %v397, 16
      %v517 = vshll.u32 %v397, 16
      %v519 = vrot.slane %v517, 1
      %v520 = vor.u32 %v515, %v519
      %v522 = vshll.u32 %v398, 16
      %v524 = vrot.slane %v522, 1
      %v525 = vsel %vm441, %v520, %v524
      %v527 = vshrl.u32 %v399, 16
      %v529 = vshll.u32 %v399, 16
      %v531 = vrot.slane %v529, 1
      %v532 = vor.u32 %v527, %v531
      %v534 = vshll.u32 %v400, 16
      %v536 = vrot.slane %v534, 1
      %v537 = vsel %vm441, %v532, %v536
      %v539 = vshrl.u32 %v401, 16
      %v541 = vshll.u32 %v401, 16
      %v543 = vrot.slane %v541, 1
      %v544 = vor.u32 %v539, %v543
      %v546 = vshll.u32 %v402, 16
      %v548 = vrot.slane %v546, 1
      %v549 = vsel %vm441, %v544, %v548
      %v551 = vshrl.u32 %v403, 16
      %v553 = vshll.u32 %v403, 16
      %v555 = vrot.slane %v553, 1
      %v556 = vor.u32 %v551, %v555
      %v558 = vshll.u32 %v404, 16
      %v560 = vrot.slane %v558, 1
      %v561 = vsel %vm441, %v556, %v560
      %v563 = vshrl.u32 %v405, 16
      %v565 = vshll.u32 %v405, 16
      %v567 = vrot.slane %v565, 1
      %v568 = vor.u32 %v563, %v567
      %v570 = vshll.u32 %v406, 16
      %v572 = vrot.slane %v570, 1
      %v573 = vsel %vm441, %v568, %v572
      %v575 = vshrl.u32 %v407, 16
      %v577 = vshll.u32 %v407, 16
      %v579 = vrot.slane %v577, 1
      %v580 = vor.u32 %v575, %v579
      %v582 = vshll.u32 %v408, 16
      %v584 = vrot.slane %v582, 1
      %v585 = vsel %vm441, %v580, %v584
      %v587 = vshrl.u32 %v409, 16
      %v589 = vshll.u32 %v409, 16
      %v591 = vrot.slane %v589, 1
      %v592 = vor.u32 %v587, %v591
      %v594 = vshll.u32 %v410, 16
      %v596 = vrot.slane %v594, 1
      %v597 = vsel %vm441, %v592, %v596
      %v599 = vshrl.u32 %v411, 16
      %v601 = vshll.u32 %v411, 16
      %v603 = vrot.slane %v601, 1
      %v604 = vor.u32 %v599, %v603
      %v606 = vshll.u32 %v412, 16
      %v608 = vrot.slane %v606, 1
      %v609 = vsel %vm441, %v604, %v608
      %v611 = vshrl.u32 %v413, 16
      %v613 = vshll.u32 %v413, 16
      %v615 = vrot.slane %v613, 1
      %v616 = vor.u32 %v611, %v615
      %v618 = vshll.u32 %v414, 16
      %v620 = vrot.slane %v618, 1
      %v621 = vsel %vm441, %v616, %v620
      %v623 = vshrl.u32 %v415, 16
      %v625 = vshll.u32 %v415, 16
      %v627 = vrot.slane %v625, 1
      %v628 = vor.u32 %v623, %v627
      %v630 = vshll.u32 %v416, 16
      %v632 = vrot.slane %v630, 1
      %v633 = vsel %vm441, %v628, %v632
      %v635 = vshrl.u32 %v417, 16
      %v637 = vshll.u32 %v417, 16
      %v639 = vrot.slane %v637, 1
      %v640 = vor.u32 %v635, %v639
      %v642 = vshll.u32 %v418, 16
      %v644 = vrot.slane %v642, 1
      %v645 = vsel %vm441, %v640, %v644
      %v647 = vshrl.u32 %v419, 16
      %v649 = vshll.u32 %v419, 16
      %v651 = vrot.slane %v649, 1
      %v652 = vor.u32 %v647, %v651
      %v654 = vshll.u32 %v420, 16
      %v656 = vrot.slane %v654, 1
      %v657 = vsel %vm441, %v652, %v656
      %s676 = scalar_lea.vmem %s1, 64
      %v677 = vld [vmem:[%s676] sm:$0xf]
      %v678 = vld [vmem:[%s676 + $0x4] sm:$0xf]
      %v679 = vld [vmem:[%s676 + $0x8] sm:$0xf]
      %v680 = vld [vmem:[%s676 + $0xc] sm:$0xf]
      %v681 = vld [vmem:[%s676 + $0x10] sm:$0xf]
      %v682 = vld [vmem:[%s676 + $0x14] sm:$0xf]
      %v683 = vld [vmem:[%s676 + $0x18] sm:$0xf]
      %v684 = vld [vmem:[%s676 + $0x1c] sm:$0xf]
      %v685 = vld [vmem:[%s676 + $0x20] sm:$0xf]
      %v686 = vld [vmem:[%s676 + $0x24] sm:$0xf]
      %v687 = vld [vmem:[%s676 + $0x28] sm:$0xf]
      %v688 = vld [vmem:[%s676 + $0x2c] sm:$0xf]
      %v689 = vld [vmem:[%s676 + $0x30] sm:$0xf]
      %v690 = vld [vmem:[%s676 + $0x34] sm:$0xf]
      %v691 = vld [vmem:[%s676 + $0x38] sm:$0xf]
      %v692 = vld [vmem:[%s676 + $0x3c] sm:$0xf]
      %v709 = vunpack.c.l.b16 %v677
      %v710 = vunpack.c.l.b16 %v678
      %v711 = vunpack.c.l.b16 %v679
      %v712 = vunpack.c.l.b16 %v680
      %v713 = vunpack.c.l.b16 %v681
      %v714 = vunpack.c.l.b16 %v682
      %v715 = vunpack.c.l.b16 %v683
      %v716 = vunpack.c.l.b16 %v684
      %v717 = vunpack.c.l.b16 %v685
      %v718 = vunpack.c.l.b16 %v686
      %v719 = vunpack.c.l.b16 %v687
      %v720 = vunpack.c.l.b16 %v688
      %v721 = vunpack.c.l.b16 %v689
      %v722 = vunpack.c.l.b16 %v690
      %v723 = vunpack.c.l.b16 %v691
      %v724 = vunpack.c.l.b16 %v692
      %v725 = vpack.c.b16 %v710, %v709
      %v726 = vpack.c.b16 %v712, %v711
      %v727 = vpack.c.b16 %v714, %v713
      %v728 = vpack.c.b16 %v716, %v715
      %v729 = vpack.c.b16 %v718, %v717
      %v730 = vpack.c.b16 %v720, %v719
      %v731 = vpack.c.b16 %v722, %v721
      %v732 = vpack.c.b16 %v724, %v723
      %741 = vmatprep.subr.bf16.mxu0 0
      %742 = vmatpush1.bf16.msra.mxu0 %v725
      %743 = vmatprep.subr.bf16.mxu0 0
      %744 = vmatpush1.bf16.msra.mxu0 %v726
      %745 = vmatprep.subr.bf16.mxu0 0
      %746 = vmatpush1.bf16.msra.mxu0 %v727
      %747 = vmatprep.subr.bf16.mxu0 0
      %748 = vmatpush1.bf16.msra.mxu0 %v728
      %749 = vmatprep.subr.bf16.mxu0 0
      %750 = vmatpush1.bf16.msra.mxu0 %v729
      %751 = vmatprep.subr.bf16.mxu0 0
      %752 = vmatpush1.bf16.msra.mxu0 %v730
      %753 = vmatprep.subr.bf16.mxu0 0
      %754 = vmatpush1.bf16.msra.mxu0 %v731
      %755 = vmatprep.subr.bf16.mxu0 0
      %756 = vmatpush1.bf16.msra.mxu0 %v732
      %757 = vmatprep.subr.bf16.mxu0 0
      %758 = vmatpush1.bf16.msra.mxu0 0
      %759 = vmatprep.subr.bf16.mxu0 0
      %760 = vmatpush1.bf16.msra.mxu0 0
      %761 = vmatprep.subr.bf16.mxu0 0
      %762 = vmatpush1.bf16.msra.mxu0 0
      %763 = vmatprep.subr.bf16.mxu0 0
      %764 = vmatpush1.bf16.msra.mxu0 0
      %765 = vmatprep.subr.bf16.mxu0 0
      %766 = vmatpush1.bf16.msra.mxu0 0
      %767 = vmatprep.subr.bf16.mxu0 0
      %768 = vmatpush1.bf16.msra.mxu0 0
      %769 = vmatprep.subr.bf16.mxu0 0
      %770 = vmatpush1.bf16.msra.mxu0 0
      %771 = vmatprep.subr.bf16.mxu0 0
      %772 = vmatpush1.bf16.msra.mxu0 0
      %773 = vmatprep.mubr.bf16.mxu0 0
      %774 = vmatmul.mubr.bf16.gmra.mrb[0].mxu0 %v453
      %v775 = vpop.f32.mrb[0].mxu0
      %v776 = vadd.f32 0.0, %v775
      %v777 = vpop.f32.mrb[0].mxu0
      %v778 = vpop.f32.mrb[0].mxu0
      %v779 = vadd.f32 0.0, %v778
      %v780 = vpop.f32.mrb[0].mxu0
      %781 = vmatprep.mubr.bf16.mxu0 0
      %782 = vmatmul.mubr.bf16.gmra.mrb[0].mxu0 %v465
      %v783 = vpop.f32.mrb[0].mxu0
      %v784 = vadd.f32 0.0, %v783
      %v785 = vpop.f32.mrb[0].mxu0
      %v786 = vpop.f32.mrb[0].mxu0
      %v787 = vadd.f32 0.0, %v786
      %v788 = vpop.f32.mrb[0].mxu0
      %789 = vmatprep.mubr.bf16.mxu0 0
      %790 = vmatmul.mubr.bf16.gmra.mrb[0].mxu0 %v477
      %v791 = vpop.f32.mrb[0].mxu0
      %v792 = vadd.f32 0.0, %v791
      %v793 = vpop.f32.mrb[0].mxu0
      %v794 = vpop.f32.mrb[0].mxu0
      %v795 = vadd.f32 0.0, %v794
      %v796 = vpop.f32.mrb[0].mxu0
      %797 = vmatprep.mubr.bf16.mxu0 0
      %798 = vmatmul.mubr.bf16.gmra.mrb[0].mxu0 %v489
      %v799 = vpop.f32.mrb[0].mxu0
      %v800 = vadd.f32 0.0, %v799
      %v801 = vpop.f32.mrb[0].mxu0
      %v802 = vpop.f32.mrb[0].mxu0
      %v803 = vadd.f32 0.0, %v802
      %v804 = vpop.f32.mrb[0].mxu0
      %805 = vmatprep.mubr.bf16.mxu0 0
      %806 = vmatmul.mubr.bf16.gmra.mrb[0].mxu0 %v501
      %v807 = vpop.f32.mrb[0].mxu0
      %v808 = vadd.f32 0.0, %v807
      %v809 = vpop.f32.mrb[0].mxu0
      %v810 = vpop.f32.mrb[0].mxu0
      %v811 = vadd.f32 0.0, %v810
      %v812 = vpop.f32.mrb[0].mxu0
      %813 = vmatprep.mubr.bf16.mxu0 0
      %814 = vmatmul.mubr.bf16.gmra.mrb[0].mxu0 %v513
      %v815 = vpop.f32.mrb[0].mxu0
      %v816 = vadd.f32 0.0, %v815
      %v817 = vpop.f32.mrb[0].mxu0
      %v818 = vpop.f32.mrb[0].mxu0
      %v819 = vadd.f32 0.0, %v818
      %v820 = vpop.f32.mrb[0].mxu0
      %821 = vmatprep.mubr.bf16.mxu0 0
      %822 = vmatmul.mubr.bf16.gmra.mrb[0].mxu0 %v525
      %v823 = vpop.f32.mrb[0].mxu0
      %v824 = vadd.f32 0.0, %v823
      %v825 = vpop.f32.mrb[0].mxu0
      %v826 = vpop.f32.mrb[0].mxu0
      %v827 = vadd.f32 0.0, %v826
      %v828 = vpop.f32.mrb[0].mxu0
      %829 = vmatprep.mubr.bf16.mxu0 0
      %830 = vmatmul.mubr.bf16.gmra.mrb[0].mxu0 %v537
      %v831 = vpop.f32.mrb[0].mxu0
      %v832 = vadd.f32 0.0, %v831
      %v833 = vpop.f32.mrb[0].mxu0
      %v834 = vpop.f32.mrb[0].mxu0
      %v835 = vadd.f32 0.0, %v834
      %v836 = vpop.f32.mrb[0].mxu0
      %837 = vmatprep.mubr.bf16.mxu0 0
      %838 = vmatmul.mubr.bf16.gmra.mrb[0].mxu0 %v549
      %v839 = vpop.f32.mrb[0].mxu0
      %v840 = vadd.f32 0.0, %v839
      %v841 = vpop.f32.mrb[0].mxu0
      %v842 = vpop.f32.mrb[0].mxu0
      %v843 = vadd.f32 0.0, %v842
      %v844 = vpop.f32.mrb[0].mxu0
      %845 = vmatprep.mubr.bf16.mxu0 0
      %846 = vmatmul.mubr.bf16.gmra.mrb[0].mxu0 %v561
      %v847 = vpop.f32.mrb[0].mxu0
      %v848 = vadd.f32 0.0, %v847
      %v849 = vpop.f32.mrb[0].mxu0
      %v850 = vpop.f32.mrb[0].mxu0
      %v851 = vadd.f32 0.0, %v850
      %v852 = vpop.f32.mrb[0].mxu0
      %853 = vmatprep.mubr.bf16.mxu0 0
      %854 = vmatmul.mubr.bf16.gmra.mrb[0].mxu0 %v573
      %v855 = vpop.f32.mrb[0].mxu0
      %v856 = vadd.f32 0.0, %v855
      %v857 = vpop.f32.mrb[0].mxu0
      %v858 = vpop.f32.mrb[0].mxu0
      %v859 = vadd.f32 0.0, %v858
      %v860 = vpop.f32.mrb[0].mxu0
      %861 = vmatprep.mubr.bf16.mxu0 0
      %862 = vmatmul.mubr.bf16.gmra.mrb[0].mxu0 %v585
      %v863 = vpop.f32.mrb[0].mxu0
      %v864 = vadd.f32 0.0, %v863
      %v865 = vpop.f32.mrb[0].mxu0
      %v866 = vpop.f32.mrb[0].mxu0
      %v867 = vadd.f32 0.0, %v866
      %v868 = vpop.f32.mrb[0].mxu0
      %869 = vmatprep.mubr.bf16.mxu0 0
      %870 = vmatmul.mubr.bf16.gmra.mrb[0].mxu0 %v597
      %v871 = vpop.f32.mrb[0].mxu0
      %v872 = vadd.f32 0.0, %v871
      %v873 = vpop.f32.mrb[0].mxu0
      %v874 = vpop.f32.mrb[0].mxu0
      %v875 = vadd.f32 0.0, %v874
      %v876 = vpop.f32.mrb[0].mxu0
      %877 = vmatprep.mubr.bf16.mxu0 0
      %878 = vmatmul.mubr.bf16.gmra.mrb[0].mxu0 %v609
      %v879 = vpop.f32.mrb[0].mxu0
      %v880 = vadd.f32 0.0, %v879
      %v881 = vpop.f32.mrb[0].mxu0
      %v882 = vpop.f32.mrb[0].mxu0
      %v883 = vadd.f32 0.0, %v882
      %v884 = vpop.f32.mrb[0].mxu0
      %885 = vmatprep.mubr.bf16.mxu0 0
      %886 = vmatmul.mubr.bf16.gmra.mrb[0].mxu0 %v621
      %v887 = vpop.f32.mrb[0].mxu0
      %v888 = vadd.f32 0.0, %v887
      %v889 = vpop.f32.mrb[0].mxu0
      %v890 = vpop.f32.mrb[0].mxu0
      %v891 = vadd.f32 0.0, %v890
      %v892 = vpop.f32.mrb[0].mxu0
      %893 = vmatprep.mubr.bf16.mxu0 0
      %894 = vmatmul.mubr.bf16.gmra.mrb[0].mxu0 %v633
      %v895 = vpop.f32.mrb[0].mxu0
      %v896 = vadd.f32 0.0, %v895
      %v897 = vpop.f32.mrb[0].mxu0
      %v898 = vpop.f32.mrb[0].mxu0
      %v899 = vadd.f32 0.0, %v898
      %v900 = vpop.f32.mrb[0].mxu0
      %901 = vmatprep.mubr.bf16.mxu0 0
      %902 = vmatmul.mubr.bf16.gmra.mrb[0].mxu0 %v645
      %v903 = vpop.f32.mrb[0].mxu0
      %v904 = vadd.f32 0.0, %v903
      %v905 = vpop.f32.mrb[0].mxu0
      %v906 = vpop.f32.mrb[0].mxu0
      %v907 = vadd.f32 0.0, %v906
      %v908 = vpop.f32.mrb[0].mxu0
      %909 = vmatprep.mubr.bf16.mxu0 0
      %910 = vmatmul.mubr.bf16.gmra.mrb[0].mxu0 %v657
      %v911 = vpop.f32.mrb[0].mxu0
      %v912 = vadd.f32 0.0, %v911
      %v913 = vpop.f32.mrb[0].mxu0
      %v914 = vpop.f32.mrb[0].mxu0
      %v915 = vadd.f32 0.0, %v914
      %v916 = vpop.f32.mrb[0].mxu0
      %917 = vdwg.mxu0
      %v934 = vunpack.c.l.b16 %v425
      %v935 = vunpack.c.l.b16 %v426
      %v936 = vunpack.c.l.b16 %v427
      %v937 = vunpack.c.l.b16 %v428
      %v938 = vunpack.c.l.b16 %v429
      %v939 = vunpack.c.l.b16 %v430
      %v940 = vunpack.c.l.b16 %v431
      %v941 = vunpack.c.l.b16 %v432
      %v942 = vunpack.c.l.b16 %v433
      %v943 = vunpack.c.l.b16 %v434
      %v944 = vunpack.c.l.b16 %v435
      %v945 = vunpack.c.l.b16 %v436
      %v946 = vunpack.c.l.b16 %v437
      %v947 = vunpack.c.l.b16 %v438
      %v948 = vunpack.c.l.b16 %v439
      %v949 = vunpack.c.l.b16 %v440
      %v950 = vpack.c.b16 %v935, %v934
      %v951 = vpack.c.b16 %v937, %v936
      %v952 = vpack.c.b16 %v939, %v938
      %v953 = vpack.c.b16 %v941, %v940
      %v954 = vpack.c.b16 %v943, %v942
      %v955 = vpack.c.b16 %v945, %v944
      %v956 = vpack.c.b16 %v947, %v946
      %v957 = vpack.c.b16 %v949, %v948
      %966 = vmatprep.subr.bf16.mxu0 0
      %967 = vmatpush1.bf16.msra.mxu0 %v950
      %968 = vmatprep.subr.bf16.mxu0 0
      %969 = vmatpush1.bf16.msra.mxu0 %v951
      %970 = vmatprep.subr.bf16.mxu0 0
      %971 = vmatpush1.bf16.msra.mxu0 %v952
      %972 = vmatprep.subr.bf16.mxu0 0
      %973 = vmatpush1.bf16.msra.mxu0 %v953
      %974 = vmatprep.subr.bf16.mxu0 0
      %975 = vmatpush1.bf16.msra.mxu0 %v954
      %976 = vmatprep.subr.bf16.mxu0 0
      %977 = vmatpush1.bf16.msra.mxu0 %v955
      %978 = vmatprep.subr.bf16.mxu0 0
      %979 = vmatpush1.bf16.msra.mxu0 %v956
      %980 = vmatprep.subr.bf16.mxu0 0
      %981 = vmatpush1.bf16.msra.mxu0 %v957
      %982 = vmatprep.subr.bf16.mxu0 0
      %983 = vmatpush1.bf16.msra.mxu0 0
      %984 = vmatprep.subr.bf16.mxu0 0
      %985 = vmatpush1.bf16.msra.mxu0 0
      %986 = vmatprep.subr.bf16.mxu0 0
      %987 = vmatpush1.bf16.msra.mxu0 0
      %988 = vmatprep.subr.bf16.mxu0 0
      %989 = vmatpush1.bf16.msra.mxu0 0
      %990 = vmatprep.subr.bf16.mxu0 0
      %991 = vmatpush1.bf16.msra.mxu0 0
      %992 = vmatprep.subr.bf16.mxu0 0
      %993 = vmatpush1.bf16.msra.mxu0 0
      %994 = vmatprep.subr.bf16.mxu0 0
      %995 = vmatpush1.bf16.msra.mxu0 0
      %996 = vmatprep.subr.bf16.mxu0 0
      %997 = vmatpush1.bf16.msra.mxu0 0
      %998 = vmatprep.mubr.bf16.mxu0 0
      %999 = vmatmul.mubr.bf16.gmra.mrb[0].mxu0 %v385
      %v1000 = vpop.f32.mrb[0].mxu0
      %v1001 = vadd.f32 %v776, %v1000
      %v1002 = vpop.f32.mrb[0].mxu0
      %v1003 = vpop.f32.mrb[0].mxu0
      %v1004 = vadd.f32 %v779, %v1003
      %v1005 = vpop.f32.mrb[0].mxu0
      %1006 = vmatprep.mubr.bf16.mxu0 0
      %1007 = vmatmul.mubr.bf16.gmra.mrb[0].mxu0 %v387
      %v1008 = vpop.f32.mrb[0].mxu0
      %v1009 = vadd.f32 %v784, %v1008
      %v1010 = vpop.f32.mrb[0].mxu0
      %v1011 = vpop.f32.mrb[0].mxu0
      %v1012 = vadd.f32 %v787, %v1011
      %v1013 = vpop.f32.mrb[0].mxu0
      %1014 = vmatprep.mubr.bf16.mxu0 0
      %1015 = vmatmul.mubr.bf16.gmra.mrb[0].mxu0 %v389
      %v1016 = vpop.f32.mrb[0].mxu0
      %v1017 = vadd.f32 %v792, %v1016
      %v1018 = vpop.f32.mrb[0].mxu0
      %v1019 = vpop.f32.mrb[0].mxu0
      %v1020 = vadd.f32 %v795, %v1019
      %v1021 = vpop.f32.mrb[0].mxu0
      %1022 = vmatprep.mubr.bf16.mxu0 0
      %1023 = vmatmul.mubr.bf16.gmra.mrb[0].mxu0 %v391
      %v1024 = vpop.f32.mrb[0].mxu0
      %v1025 = vadd.f32 %v800, %v1024
      %v1026 = vpop.f32.mrb[0].mxu0
      %v1027 = vpop.f32.mrb[0].mxu0
      %v1028 = vadd.f32 %v803, %v1027
      %v1029 = vpop.f32.mrb[0].mxu0
      %1030 = vmatprep.mubr.bf16.mxu0 0
      %1031 = vmatmul.mubr.bf16.gmra.mrb[0].mxu0 %v393
      %v1032 = vpop.f32.mrb[0].mxu0
      %v1033 = vadd.f32 %v808, %v1032
      %v1034 = vpop.f32.mrb[0].mxu0
      %v1035 = vpop.f32.mrb[0].mxu0
      %v1036 = vadd.f32 %v811, %v1035
      %v1037 = vpop.f32.mrb[0].mxu0
      %1038 = vmatprep.mubr.bf16.mxu0 0
      %1039 = vmatmul.mubr.bf16.gmra.mrb[0].mxu0 %v395
      %v1040 = vpop.f32.mrb[0].mxu0
      %v1041 = vadd.f32 %v816, %v1040
      %v1042 = vpop.f32.mrb[0].mxu0
      %v1043 = vpop.f32.mrb[0].mxu0
      %v1044 = vadd.f32 %v819, %v1043
      %v1045 = vpop.f32.mrb[0].mxu0
      %1046 = vmatprep.mubr.bf16.mxu0 0
      %1047 = vmatmul.mubr.bf16.gmra.mrb[0].mxu0 %v397
      %v1048 = vpop.f32.mrb[0].mxu0
      %v1049 = vadd.f32 %v824, %v1048
      %v1050 = vpop.f32.mrb[0].mxu0
      %v1051 = vpop.f32.mrb[0].mxu0
      %v1052 = vadd.f32 %v827, %v1051
      %v1053 = vpop.f32.mrb[0].mxu0
      %1054 = vmatprep.mubr.bf16.mxu0 0
      %1055 = vmatmul.mubr.bf16.gmra.mrb[0].mxu0 %v399
      %v1056 = vpop.f32.mrb[0].mxu0
      %v1057 = vadd.f32 %v832, %v1056
      %v1058 = vpop.f32.mrb[0].mxu0
      %v1059 = vpop.f32.mrb[0].mxu0
      %v1060 = vadd.f32 %v835, %v1059
      %v1061 = vpop.f32.mrb[0].mxu0
      %1062 = vmatprep.mubr.bf16.mxu0 0
      %1063 = vmatmul.mubr.bf16.gmra.mrb[0].mxu0 %v401
      %v1064 = vpop.f32.mrb[0].mxu0
      %v1065 = vadd.f32 %v840, %v1064
      %v1066 = vpop.f32.mrb[0].mxu0
      %v1067 = vpop.f32.mrb[0].mxu0
      %v1068 = vadd.f32 %v843, %v1067
      %v1069 = vpop.f32.mrb[0].mxu0
      %1070 = vmatprep.mubr.bf16.mxu0 0
      %1071 = vmatmul.mubr.bf16.gmra.mrb[0].mxu0 %v403
      %v1072 = vpop.f32.mrb[0].mxu0
      %v1073 = vadd.f32 %v848, %v1072
      %v1074 = vpop.f32.mrb[0].mxu0
      %v1075 = vpop.f32.mrb[0].mxu0
      %v1076 = vadd.f32 %v851, %v1075
      %v1077 = vpop.f32.mrb[0].mxu0
      %1078 = vmatprep.mubr.bf16.mxu0 0
      %1079 = vmatmul.mubr.bf16.gmra.mrb[0].mxu0 %v405
      %v1080 = vpop.f32.mrb[0].mxu0
      %v1081 = vadd.f32 %v856, %v1080
      %v1082 = vpop.f32.mrb[0].mxu0
      %v1083 = vpop.f32.mrb[0].mxu0
      %v1084 = vadd.f32 %v859, %v1083
      %v1085 = vpop.f32.mrb[0].mxu0
      %1086 = vmatprep.mubr.bf16.mxu0 0
      %1087 = vmatmul.mubr.bf16.gmra.mrb[0].mxu0 %v407
      %v1088 = vpop.f32.mrb[0].mxu0
      %v1089 = vadd.f32 %v864, %v1088
      %v1090 = vpop.f32.mrb[0].mxu0
      %v1091 = vpop.f32.mrb[0].mxu0
      %v1092 = vadd.f32 %v867, %v1091
      %v1093 = vpop.f32.mrb[0].mxu0
      %1094 = vmatprep.mubr.bf16.mxu0 0
      %1095 = vmatmul.mubr.bf16.gmra.mrb[0].mxu0 %v409
      %v1096 = vpop.f32.mrb[0].mxu0
      %v1097 = vadd.f32 %v872, %v1096
      %v1098 = vpop.f32.mrb[0].mxu0
      %v1099 = vpop.f32.mrb[0].mxu0
      %v1100 = vadd.f32 %v875, %v1099
      %v1101 = vpop.f32.mrb[0].mxu0
      %1102 = vmatprep.mubr.bf16.mxu0 0
      %1103 = vmatmul.mubr.bf16.gmra.mrb[0].mxu0 %v411
      %v1104 = vpop.f32.mrb[0].mxu0
      %v1105 = vadd.f32 %v880, %v1104
      %v1106 = vpop.f32.mrb[0].mxu0
      %v1107 = vpop.f32.mrb[0].mxu0
      %v1108 = vadd.f32 %v883, %v1107
      %v1109 = vpop.f32.mrb[0].mxu0
      %1110 = vmatprep.mubr.bf16.mxu0 0
      %1111 = vmatmul.mubr.bf16.gmra.mrb[0].mxu0 %v413
      %v1112 = vpop.f32.mrb[0].mxu0
      %v1113 = vadd.f32 %v888, %v1112
      %v1114 = vpop.f32.mrb[0].mxu0
      %v1115 = vpop.f32.mrb[0].mxu0
      %v1116 = vadd.f32 %v891, %v1115
      %v1117 = vpop.f32.mrb[0].mxu0
      %1118 = vmatprep.mubr.bf16.mxu0 0
      %1119 = vmatmul.mubr.bf16.gmra.mrb[0].mxu0 %v415
      %v1120 = vpop.f32.mrb[0].mxu0
      %v1121 = vadd.f32 %v896, %v1120
      %v1122 = vpop.f32.mrb[0].mxu0
      %v1123 = vpop.f32.mrb[0].mxu0
      %v1124 = vadd.f32 %v899, %v1123
      %v1125 = vpop.f32.mrb[0].mxu0
      %1126 = vmatprep.mubr.bf16.mxu0 0
      %1127 = vmatmul.mubr.bf16.gmra.mrb[0].mxu0 %v417
      %v1128 = vpop.f32.mrb[0].mxu0
      %v1129 = vadd.f32 %v904, %v1128
      %v1130 = vpop.f32.mrb[0].mxu0
      %v1131 = vpop.f32.mrb[0].mxu0
      %v1132 = vadd.f32 %v907, %v1131
      %v1133 = vpop.f32.mrb[0].mxu0
      %1134 = vmatprep.mubr.bf16.mxu0 0
      %1135 = vmatmul.mubr.bf16.gmra.mrb[0].mxu0 %v419
      %v1136 = vpop.f32.mrb[0].mxu0
      %v1137 = vadd.f32 %v912, %v1136
      %v1138 = vpop.f32.mrb[0].mxu0
      %v1139 = vpop.f32.mrb[0].mxu0
      %v1140 = vadd.f32 %v915, %v1139
      %v1141 = vpop.f32.mrb[0].mxu0
      %1142 = vdwg.mxu0
      %vm1179 = vcmask 1046528
      %v1180 = vrot.slane %v385, 1
      %v1181 = vrot.slane %v386, 1
      %v1182 = vsel %vm1179, %v1180, %v1181
      %v1183 = vrot.slane %v387, 1
      %v1184 = vrot.slane %v388, 1
      %v1185 = vsel %vm1179, %v1183, %v1184
      %v1186 = vrot.slane %v389, 1
      %v1187 = vrot.slane %v390, 1
      %v1188 = vsel %vm1179, %v1186, %v1187
      %v1189 = vrot.slane %v391, 1
      %v1190 = vrot.slane %v392, 1
      %v1191 = vsel %vm1179, %v1189, %v1190
      %v1192 = vrot.slane %v393, 1
      %v1193 = vrot.slane %v394, 1
      %v1194 = vsel %vm1179, %v1192, %v1193
      %v1195 = vrot.slane %v395, 1
      %v1196 = vrot.slane %v396, 1
      %v1197 = vsel %vm1179, %v1195, %v1196
      %v1198 = vrot.slane %v397, 1
      %v1199 = vrot.slane %v398, 1
      %v1200 = vsel %vm1179, %v1198, %v1199
      %v1201 = vrot.slane %v399, 1
      %v1202 = vrot.slane %v400, 1
      %v1203 = vsel %vm1179, %v1201, %v1202
      %v1204 = vrot.slane %v401, 1
      %v1205 = vrot.slane %v402, 1
      %v1206 = vsel %vm1179, %v1204, %v1205
      %v1207 = vrot.slane %v403, 1
      %v1208 = vrot.slane %v404, 1
      %v1209 = vsel %vm1179, %v1207, %v1208
      %v1210 = vrot.slane %v405, 1
      %v1211 = vrot.slane %v406, 1
      %v1212 = vsel %vm1179, %v1210, %v1211
      %v1213 = vrot.slane %v407, 1
      %v1214 = vrot.slane %v408, 1
      %v1215 = vsel %vm1179, %v1213, %v1214
      %v1216 = vrot.slane %v409, 1
      %v1217 = vrot.slane %v410, 1
      %v1218 = vsel %vm1179, %v1216, %v1217
      %v1219 = vrot.slane %v411, 1
      %v1220 = vrot.slane %v412, 1
      %v1221 = vsel %vm1179, %v1219, %v1220
      %v1222 = vrot.slane %v413, 1
      %v1223 = vrot.slane %v414, 1
      %v1224 = vsel %vm1179, %v1222, %v1223
      %v1225 = vrot.slane %v415, 1
      %v1226 = vrot.slane %v416, 1
      %v1227 = vsel %vm1179, %v1225, %v1226
      %v1228 = vrot.slane %v417, 1
      %v1229 = vrot.slane %v418, 1
      %v1230 = vsel %vm1179, %v1228, %v1229
      %v1231 = vrot.slane %v419, 1
      %v1232 = vrot.slane %v420, 1
      %v1233 = vsel %vm1179, %v1231, %v1232
      %s1252 = scalar_lea.vmem %s1, 128
      %v1253 = vld [vmem:[%s1252] sm:$0xf]
      %v1254 = vld [vmem:[%s1252 + $0x4] sm:$0xf]
      %v1255 = vld [vmem:[%s1252 + $0x8] sm:$0xf]
      %v1256 = vld [vmem:[%s1252 + $0xc] sm:$0xf]
      %v1257 = vld [vmem:[%s1252 + $0x10] sm:$0xf]
      %v1258 = vld [vmem:[%s1252 + $0x14] sm:$0xf]
      %v1259 = vld [vmem:[%s1252 + $0x18] sm:$0xf]
      %v1260 = vld [vmem:[%s1252 + $0x1c] sm:$0xf]
      %v1261 = vld [vmem:[%s1252 + $0x20] sm:$0xf]
      %v1262 = vld [vmem:[%s1252 + $0x24] sm:$0xf]
      %v1263 = vld [vmem:[%s1252 + $0x28] sm:$0xf]
      %v1264 = vld [vmem:[%s1252 + $0x2c] sm:$0xf]
      %v1265 = vld [vmem:[%s1252 + $0x30] sm:$0xf]
      %v1266 = vld [vmem:[%s1252 + $0x34] sm:$0xf]
      %v1267 = vld [vmem:[%s1252 + $0x38] sm:$0xf]
      %v1268 = vld [vmem:[%s1252 + $0x3c] sm:$0xf]
      %v1285 = vunpack.c.l.b16 %v1253
      %v1286 = vunpack.c.l.b16 %v1254
      %v1287 = vunpack.c.l.b16 %v1255
      %v1288 = vunpack.c.l.b16 %v1256
      %v1289 = vunpack.c.l.b16 %v1257
      %v1290 = vunpack.c.l.b16 %v1258
      %v1291 = vunpack.c.l.b16 %v1259
      %v1292 = vunpack.c.l.b16 %v1260
      %v1293 = vunpack.c.l.b16 %v1261
      %v1294 = vunpack.c.l.b16 %v1262
      %v1295 = vunpack.c.l.b16 %v1263
      %v1296 = vunpack.c.l.b16 %v1264
      %v1297 = vunpack.c.l.b16 %v1265
      %v1298 = vunpack.c.l.b16 %v1266
      %v1299 = vunpack.c.l.b16 %v1267
      %v1300 = vunpack.c.l.b16 %v1268
      %v1301 = vpack.c.b16 %v1286, %v1285
      %v1302 = vpack.c.b16 %v1288, %v1287
      %v1303 = vpack.c.b16 %v1290, %v1289
      %v1304 = vpack.c.b16 %v1292, %v1291
      %v1305 = vpack.c.b16 %v1294, %v1293
      %v1306 = vpack.c.b16 %v1296, %v1295
      %v1307 = vpack.c.b16 %v1298, %v1297
      %v1308 = vpack.c.b16 %v1300, %v1299
      %1317 = vmatprep.subr.bf16.mxu0 0
      %1318 = vmatpush1.bf16.msra.mxu0 %v1301
      %1319 = vmatprep.subr.bf16.mxu0 0
      %1320 = vmatpush1.bf16.msra.mxu0 %v1302
      %1321 = vmatprep.subr.bf16.mxu0 0
      %1322 = vmatpush1.bf16.msra.mxu0 %v1303
      %1323 = vmatprep.subr.bf16.mxu0 0
      %1324 = vmatpush1.bf16.msra.mxu0 %v1304
      %1325 = vmatprep.subr.bf16.mxu0 0
      %1326 = vmatpush1.bf16.msra.mxu0 %v1305
      %1327 = vmatprep.subr.bf16.mxu0 0
      %1328 = vmatpush1.bf16.msra.mxu0 %v1306
      %1329 = vmatprep.subr.bf16.mxu0 0
      %1330 = vmatpush1.bf16.msra.mxu0 %v1307
      %1331 = vmatprep.subr.bf16.mxu0 0
      %1332 = vmatpush1.bf16.msra.mxu0 %v1308
      %1333 = vmatprep.subr.bf16.mxu0 0
      %1334 = vmatpush1.bf16.msra.mxu0 0
      %1335 = vmatprep.subr.bf16.mxu0 0
      %1336 = vmatpush1.bf16.msra.mxu0 0
      %1337 = vmatprep.subr.bf16.mxu0 0
      %1338 = vmatpush1.bf16.msra.mxu0 0
      %1339 = vmatprep.subr.bf16.mxu0 0
      %1340 = vmatpush1.bf16.msra.mxu0 0
      %1341 = vmatprep.subr.bf16.mxu0 0
      %1342 = vmatpush1.bf16.msra.mxu0 0
      %1343 = vmatprep.subr.bf16.mxu0 0
      %1344 = vmatpush1.bf16.msra.mxu0 0
      %1345 = vmatprep.subr.bf16.mxu0 0
      %1346 = vmatpush1.bf16.msra.mxu0 0
      %1347 = vmatprep.subr.bf16.mxu0 0
      %1348 = vmatpush1.bf16.msra.mxu0 0
      %1349 = vmatprep.mubr.bf16.mxu0 0
      %1350 = vmatmul.mubr.bf16.gmra.mrb[0].mxu0 %v1182
      %v1351 = vpop.f32.mrb[0].mxu0
      %v1352 = vadd.f32 0.0, %v1351
      %v1353 = vpop.f32.mrb[0].mxu0
      %v1354 = vpop.f32.mrb[0].mxu0
      %v1355 = vadd.f32 0.0, %v1354
      %v1356 = vpop.f32.mrb[0].mxu0
      %1357 = vmatprep.mubr.bf16.mxu0 0
      %1358 = vmatmul.mubr.bf16.gmra.mrb[0].mxu0 %v1185
      %v1359 = vpop.f32.mrb[0].mxu0
      %v1360 = vadd.f32 0.0, %v1359
      %v1361 = vpop.f32.mrb[0].mxu0
      %v1362 = vpop.f32.mrb[0].mxu0
      %v1363 = vadd.f32 0.0, %v1362
      %v1364 = vpop.f32.mrb[0].mxu0
      %1365 = vmatprep.mubr.bf16.mxu0 0
      %1366 = vmatmul.mubr.bf16.gmra.mrb[0].mxu0 %v1188
      %v1367 = vpop.f32.mrb[0].mxu0
      %v1368 = vadd.f32 0.0, %v1367
      %v1369 = vpop.f32.mrb[0].mxu0
      %v1370 = vpop.f32.mrb[0].mxu0
      %v1371 = vadd.f32 0.0, %v1370
      %v1372 = vpop.f32.mrb[0].mxu0
      %1373 = vmatprep.mubr.bf16.mxu0 0
      %1374 = vmatmul.mubr.bf16.gmra.mrb[0].mxu0 %v1191
      %v1375 = vpop.f32.mrb[0].mxu0
      %v1376 = vadd.f32 0.0, %v1375
      %v1377 = vpop.f32.mrb[0].mxu0
      %v1378 = vpop.f32.mrb[0].mxu0
      %v1379 = vadd.f32 0.0, %v1378
      %v1380 = vpop.f32.mrb[0].mxu0
      %1381 = vmatprep.mubr.bf16.mxu0 0
      %1382 = vmatmul.mubr.bf16.gmra.mrb[0].mxu0 %v1194
      %v1383 = vpop.f32.mrb[0].mxu0
      %v1384 = vadd.f32 0.0, %v1383
      %v1385 = vpop.f32.mrb[0].mxu0
      %v1386 = vpop.f32.mrb[0].mxu0
      %v1387 = vadd.f32 0.0, %v1386
      %v1388 = vpop.f32.mrb[0].mxu0
      %1389 = vmatprep.mubr.bf16.mxu0 0
      %1390 = vmatmul.mubr.bf16.gmra.mrb[0].mxu0 %v1197
      %v1391 = vpop.f32.mrb[0].mxu0
      %v1392 = vadd.f32 0.0, %v1391
      %v1393 = vpop.f32.mrb[0].mxu0
      %v1394 = vpop.f32.mrb[0].mxu0
      %v1395 = vadd.f32 0.0, %v1394
      %v1396 = vpop.f32.mrb[0].mxu0
      %1397 = vmatprep.mubr.bf16.mxu0 0
      %1398 = vmatmul.mubr.bf16.gmra.mrb[0].mxu0 %v1200
      %v1399 = vpop.f32.mrb[0].mxu0
      %v1400 = vadd.f32 0.0, %v1399
      %v1401 = vpop.f32.mrb[0].mxu0
      %v1402 = vpop.f32.mrb[0].mxu0
      %v1403 = vadd.f32 0.0, %v1402
      %v1404 = vpop.f32.mrb[0].mxu0
      %1405 = vmatprep.mubr.bf16.mxu0 0
      %1406 = vmatmul.mubr.bf16.gmra.mrb[0].mxu0 %v1203
      %v1407 = vpop.f32.mrb[0].mxu0
      %v1408 = vadd.f32 0.0, %v1407
      %v1409 = vpop.f32.mrb[0].mxu0
      %v1410 = vpop.f32.mrb[0].mxu0
      %v1411 = vadd.f32 0.0, %v1410
      %v1412 = vpop.f32.mrb[0].mxu0
      %1413 = vmatprep.mubr.bf16.mxu0 0
      %1414 = vmatmul.mubr.bf16.gmra.mrb[0].mxu0 %v1206
      %v1415 = vpop.f32.mrb[0].mxu0
      %v1416 = vadd.f32 0.0, %v1415
      %v1417 = vpop.f32.mrb[0].mxu0
      %v1418 = vpop.f32.mrb[0].mxu0
      %v1419 = vadd.f32 0.0, %v1418
      %v1420 = vpop.f32.mrb[0].mxu0
      %1421 = vmatprep.mubr.bf16.mxu0 0
      %1422 = vmatmul.mubr.bf16.gmra.mrb[0].mxu0 %v1209
      %v1423 = vpop.f32.mrb[0].mxu0
      %v1424 = vadd.f32 0.0, %v1423
      %v1425 = vpop.f32.mrb[0].mxu0
      %v1426 = vpop.f32.mrb[0].mxu0
      %v1427 = vadd.f32 0.0, %v1426
      %v1428 = vpop.f32.mrb[0].mxu0
      %1429 = vmatprep.mubr.bf16.mxu0 0
      %1430 = vmatmul.mubr.bf16.gmra.mrb[0].mxu0 %v1212
      %v1431 = vpop.f32.mrb[0].mxu0
      %v1432 = vadd.f32 0.0, %v1431
      %v1433 = vpop.f32.mrb[0].mxu0
      %v1434 = vpop.f32.mrb[0].mxu0
      %v1435 = vadd.f32 0.0, %v1434
      %v1436 = vpop.f32.mrb[0].mxu0
      %1437 = vmatprep.mubr.bf16.mxu0 0
      %1438 = vmatmul.mubr.bf16.gmra.mrb[0].mxu0 %v1215
      %v1439 = vpop.f32.mrb[0].mxu0
      %v1440 = vadd.f32 0.0, %v1439
      %v1441 = vpop.f32.mrb[0].mxu0
      %v1442 = vpop.f32.mrb[0].mxu0
      %v1443 = vadd.f32 0.0, %v1442
      %v1444 = vpop.f32.mrb[0].mxu0
      %1445 = vmatprep.mubr.bf16.mxu0 0
      %1446 = vmatmul.mubr.bf16.gmra.mrb[0].mxu0 %v1218
      %v1447 = vpop.f32.mrb[0].mxu0
      %v1448 = vadd.f32 0.0, %v1447
      %v1449 = vpop.f32.mrb[0].mxu0
      %v1450 = vpop.f32.mrb[0].mxu0
      %v1451 = vadd.f32 0.0, %v1450
      %v1452 = vpop.f32.mrb[0].mxu0
      %1453 = vmatprep.mubr.bf16.mxu0 0
      %1454 = vmatmul.mubr.bf16.gmra.mrb[0].mxu0 %v1221
      %v1455 = vpop.f32.mrb[0].mxu0
      %v1456 = vadd.f32 0.0, %v1455
      %v1457 = vpop.f32.mrb[0].mxu0
      %v1458 = vpop.f32.mrb[0].mxu0
      %v1459 = vadd.f32 0.0, %v1458
      %v1460 = vpop.f32.mrb[0].mxu0
      %1461 = vmatprep.mubr.bf16.mxu0 0
      %1462 = vmatmul.mubr.bf16.gmra.mrb[0].mxu0 %v1224
      %v1463 = vpop.f32.mrb[0].mxu0
      %v1464 = vadd.f32 0.0, %v1463
      %v1465 = vpop.f32.mrb[0].mxu0
      %v1466 = vpop.f32.mrb[0].mxu0
      %v1467 = vadd.f32 0.0, %v1466
      %v1468 = vpop.f32.mrb[0].mxu0
      %1469 = vmatprep.mubr.bf16.mxu0 0
      %1470 = vmatmul.mubr.bf16.gmra.mrb[0].mxu0 %v1227
      %v1471 = vpop.f32.mrb[0].mxu0
      %v1472 = vadd.f32 0.0, %v1471
      %v1473 = vpop.f32.mrb[0].mxu0
      %v1474 = vpop.f32.mrb[0].mxu0
      %v1475 = vadd.f32 0.0, %v1474
      %v1476 = vpop.f32.mrb[0].mxu0
      %1477 = vmatprep.mubr.bf16.mxu0 0
      %1478 = vmatmul.mubr.bf16.gmra.mrb[0].mxu0 %v1230
      %v1479 = vpop.f32.mrb[0].mxu0
      %v1480 = vadd.f32 0.0, %v1479
      %v1481 = vpop.f32.mrb[0].mxu0
      %v1482 = vpop.f32.mrb[0].mxu0
      %v1483 = vadd.f32 0.0, %v1482
      %v1484 = vpop.f32.mrb[0].mxu0
      %1485 = vmatprep.mubr.bf16.mxu0 0
      %1486 = vmatmul.mubr.bf16.gmra.mrb[0].mxu0 %v1233
      %v1487 = vpop.f32.mrb[0].mxu0
      %v1488 = vadd.f32 0.0, %v1487
      %v1489 = vpop.f32.mrb[0].mxu0
      %v1490 = vpop.f32.mrb[0].mxu0
      %v1491 = vadd.f32 0.0, %v1490
      %v1492 = vpop.f32.mrb[0].mxu0
      %1493 = vdwg.mxu0
      %v1494 = vadd.f32 %v1001, %v1352
      %v1495 = vadd.f32 %v1004, %v1355
      %v1496 = vadd.f32 %v1009, %v1360
      %v1497 = vadd.f32 %v1012, %v1363
      %v1498 = vadd.f32 %v1017, %v1368
      %v1499 = vadd.f32 %v1020, %v1371
      %v1500 = vadd.f32 %v1025, %v1376
      %v1501 = vadd.f32 %v1028, %v1379
      %v1502 = vadd.f32 %v1033, %v1384
      %v1503 = vadd.f32 %v1036, %v1387
      %v1504 = vadd.f32 %v1041, %v1392
      %v1505 = vadd.f32 %v1044, %v1395
      %v1506 = vadd.f32 %v1049, %v1400
      %v1507 = vadd.f32 %v1052, %v1403
      %v1508 = vadd.f32 %v1057, %v1408
      %v1509 = vadd.f32 %v1060, %v1411
      %v1510 = vadd.f32 %v1065, %v1416
      %v1511 = vadd.f32 %v1068, %v1419
      %v1512 = vadd.f32 %v1073, %v1424
      %v1513 = vadd.f32 %v1076, %v1427
      %v1514 = vadd.f32 %v1081, %v1432
      %v1515 = vadd.f32 %v1084, %v1435
      %v1516 = vadd.f32 %v1089, %v1440
      %v1517 = vadd.f32 %v1092, %v1443
      %v1518 = vadd.f32 %v1097, %v1448
      %v1519 = vadd.f32 %v1100, %v1451
      %v1520 = vadd.f32 %v1105, %v1456
      %v1521 = vadd.f32 %v1108, %v1459
      %v1522 = vadd.f32 %v1113, %v1464
      %v1523 = vadd.f32 %v1116, %v1467
      %v1524 = vadd.f32 %v1121, %v1472
      %v1525 = vadd.f32 %v1124, %v1475
      %v1526 = vadd.f32 %v1129, %v1480
      %v1527 = vadd.f32 %v1132, %v1483
      %v1528 = vadd.f32 %v1137, %v1488
      %v1529 = vadd.f32 %v1140, %v1491
      %s1530 = scalar_lea.vmem %s1, 192
      %v1531 = vld [vmem:[%s1530] sm:$0xf]
      %v1532 = vld [vmem:[%s1530 + $0x4] sm:$0xf]
      %v1533 = vld [vmem:[%s1530 + $0x8] sm:$0xf]
      %v1534 = vld [vmem:[%s1530 + $0xc] sm:$0xf]
      %v1535 = vld [vmem:[%s1530 + $0x10] sm:$0xf]
      %v1536 = vld [vmem:[%s1530 + $0x14] sm:$0xf]
      %v1537 = vld [vmem:[%s1530 + $0x18] sm:$0xf]
      %v1538 = vld [vmem:[%s1530 + $0x1c] sm:$0xf]
      %v1539 = vld [vmem:[%s1530 + $0x20] sm:$0xf]
      %v1540 = vld [vmem:[%s1530 + $0x24] sm:$0xf]
      %v1541 = vld [vmem:[%s1530 + $0x28] sm:$0xf]
      %v1542 = vld [vmem:[%s1530 + $0x2c] sm:$0xf]
      %v1543 = vld [vmem:[%s1530 + $0x30] sm:$0xf]
      %v1544 = vld [vmem:[%s1530 + $0x34] sm:$0xf]
      %v1545 = vld [vmem:[%s1530 + $0x38] sm:$0xf]
      %v1546 = vld [vmem:[%s1530 + $0x3c] sm:$0xf]
      %v1563 = vunpack.c.l.b16 %v1531
      %v1564 = vunpack.c.l.b16 %v1532
      %v1565 = vunpack.c.l.b16 %v1533
      %v1566 = vunpack.c.l.b16 %v1534
      %v1567 = vunpack.c.l.b16 %v1535
      %v1568 = vunpack.c.l.b16 %v1536
      %v1569 = vunpack.c.l.b16 %v1537
      %v1570 = vunpack.c.l.b16 %v1538
      %v1571 = vunpack.c.l.b16 %v1539
      %v1572 = vunpack.c.l.b16 %v1540
      %v1573 = vunpack.c.l.b16 %v1541
      %v1574 = vunpack.c.l.b16 %v1542
      %v1575 = vunpack.c.l.b16 %v1543
      %v1576 = vunpack.c.l.b16 %v1544
      %v1577 = vunpack.c.l.b16 %v1545
      %v1578 = vunpack.c.l.b16 %v1546
      %v1579 = vpack.c.b16 %v1564, %v1563
      %v1580 = vpack.c.b16 %v1566, %v1565
      %v1581 = vpack.c.b16 %v1568, %v1567
      %v1582 = vpack.c.b16 %v1570, %v1569
      %v1583 = vpack.c.b16 %v1572, %v1571
      %v1584 = vpack.c.b16 %v1574, %v1573
      %v1585 = vpack.c.b16 %v1576, %v1575
      %v1586 = vpack.c.b16 %v1578, %v1577
      %1595 = vmatprep.subr.bf16.mxu0 0
      %1596 = vmatpush1.bf16.msra.mxu0 %v1579
      %1597 = vmatprep.subr.bf16.mxu0 0
      %1598 = vmatpush1.bf16.msra.mxu0 %v1580
      %1599 = vmatprep.subr.bf16.mxu0 0
      %1600 = vmatpush1.bf16.msra.mxu0 %v1581
      %1601 = vmatprep.subr.bf16.mxu0 0
      %1602 = vmatpush1.bf16.msra.mxu0 %v1582
      %1603 = vmatprep.subr.bf16.mxu0 0
      %1604 = vmatpush1.bf16.msra.mxu0 %v1583
      %1605 = vmatprep.subr.bf16.mxu0 0
      %1606 = vmatpush1.bf16.msra.mxu0 %v1584
      %1607 = vmatprep.subr.bf16.mxu0 0
      %1608 = vmatpush1.bf16.msra.mxu0 %v1585
      %1609 = vmatprep.subr.bf16.mxu0 0
      %1610 = vmatpush1.bf16.msra.mxu0 %v1586
      %1611 = vmatprep.subr.bf16.mxu0 0
      %1612 = vmatpush1.bf16.msra.mxu0 0
      %1613 = vmatprep.subr.bf16.mxu0 0
      %1614 = vmatpush1.bf16.msra.mxu0 0
      %1615 = vmatprep.subr.bf16.mxu0 0
      %1616 = vmatpush1.bf16.msra.mxu0 0
      %1617 = vmatprep.subr.bf16.mxu0 0
      %1618 = vmatpush1.bf16.msra.mxu0 0
      %1619 = vmatprep.subr.bf16.mxu0 0
      %1620 = vmatpush1.bf16.msra.mxu0 0
      %1621 = vmatprep.subr.bf16.mxu0 0
      %1622 = vmatpush1.bf16.msra.mxu0 0
      %1623 = vmatprep.subr.bf16.mxu0 0
      %1624 = vmatpush1.bf16.msra.mxu0 0
      %1625 = vmatprep.subr.bf16.mxu0 0
      %1626 = vmatpush1.bf16.msra.mxu0 0
      %1627 = vmatprep.mubr.bf16.mxu0 0
      %1628 = vmatmul.mubr.bf16.gmra.mrb[0].mxu0 %v387
      %v1629 = vpop.f32.mrb[0].mxu0
      %v1630 = vadd.f32 0.0, %v1629
      %v1631 = vpop.f32.mrb[0].mxu0
      %v1632 = vpop.f32.mrb[0].mxu0
      %v1633 = vadd.f32 0.0, %v1632
      %v1634 = vpop.f32.mrb[0].mxu0
      %1635 = vmatprep.mubr.bf16.mxu0 0
      %1636 = vmatmul.mubr.bf16.gmra.mrb[0].mxu0 %v389
      %v1637 = vpop.f32.mrb[0].mxu0
      %v1638 = vadd.f32 0.0, %v1637
      %v1639 = vpop.f32.mrb[0].mxu0
      %v1640 = vpop.f32.mrb[0].mxu0
      %v1641 = vadd.f32 0.0, %v1640
      %v1642 = vpop.f32.mrb[0].mxu0
      %1643 = vmatprep.mubr.bf16.mxu0 0
      %1644 = vmatmul.mubr.bf16.gmra.mrb[0].mxu0 %v391
      %v1645 = vpop.f32.mrb[0].mxu0
      %v1646 = vadd.f32 0.0, %v1645
      %v1647 = vpop.f32.mrb[0].mxu0
      %v1648 = vpop.f32.mrb[0].mxu0
      %v1649 = vadd.f32 0.0, %v1648
      %v1650 = vpop.f32.mrb[0].mxu0
      %1651 = vmatprep.mubr.bf16.mxu0 0
      %1652 = vmatmul.mubr.bf16.gmra.mrb[0].mxu0 %v393
      %v1653 = vpop.f32.mrb[0].mxu0
      %v1654 = vadd.f32 0.0, %v1653
      %v1655 = vpop.f32.mrb[0].mxu0
      %v1656 = vpop.f32.mrb[0].mxu0
      %v1657 = vadd.f32 0.0, %v1656
      %v1658 = vpop.f32.mrb[0].mxu0
      %1659 = vmatprep.mubr.bf16.mxu0 0
      %1660 = vmatmul.mubr.bf16.gmra.mrb[0].mxu0 %v395
      %v1661 = vpop.f32.mrb[0].mxu0
      %v1662 = vadd.f32 0.0, %v1661
      %v1663 = vpop.f32.mrb[0].mxu0
      %v1664 = vpop.f32.mrb[0].mxu0
      %v1665 = vadd.f32 0.0, %v1664
      %v1666 = vpop.f32.mrb[0].mxu0
      %1667 = vmatprep.mubr.bf16.mxu0 0
      %1668 = vmatmul.mubr.bf16.gmra.mrb[0].mxu0 %v397
      %v1669 = vpop.f32.mrb[0].mxu0
      %v1670 = vadd.f32 0.0, %v1669
      %v1671 = vpop.f32.mrb[0].mxu0
      %v1672 = vpop.f32.mrb[0].mxu0
      %v1673 = vadd.f32 0.0, %v1672
      %v1674 = vpop.f32.mrb[0].mxu0
      %1675 = vmatprep.mubr.bf16.mxu0 0
      %1676 = vmatmul.mubr.bf16.gmra.mrb[0].mxu0 %v399
      %v1677 = vpop.f32.mrb[0].mxu0
      %v1678 = vadd.f32 0.0, %v1677
      %v1679 = vpop.f32.mrb[0].mxu0
      %v1680 = vpop.f32.mrb[0].mxu0
      %v1681 = vadd.f32 0.0, %v1680
      %v1682 = vpop.f32.mrb[0].mxu0
      %1683 = vmatprep.mubr.bf16.mxu0 0
      %1684 = vmatmul.mubr.bf16.gmra.mrb[0].mxu0 %v401
      %v1685 = vpop.f32.mrb[0].mxu0
      %v1686 = vadd.f32 0.0, %v1685
      %v1687 = vpop.f32.mrb[0].mxu0
      %v1688 = vpop.f32.mrb[0].mxu0
      %v1689 = vadd.f32 0.0, %v1688
      %v1690 = vpop.f32.mrb[0].mxu0
      %1691 = vmatprep.mubr.bf16.mxu0 0
      %1692 = vmatmul.mubr.bf16.gmra.mrb[0].mxu0 %v403
      %v1693 = vpop.f32.mrb[0].mxu0
      %v1694 = vadd.f32 0.0, %v1693
      %v1695 = vpop.f32.mrb[0].mxu0
      %v1696 = vpop.f32.mrb[0].mxu0
      %v1697 = vadd.f32 0.0, %v1696
      %v1698 = vpop.f32.mrb[0].mxu0
      %1699 = vmatprep.mubr.bf16.mxu0 0
      %1700 = vmatmul.mubr.bf16.gmra.mrb[0].mxu0 %v405
      %v1701 = vpop.f32.mrb[0].mxu0
      %v1702 = vadd.f32 0.0, %v1701
      %v1703 = vpop.f32.mrb[0].mxu0
      %v1704 = vpop.f32.mrb[0].mxu0
      %v1705 = vadd.f32 0.0, %v1704
      %v1706 = vpop.f32.mrb[0].mxu0
      %1707 = vmatprep.mubr.bf16.mxu0 0
      %1708 = vmatmul.mubr.bf16.gmra.mrb[0].mxu0 %v407
      %v1709 = vpop.f32.mrb[0].mxu0
      %v1710 = vadd.f32 0.0, %v1709
      %v1711 = vpop.f32.mrb[0].mxu0
      %v1712 = vpop.f32.mrb[0].mxu0
      %v1713 = vadd.f32 0.0, %v1712
      %v1714 = vpop.f32.mrb[0].mxu0
      %1715 = vmatprep.mubr.bf16.mxu0 0
      %1716 = vmatmul.mubr.bf16.gmra.mrb[0].mxu0 %v409
      %v1717 = vpop.f32.mrb[0].mxu0
      %v1718 = vadd.f32 0.0, %v1717
      %v1719 = vpop.f32.mrb[0].mxu0
      %v1720 = vpop.f32.mrb[0].mxu0
      %v1721 = vadd.f32 0.0, %v1720
      %v1722 = vpop.f32.mrb[0].mxu0
      %1723 = vmatprep.mubr.bf16.mxu0 0
      %1724 = vmatmul.mubr.bf16.gmra.mrb[0].mxu0 %v411
      %v1725 = vpop.f32.mrb[0].mxu0
      %v1726 = vadd.f32 0.0, %v1725
      %v1727 = vpop.f32.mrb[0].mxu0
      %v1728 = vpop.f32.mrb[0].mxu0
      %v1729 = vadd.f32 0.0, %v1728
      %v1730 = vpop.f32.mrb[0].mxu0
      %1731 = vmatprep.mubr.bf16.mxu0 0
      %1732 = vmatmul.mubr.bf16.gmra.mrb[0].mxu0 %v413
      %v1733 = vpop.f32.mrb[0].mxu0
      %v1734 = vadd.f32 0.0, %v1733
      %v1735 = vpop.f32.mrb[0].mxu0
      %v1736 = vpop.f32.mrb[0].mxu0
      %v1737 = vadd.f32 0.0, %v1736
      %v1738 = vpop.f32.mrb[0].mxu0
      %1739 = vmatprep.mubr.bf16.mxu0 0
      %1740 = vmatmul.mubr.bf16.gmra.mrb[0].mxu0 %v415
      %v1741 = vpop.f32.mrb[0].mxu0
      %v1742 = vadd.f32 0.0, %v1741
      %v1743 = vpop.f32.mrb[0].mxu0
      %v1744 = vpop.f32.mrb[0].mxu0
      %v1745 = vadd.f32 0.0, %v1744
      %v1746 = vpop.f32.mrb[0].mxu0
      %1747 = vmatprep.mubr.bf16.mxu0 0
      %1748 = vmatmul.mubr.bf16.gmra.mrb[0].mxu0 %v417
      %v1749 = vpop.f32.mrb[0].mxu0
      %v1750 = vadd.f32 0.0, %v1749
      %v1751 = vpop.f32.mrb[0].mxu0
      %v1752 = vpop.f32.mrb[0].mxu0
      %v1753 = vadd.f32 0.0, %v1752
      %v1754 = vpop.f32.mrb[0].mxu0
      %1755 = vmatprep.mubr.bf16.mxu0 0
      %1756 = vmatmul.mubr.bf16.gmra.mrb[0].mxu0 %v419
      %v1757 = vpop.f32.mrb[0].mxu0
      %v1758 = vadd.f32 0.0, %v1757
      %v1759 = vpop.f32.mrb[0].mxu0
      %v1760 = vpop.f32.mrb[0].mxu0
      %v1761 = vadd.f32 0.0, %v1760
      %v1762 = vpop.f32.mrb[0].mxu0
      %1763 = vmatprep.mubr.bf16.mxu0 0
      %1764 = vmatmul.mubr.bf16.gmra.mrb[0].mxu0 %v421
      %v1765 = vpop.f32.mrb[0].mxu0
      %v1766 = vadd.f32 0.0, %v1765
      %v1767 = vpop.f32.mrb[0].mxu0
      %v1768 = vpop.f32.mrb[0].mxu0
      %v1769 = vadd.f32 0.0, %v1768
      %v1770 = vpop.f32.mrb[0].mxu0
      %1771 = vdwg.mxu0
      %v1772 = vadd.f32 %v1494, %v1630
      %v1773 = vadd.f32 %v1495, %v1633
      %v1774 = vadd.f32 %v1496, %v1638
      %v1775 = vadd.f32 %v1497, %v1641
      %v1776 = vadd.f32 %v1498, %v1646
      %v1777 = vadd.f32 %v1499, %v1649
      %v1778 = vadd.f32 %v1500, %v1654
      %v1779 = vadd.f32 %v1501, %v1657
      %v1780 = vadd.f32 %v1502, %v1662
      %v1781 = vadd.f32 %v1503, %v1665
      %v1782 = vadd.f32 %v1504, %v1670
      %v1783 = vadd.f32 %v1505, %v1673
      %v1784 = vadd.f32 %v1506, %v1678
      %v1785 = vadd.f32 %v1507, %v1681
      %v1786 = vadd.f32 %v1508, %v1686
      %v1787 = vadd.f32 %v1509, %v1689
      %v1788 = vadd.f32 %v1510, %v1694
      %v1789 = vadd.f32 %v1511, %v1697
      %v1790 = vadd.f32 %v1512, %v1702
      %v1791 = vadd.f32 %v1513, %v1705
      %v1792 = vadd.f32 %v1514, %v1710
      %v1793 = vadd.f32 %v1515, %v1713
      %v1794 = vadd.f32 %v1516, %v1718
      %v1795 = vadd.f32 %v1517, %v1721
      %v1796 = vadd.f32 %v1518, %v1726
      %v1797 = vadd.f32 %v1519, %v1729
      %v1798 = vadd.f32 %v1520, %v1734
      %v1799 = vadd.f32 %v1521, %v1737
      %v1800 = vadd.f32 %v1522, %v1742
      %v1801 = vadd.f32 %v1523, %v1745
      %v1802 = vadd.f32 %v1524, %v1750
      %v1803 = vadd.f32 %v1525, %v1753
      %v1804 = vadd.f32 %v1526, %v1758
      %v1805 = vadd.f32 %v1527, %v1761
      %v1806 = vadd.f32 %v1528, %v1766
      %v1807 = vadd.f32 %v1529, %v1769
      %v1809 = vshrl.u32 %v421, 16
      %v1811 = vshll.u32 %v421, 16
      %v1813 = vrot.slane %v1811, 1
      %v1814 = vor.u32 %v1809, %v1813
      %v1816 = vshll.u32 %v422, 16
      %v1818 = vrot.slane %v1816, 1
      %v1819 = vsel %vm441, %v1814, %v1818
      %s1821 = scalar_lea.vmem %s1, 256
      %v1822 = vld [vmem:[%s1821] sm:$0xf]
      %v1823 = vld [vmem:[%s1821 + $0x4] sm:$0xf]
      %v1824 = vld [vmem:[%s1821 + $0x8] sm:$0xf]
      %v1825 = vld [vmem:[%s1821 + $0xc] sm:$0xf]
      %v1826 = vld [vmem:[%s1821 + $0x10] sm:$0xf]
      %v1827 = vld [vmem:[%s1821 + $0x14] sm:$0xf]
      %v1828 = vld [vmem:[%s1821 + $0x18] sm:$0xf]
      %v1829 = vld [vmem:[%s1821 + $0x1c] sm:$0xf]
      %v1830 = vld [vmem:[%s1821 + $0x20] sm:$0xf]
      %v1831 = vld [vmem:[%s1821 + $0x24] sm:$0xf]
      %v1832 = vld [vmem:[%s1821 + $0x28] sm:$0xf]
      %v1833 = vld [vmem:[%s1821 + $0x2c] sm:$0xf]
      %v1834 = vld [vmem:[%s1821 + $0x30] sm:$0xf]
      %v1835 = vld [vmem:[%s1821 + $0x34] sm:$0xf]
      %v1836 = vld [vmem:[%s1821 + $0x38] sm:$0xf]
      %v1837 = vld [vmem:[%s1821 + $0x3c] sm:$0xf]
      %v1854 = vunpack.c.l.b16 %v1822
      %v1855 = vunpack.c.l.b16 %v1823
      %v1856 = vunpack.c.l.b16 %v1824
      %v1857 = vunpack.c.l.b16 %v1825
      %v1858 = vunpack.c.l.b16 %v1826
      %v1859 = vunpack.c.l.b16 %v1827
      %v1860 = vunpack.c.l.b16 %v1828
      %v1861 = vunpack.c.l.b16 %v1829
      %v1862 = vunpack.c.l.b16 %v1830
      %v1863 = vunpack.c.l.b16 %v1831
      %v1864 = vunpack.c.l.b16 %v1832
      %v1865 = vunpack.c.l.b16 %v1833
      %v1866 = vunpack.c.l.b16 %v1834
      %v1867 = vunpack.c.l.b16 %v1835
      %v1868 = vunpack.c.l.b16 %v1836
      %v1869 = vunpack.c.l.b16 %v1837
      %v1870 = vpack.c.b16 %v1855, %v1854
      %v1871 = vpack.c.b16 %v1857, %v1856
      %v1872 = vpack.c.b16 %v1859, %v1858
      %v1873 = vpack.c.b16 %v1861, %v1860
      %v1874 = vpack.c.b16 %v1863, %v1862
      %v1875 = vpack.c.b16 %v1865, %v1864
      %v1876 = vpack.c.b16 %v1867, %v1866
      %v1877 = vpack.c.b16 %v1869, %v1868
      %1886 = vmatprep.subr.bf16.mxu0 0
      %1887 = vmatpush1.bf16.msra.mxu0 %v1870
      %1888 = vmatprep.subr.bf16.mxu0 0
      %1889 = vmatpush1.bf16.msra.mxu0 %v1871
      %1890 = vmatprep.subr.bf16.mxu0 0
      %1891 = vmatpush1.bf16.msra.mxu0 %v1872
      %1892 = vmatprep.subr.bf16.mxu0 0
      %1893 = vmatpush1.bf16.msra.mxu0 %v1873
      %1894 = vmatprep.subr.bf16.mxu0 0
      %1895 = vmatpush1.bf16.msra.mxu0 %v1874
      %1896 = vmatprep.subr.bf16.mxu0 0
      %1897 = vmatpush1.bf16.msra.mxu0 %v1875
      %1898 = vmatprep.subr.bf16.mxu0 0
      %1899 = vmatpush1.bf16.msra.mxu0 %v1876
      %1900 = vmatprep.subr.bf16.mxu0 0
      %1901 = vmatpush1.bf16.msra.mxu0 %v1877
      %1902 = vmatprep.subr.bf16.mxu0 0
      %1903 = vmatpush1.bf16.msra.mxu0 0
      %1904 = vmatprep.subr.bf16.mxu0 0
      %1905 = vmatpush1.bf16.msra.mxu0 0
      %1906 = vmatprep.subr.bf16.mxu0 0
      %1907 = vmatpush1.bf16.msra.mxu0 0
      %1908 = vmatprep.subr.bf16.mxu0 0
      %1909 = vmatpush1.bf16.msra.mxu0 0
      %1910 = vmatprep.subr.bf16.mxu0 0
      %1911 = vmatpush1.bf16.msra.mxu0 0
      %1912 = vmatprep.subr.bf16.mxu0 0
      %1913 = vmatpush1.bf16.msra.mxu0 0
      %1914 = vmatprep.subr.bf16.mxu0 0
      %1915 = vmatpush1.bf16.msra.mxu0 0
      %1916 = vmatprep.subr.bf16.mxu0 0
      %1917 = vmatpush1.bf16.msra.mxu0 0
      %1918 = vmatprep.mubr.bf16.mxu0 0
      %1919 = vmatmul.mubr.bf16.gmra.mrb[0].mxu0 %v465
      %v1920 = vpop.f32.mrb[0].mxu0
      %v1921 = vadd.f32 0.0, %v1920
      %v1922 = vpop.f32.mrb[0].mxu0
      %v1923 = vpop.f32.mrb[0].mxu0
      %v1924 = vadd.f32 0.0, %v1923
      %v1925 = vpop.f32.mrb[0].mxu0
      %1926 = vmatprep.mubr.bf16.mxu0 0
      %1927 = vmatmul.mubr.bf16.gmra.mrb[0].mxu0 %v477
      %v1928 = vpop.f32.mrb[0].mxu0
      %v1929 = vadd.f32 0.0, %v1928
      %v1930 = vpop.f32.mrb[0].mxu0
      %v1931 = vpop.f32.mrb[0].mxu0
      %v1932 = vadd.f32 0.0, %v1931
      %v1933 = vpop.f32.mrb[0].mxu0
      %1934 = vmatprep.mubr.bf16.mxu0 0
      %1935 = vmatmul.mubr.bf16.gmra.mrb[0].mxu0 %v489
      %v1936 = vpop.f32.mrb[0].mxu0
      %v1937 = vadd.f32 0.0, %v1936
      %v1938 = vpop.f32.mrb[0].mxu0
      %v1939 = vpop.f32.mrb[0].mxu0
      %v1940 = vadd.f32 0.0, %v1939
      %v1941 = vpop.f32.mrb[0].mxu0
      %1942 = vmatprep.mubr.bf16.mxu0 0
      %1943 = vmatmul.mubr.bf16.gmra.mrb[0].mxu0 %v501
      %v1944 = vpop.f32.mrb[0].mxu0
      %v1945 = vadd.f32 0.0, %v1944
      %v1946 = vpop.f32.mrb[0].mxu0
      %v1947 = vpop.f32.mrb[0].mxu0
      %v1948 = vadd.f32 0.0, %v1947
      %v1949 = vpop.f32.mrb[0].mxu0
      %1950 = vmatprep.mubr.bf16.mxu0 0
      %1951 = vmatmul.mubr.bf16.gmra.mrb[0].mxu0 %v513
      %v1952 = vpop.f32.mrb[0].mxu0
      %v1953 = vadd.f32 0.0, %v1952
      %v1954 = vpop.f32.mrb[0].mxu0
      %v1955 = vpop.f32.mrb[0].mxu0
      %v1956 = vadd.f32 0.0, %v1955
      %v1957 = vpop.f32.mrb[0].mxu0
      %1958 = vmatprep.mubr.bf16.mxu0 0
      %1959 = vmatmul.mubr.bf16.gmra.mrb[0].mxu0 %v525
      %v1960 = vpop.f32.mrb[0].mxu0
      %v1961 = vadd.f32 0.0, %v1960
      %v1962 = vpop.f32.mrb[0].mxu0
      %v1963 = vpop.f32.mrb[0].mxu0
      %v1964 = vadd.f32 0.0, %v1963
      %v1965 = vpop.f32.mrb[0].mxu0
      %1966 = vmatprep.mubr.bf16.mxu0 0
      %1967 = vmatmul.mubr.bf16.gmra.mrb[0].mxu0 %v537
      %v1968 = vpop.f32.mrb[0].mxu0
      %v1969 = vadd.f32 0.0, %v1968
      %v1970 = vpop.f32.mrb[0].mxu0
      %v1971 = vpop.f32.mrb[0].mxu0
      %v1972 = vadd.f32 0.0, %v1971
      %v1973 = vpop.f32.mrb[0].mxu0
      %1974 = vmatprep.mubr.bf16.mxu0 0
      %1975 = vmatmul.mubr.bf16.gmra.mrb[0].mxu0 %v549
      %v1976 = vpop.f32.mrb[0].mxu0
      %v1977 = vadd.f32 0.0, %v1976
      %v1978 = vpop.f32.mrb[0].mxu0
      %v1979 = vpop.f32.mrb[0].mxu0
      %v1980 = vadd.f32 0.0, %v1979
      %v1981 = vpop.f32.mrb[0].mxu0
      %1982 = vmatprep.mubr.bf16.mxu0 0
      %1983 = vmatmul.mubr.bf16.gmra.mrb[0].mxu0 %v561
      %v1984 = vpop.f32.mrb[0].mxu0
      %v1985 = vadd.f32 0.0, %v1984
      %v1986 = vpop.f32.mrb[0].mxu0
      %v1987 = vpop.f32.mrb[0].mxu0
      %v1988 = vadd.f32 0.0, %v1987
      %v1989 = vpop.f32.mrb[0].mxu0
      %1990 = vmatprep.mubr.bf16.mxu0 0
      %1991 = vmatmul.mubr.bf16.gmra.mrb[0].mxu0 %v573
      %v1992 = vpop.f32.mrb[0].mxu0
      %v1993 = vadd.f32 0.0, %v1992
      %v1994 = vpop.f32.mrb[0].mxu0
      %v1995 = vpop.f32.mrb[0].mxu0
      %v1996 = vadd.f32 0.0, %v1995
      %v1997 = vpop.f32.mrb[0].mxu0
      %1998 = vmatprep.mubr.bf16.mxu0 0
      %1999 = vmatmul.mubr.bf16.gmra.mrb[0].mxu0 %v585
      %v2000 = vpop.f32.mrb[0].mxu0
      %v2001 = vadd.f32 0.0, %v2000
      %v2002 = vpop.f32.mrb[0].mxu0
      %v2003 = vpop.f32.mrb[0].mxu0
      %v2004 = vadd.f32 0.0, %v2003
      %v2005 = vpop.f32.mrb[0].mxu0
      %2006 = vmatprep.mubr.bf16.mxu0 0
      %2007 = vmatmul.mubr.bf16.gmra.mrb[0].mxu0 %v597
      %v2008 = vpop.f32.mrb[0].mxu0
      %v2009 = vadd.f32 0.0, %v2008
      %v2010 = vpop.f32.mrb[0].mxu0
      %v2011 = vpop.f32.mrb[0].mxu0
      %v2012 = vadd.f32 0.0, %v2011
      %v2013 = vpop.f32.mrb[0].mxu0
      %2014 = vmatprep.mubr.bf16.mxu0 0
      %2015 = vmatmul.mubr.bf16.gmra.mrb[0].mxu0 %v609
      %v2016 = vpop.f32.mrb[0].mxu0
      %v2017 = vadd.f32 0.0, %v2016
      %v2018 = vpop.f32.mrb[0].mxu0
      %v2019 = vpop.f32.mrb[0].mxu0
      %v2020 = vadd.f32 0.0, %v2019
      %v2021 = vpop.f32.mrb[0].mxu0
      %2022 = vmatprep.mubr.bf16.mxu0 0
      %2023 = vmatmul.mubr.bf16.gmra.mrb[0].mxu0 %v621
      %v2024 = vpop.f32.mrb[0].mxu0
      %v2025 = vadd.f32 0.0, %v2024
      %v2026 = vpop.f32.mrb[0].mxu0
      %v2027 = vpop.f32.mrb[0].mxu0
      %v2028 = vadd.f32 0.0, %v2027
      %v2029 = vpop.f32.mrb[0].mxu0
      %2030 = vmatprep.mubr.bf16.mxu0 0
      %2031 = vmatmul.mubr.bf16.gmra.mrb[0].mxu0 %v633
      %v2032 = vpop.f32.mrb[0].mxu0
      %v2033 = vadd.f32 0.0, %v2032
      %v2034 = vpop.f32.mrb[0].mxu0
      %v2035 = vpop.f32.mrb[0].mxu0
      %v2036 = vadd.f32 0.0, %v2035
      %v2037 = vpop.f32.mrb[0].mxu0
      %2038 = vmatprep.mubr.bf16.mxu0 0
      %2039 = vmatmul.mubr.bf16.gmra.mrb[0].mxu0 %v645
      %v2040 = vpop.f32.mrb[0].mxu0
      %v2041 = vadd.f32 0.0, %v2040
      %v2042 = vpop.f32.mrb[0].mxu0
      %v2043 = vpop.f32.mrb[0].mxu0
      %v2044 = vadd.f32 0.0, %v2043
      %v2045 = vpop.f32.mrb[0].mxu0
      %2046 = vmatprep.mubr.bf16.mxu0 0
      %2047 = vmatmul.mubr.bf16.gmra.mrb[0].mxu0 %v657
      %v2048 = vpop.f32.mrb[0].mxu0
      %v2049 = vadd.f32 0.0, %v2048
      %v2050 = vpop.f32.mrb[0].mxu0
      %v2051 = vpop.f32.mrb[0].mxu0
      %v2052 = vadd.f32 0.0, %v2051
      %v2053 = vpop.f32.mrb[0].mxu0
      %2054 = vmatprep.mubr.bf16.mxu0 0
      %2055 = vmatmul.mubr.bf16.gmra.mrb[0].mxu0 %v1819
      %v2056 = vpop.f32.mrb[0].mxu0
      %v2057 = vadd.f32 0.0, %v2056
      %v2058 = vpop.f32.mrb[0].mxu0
      %v2059 = vpop.f32.mrb[0].mxu0
      %v2060 = vadd.f32 0.0, %v2059
      %v2061 = vpop.f32.mrb[0].mxu0
      %2062 = vdwg.mxu0
      %v2063 = vadd.f32 %v1772, %v1921
      %v2064 = vadd.f32 %v1773, %v1924
      %v2065 = vadd.f32 %v1774, %v1929
      %v2066 = vadd.f32 %v1775, %v1932
      %v2067 = vadd.f32 %v1776, %v1937
      %v2068 = vadd.f32 %v1777, %v1940
      %v2069 = vadd.f32 %v1778, %v1945
      %v2070 = vadd.f32 %v1779, %v1948
      %v2071 = vadd.f32 %v1780, %v1953
      %v2072 = vadd.f32 %v1781, %v1956
      %v2073 = vadd.f32 %v1782, %v1961
      %v2074 = vadd.f32 %v1783, %v1964
      %v2075 = vadd.f32 %v1784, %v1969
      %v2076 = vadd.f32 %v1785, %v1972
      %v2077 = vadd.f32 %v1786, %v1977
      %v2078 = vadd.f32 %v1787, %v1980
      %v2079 = vadd.f32 %v1788, %v1985
      %v2080 = vadd.f32 %v1789, %v1988
      %v2081 = vadd.f32 %v1790, %v1993
      %v2082 = vadd.f32 %v1791, %v1996
      %v2083 = vadd.f32 %v1792, %v2001
      %v2084 = vadd.f32 %v1793, %v2004
      %v2085 = vadd.f32 %v1794, %v2009
      %v2086 = vadd.f32 %v1795, %v2012
      %v2087 = vadd.f32 %v1796, %v2017
      %v2088 = vadd.f32 %v1797, %v2020
      %v2089 = vadd.f32 %v1798, %v2025
      %v2090 = vadd.f32 %v1799, %v2028
      %v2091 = vadd.f32 %v1800, %v2033
      %v2092 = vadd.f32 %v1801, %v2036
      %v2093 = vadd.f32 %v1802, %v2041
      %v2094 = vadd.f32 %v1803, %v2044
      %v2095 = vadd.f32 %v1804, %v2049
      %v2096 = vadd.f32 %v1805, %v2052
      %v2097 = vadd.f32 %v1806, %v2057
      %v2098 = vadd.f32 %v1807, %v2060
      %v2101 = vrot.slane %v421, 1
      %v2102 = vrot.slane %v422, 1
      %v2103 = vsel %vm1179, %v2101, %v2102
      %s2105 = scalar_lea.vmem %s1, 320
      %v2106 = vld [vmem:[%s2105] sm:$0xf]
      %v2107 = vld [vmem:[%s2105 + $0x4] sm:$0xf]
      %v2108 = vld [vmem:[%s2105 + $0x8] sm:$0xf]
      %v2109 = vld [vmem:[%s2105 + $0xc] sm:$0xf]
      %v2110 = vld [vmem:[%s2105 + $0x10] sm:$0xf]
      %v2111 = vld [vmem:[%s2105 + $0x14] sm:$0xf]
      %v2112 = vld [vmem:[%s2105 + $0x18] sm:$0xf]
      %v2113 = vld [vmem:[%s2105 + $0x1c] sm:$0xf]
      %v2114 = vld [vmem:[%s2105 + $0x20] sm:$0xf]
      %v2115 = vld [vmem:[%s2105 + $0x24] sm:$0xf]
      %v2116 = vld [vmem:[%s2105 + $0x28] sm:$0xf]
      %v2117 = vld [vmem:[%s2105 + $0x2c] sm:$0xf]
      %v2118 = vld [vmem:[%s2105 + $0x30] sm:$0xf]
      %v2119 = vld [vmem:[%s2105 + $0x34] sm:$0xf]
      %v2120 = vld [vmem:[%s2105 + $0x38] sm:$0xf]
      %v2121 = vld [vmem:[%s2105 + $0x3c] sm:$0xf]
      %v2138 = vunpack.c.l.b16 %v2106
      %v2139 = vunpack.c.l.b16 %v2107
      %v2140 = vunpack.c.l.b16 %v2108
      %v2141 = vunpack.c.l.b16 %v2109
      %v2142 = vunpack.c.l.b16 %v2110
      %v2143 = vunpack.c.l.b16 %v2111
      %v2144 = vunpack.c.l.b16 %v2112
      %v2145 = vunpack.c.l.b16 %v2113
      %v2146 = vunpack.c.l.b16 %v2114
      %v2147 = vunpack.c.l.b16 %v2115
      %v2148 = vunpack.c.l.b16 %v2116
      %v2149 = vunpack.c.l.b16 %v2117
      %v2150 = vunpack.c.l.b16 %v2118
      %v2151 = vunpack.c.l.b16 %v2119
      %v2152 = vunpack.c.l.b16 %v2120
      %v2153 = vunpack.c.l.b16 %v2121
      %v2154 = vpack.c.b16 %v2139, %v2138
      %v2155 = vpack.c.b16 %v2141, %v2140
      %v2156 = vpack.c.b16 %v2143, %v2142
      %v2157 = vpack.c.b16 %v2145, %v2144
      %v2158 = vpack.c.b16 %v2147, %v2146
      %v2159 = vpack.c.b16 %v2149, %v2148
      %v2160 = vpack.c.b16 %v2151, %v2150
      %v2161 = vpack.c.b16 %v2153, %v2152
      %2170 = vmatprep.subr.bf16.mxu0 0
      %2171 = vmatpush1.bf16.msra.mxu0 %v2154
      %2172 = vmatprep.subr.bf16.mxu0 0
      %2173 = vmatpush1.bf16.msra.mxu0 %v2155
      %2174 = vmatprep.subr.bf16.mxu0 0
      %2175 = vmatpush1.bf16.msra.mxu0 %v2156
      %2176 = vmatprep.subr.bf16.mxu0 0
      %2177 = vmatpush1.bf16.msra.mxu0 %v2157
      %2178 = vmatprep.subr.bf16.mxu0 0
      %2179 = vmatpush1.bf16.msra.mxu0 %v2158
      %2180 = vmatprep.subr.bf16.mxu0 0
      %2181 = vmatpush1.bf16.msra.mxu0 %v2159
      %2182 = vmatprep.subr.bf16.mxu0 0
      %2183 = vmatpush1.bf16.msra.mxu0 %v2160
      %2184 = vmatprep.subr.bf16.mxu0 0
      %2185 = vmatpush1.bf16.msra.mxu0 %v2161
      %2186 = vmatprep.subr.bf16.mxu0 0
      %2187 = vmatpush1.bf16.msra.mxu0 0
      %2188 = vmatprep.subr.bf16.mxu0 0
      %2189 = vmatpush1.bf16.msra.mxu0 0
      %2190 = vmatprep.subr.bf16.mxu0 0
      %2191 = vmatpush1.bf16.msra.mxu0 0
      %2192 = vmatprep.subr.bf16.mxu0 0
      %2193 = vmatpush1.bf16.msra.mxu0 0
      %2194 = vmatprep.subr.bf16.mxu0 0
      %2195 = vmatpush1.bf16.msra.mxu0 0
      %2196 = vmatprep.subr.bf16.mxu0 0
      %2197 = vmatpush1.bf16.msra.mxu0 0
      %2198 = vmatprep.subr.bf16.mxu0 0
      %2199 = vmatpush1.bf16.msra.mxu0 0
      %2200 = vmatprep.subr.bf16.mxu0 0
      %2201 = vmatpush1.bf16.msra.mxu0 0
      %2202 = vmatprep.mubr.bf16.mxu0 0
      %2203 = vmatmul.mubr.bf16.gmra.mrb[0].mxu0 %v1185
      %v2204 = vpop.f32.mrb[0].mxu0
      %v2205 = vadd.f32 0.0, %v2204
      %v2206 = vpop.f32.mrb[0].mxu0
      %v2207 = vpop.f32.mrb[0].mxu0
      %v2208 = vadd.f32 0.0, %v2207
      %v2209 = vpop.f32.mrb[0].mxu0
      %2210 = vmatprep.mubr.bf16.mxu0 0
      %2211 = vmatmul.mubr.bf16.gmra.mrb[0].mxu0 %v1188
      %v2212 = vpop.f32.mrb[0].mxu0
      %v2213 = vadd.f32 0.0, %v2212
      %v2214 = vpop.f32.mrb[0].mxu0
      %v2215 = vpop.f32.mrb[0].mxu0
      %v2216 = vadd.f32 0.0, %v2215
      %v2217 = vpop.f32.mrb[0].mxu0
      %2218 = vmatprep.mubr.bf16.mxu0 0
      %2219 = vmatmul.mubr.bf16.gmra.mrb[0].mxu0 %v1191
      %v2220 = vpop.f32.mrb[0].mxu0
      %v2221 = vadd.f32 0.0, %v2220
      %v2222 = vpop.f32.mrb[0].mxu0
      %v2223 = vpop.f32.mrb[0].mxu0
      %v2224 = vadd.f32 0.0, %v2223
      %v2225 = vpop.f32.mrb[0].mxu0
      %2226 = vmatprep.mubr.bf16.mxu0 0
      %2227 = vmatmul.mubr.bf16.gmra.mrb[0].mxu0 %v1194
      %v2228 = vpop.f32.mrb[0].mxu0
      %v2229 = vadd.f32 0.0, %v2228
      %v2230 = vpop.f32.mrb[0].mxu0
      %v2231 = vpop.f32.mrb[0].mxu0
      %v2232 = vadd.f32 0.0, %v2231
      %v2233 = vpop.f32.mrb[0].mxu0
      %2234 = vmatprep.mubr.bf16.mxu0 0
      %2235 = vmatmul.mubr.bf16.gmra.mrb[0].mxu0 %v1197
      %v2236 = vpop.f32.mrb[0].mxu0
      %v2237 = vadd.f32 0.0, %v2236
      %v2238 = vpop.f32.mrb[0].mxu0
      %v2239 = vpop.f32.mrb[0].mxu0
      %v2240 = vadd.f32 0.0, %v2239
      %v2241 = vpop.f32.mrb[0].mxu0
      %2242 = vmatprep.mubr.bf16.mxu0 0
      %2243 = vmatmul.mubr.bf16.gmra.mrb[0].mxu0 %v1200
      %v2244 = vpop.f32.mrb[0].mxu0
      %v2245 = vadd.f32 0.0, %v2244
      %v2246 = vpop.f32.mrb[0].mxu0
      %v2247 = vpop.f32.mrb[0].mxu0
      %v2248 = vadd.f32 0.0, %v2247
      %v2249 = vpop.f32.mrb[0].mxu0
      %2250 = vmatprep.mubr.bf16.mxu0 0
      %2251 = vmatmul.mubr.bf16.gmra.mrb[0].mxu0 %v1203
      %v2252 = vpop.f32.mrb[0].mxu0
      %v2253 = vadd.f32 0.0, %v2252
      %v2254 = vpop.f32.mrb[0].mxu0
      %v2255 = vpop.f32.mrb[0].mxu0
      %v2256 = vadd.f32 0.0, %v2255
      %v2257 = vpop.f32.mrb[0].mxu0
      %2258 = vmatprep.mubr.bf16.mxu0 0
      %2259 = vmatmul.mubr.bf16.gmra.mrb[0].mxu0 %v1206
      %v2260 = vpop.f32.mrb[0].mxu0
      %v2261 = vadd.f32 0.0, %v2260
      %v2262 = vpop.f32.mrb[0].mxu0
      %v2263 = vpop.f32.mrb[0].mxu0
      %v2264 = vadd.f32 0.0, %v2263
      %v2265 = vpop.f32.mrb[0].mxu0
      %2266 = vmatprep.mubr.bf16.mxu0 0
      %2267 = vmatmul.mubr.bf16.gmra.mrb[0].mxu0 %v1209
      %v2268 = vpop.f32.mrb[0].mxu0
      %v2269 = vadd.f32 0.0, %v2268
      %v2270 = vpop.f32.mrb[0].mxu0
      %v2271 = vpop.f32.mrb[0].mxu0
      %v2272 = vadd.f32 0.0, %v2271
      %v2273 = vpop.f32.mrb[0].mxu0
      %2274 = vmatprep.mubr.bf16.mxu0 0
      %2275 = vmatmul.mubr.bf16.gmra.mrb[0].mxu0 %v1212
      %v2276 = vpop.f32.mrb[0].mxu0
      %v2277 = vadd.f32 0.0, %v2276
      %v2278 = vpop.f32.mrb[0].mxu0
      %v2279 = vpop.f32.mrb[0].mxu0
      %v2280 = vadd.f32 0.0, %v2279
      %v2281 = vpop.f32.mrb[0].mxu0
      %2282 = vmatprep.mubr.bf16.mxu0 0
      %2283 = vmatmul.mubr.bf16.gmra.mrb[0].mxu0 %v1215
      %v2284 = vpop.f32.mrb[0].mxu0
      %v2285 = vadd.f32 0.0, %v2284
      %v2286 = vpop.f32.mrb[0].mxu0
      %v2287 = vpop.f32.mrb[0].mxu0
      %v2288 = vadd.f32 0.0, %v2287
      %v2289 = vpop.f32.mrb[0].mxu0
      %2290 = vmatprep.mubr.bf16.mxu0 0
      %2291 = vmatmul.mubr.bf16.gmra.mrb[0].mxu0 %v1218
      %v2292 = vpop.f32.mrb[0].mxu0
      %v2293 = vadd.f32 0.0, %v2292
      %v2294 = vpop.f32.mrb[0].mxu0
      %v2295 = vpop.f32.mrb[0].mxu0
      %v2296 = vadd.f32 0.0, %v2295
      %v2297 = vpop.f32.mrb[0].mxu0
      %2298 = vmatprep.mubr.bf16.mxu0 0
      %2299 = vmatmul.mubr.bf16.gmra.mrb[0].mxu0 %v1221
      %v2300 = vpop.f32.mrb[0].mxu0
      %v2301 = vadd.f32 0.0, %v2300
      %v2302 = vpop.f32.mrb[0].mxu0
      %v2303 = vpop.f32.mrb[0].mxu0
      %v2304 = vadd.f32 0.0, %v2303
      %v2305 = vpop.f32.mrb[0].mxu0
      %2306 = vmatprep.mubr.bf16.mxu0 0
      %2307 = vmatmul.mubr.bf16.gmra.mrb[0].mxu0 %v1224
      %v2308 = vpop.f32.mrb[0].mxu0
      %v2309 = vadd.f32 0.0, %v2308
      %v2310 = vpop.f32.mrb[0].mxu0
      %v2311 = vpop.f32.mrb[0].mxu0
      %v2312 = vadd.f32 0.0, %v2311
      %v2313 = vpop.f32.mrb[0].mxu0
      %2314 = vmatprep.mubr.bf16.mxu0 0
      %2315 = vmatmul.mubr.bf16.gmra.mrb[0].mxu0 %v1227
      %v2316 = vpop.f32.mrb[0].mxu0
      %v2317 = vadd.f32 0.0, %v2316
      %v2318 = vpop.f32.mrb[0].mxu0
      %v2319 = vpop.f32.mrb[0].mxu0
      %v2320 = vadd.f32 0.0, %v2319
      %v2321 = vpop.f32.mrb[0].mxu0
      %2322 = vmatprep.mubr.bf16.mxu0 0
      %2323 = vmatmul.mubr.bf16.gmra.mrb[0].mxu0 %v1230
      %v2324 = vpop.f32.mrb[0].mxu0
      %v2325 = vadd.f32 0.0, %v2324
      %v2326 = vpop.f32.mrb[0].mxu0
      %v2327 = vpop.f32.mrb[0].mxu0
      %v2328 = vadd.f32 0.0, %v2327
      %v2329 = vpop.f32.mrb[0].mxu0
      %2330 = vmatprep.mubr.bf16.mxu0 0
      %2331 = vmatmul.mubr.bf16.gmra.mrb[0].mxu0 %v1233
      %v2332 = vpop.f32.mrb[0].mxu0
      %v2333 = vadd.f32 0.0, %v2332
      %v2334 = vpop.f32.mrb[0].mxu0
      %v2335 = vpop.f32.mrb[0].mxu0
      %v2336 = vadd.f32 0.0, %v2335
      %v2337 = vpop.f32.mrb[0].mxu0
      %2338 = vmatprep.mubr.bf16.mxu0 0
      %2339 = vmatmul.mubr.bf16.gmra.mrb[0].mxu0 %v2103
      %v2340 = vpop.f32.mrb[0].mxu0
      %v2341 = vadd.f32 0.0, %v2340
      %v2342 = vpop.f32.mrb[0].mxu0
      %v2343 = vpop.f32.mrb[0].mxu0
      %v2344 = vadd.f32 0.0, %v2343
      %v2345 = vpop.f32.mrb[0].mxu0
      %2346 = vdwg.mxu0
      %v2347 = vadd.f32 %v2063, %v2205
      %v2348 = vadd.f32 %v2064, %v2208
      %v2349 = vadd.f32 %v2065, %v2213
      %v2350 = vadd.f32 %v2066, %v2216
      %v2351 = vadd.f32 %v2067, %v2221
      %v2352 = vadd.f32 %v2068, %v2224
      %v2353 = vadd.f32 %v2069, %v2229
      %v2354 = vadd.f32 %v2070, %v2232
      %v2355 = vadd.f32 %v2071, %v2237
      %v2356 = vadd.f32 %v2072, %v2240
      %v2357 = vadd.f32 %v2073, %v2245
      %v2358 = vadd.f32 %v2074, %v2248
      %v2359 = vadd.f32 %v2075, %v2253
      %v2360 = vadd.f32 %v2076, %v2256
      %v2361 = vadd.f32 %v2077, %v2261
      %v2362 = vadd.f32 %v2078, %v2264
      %v2363 = vadd.f32 %v2079, %v2269
      %v2364 = vadd.f32 %v2080, %v2272
      %v2365 = vadd.f32 %v2081, %v2277
      %v2366 = vadd.f32 %v2082, %v2280
      %v2367 = vadd.f32 %v2083, %v2285
      %v2368 = vadd.f32 %v2084, %v2288
      %v2369 = vadd.f32 %v2085, %v2293
      %v2370 = vadd.f32 %v2086, %v2296
      %v2371 = vadd.f32 %v2087, %v2301
      %v2372 = vadd.f32 %v2088, %v2304
      %v2373 = vadd.f32 %v2089, %v2309
      %v2374 = vadd.f32 %v2090, %v2312
      %v2375 = vadd.f32 %v2091, %v2317
      %v2376 = vadd.f32 %v2092, %v2320
      %v2377 = vadd.f32 %v2093, %v2325
      %v2378 = vadd.f32 %v2094, %v2328
      %v2379 = vadd.f32 %v2095, %v2333
      %v2380 = vadd.f32 %v2096, %v2336
      %v2381 = vadd.f32 %v2097, %v2341
      %v2382 = vadd.f32 %v2098, %v2344
      %s2383 = scalar_lea.vmem %s1, 384
      %v2384 = vld [vmem:[%s2383] sm:$0xf]
      %v2385 = vld [vmem:[%s2383 + $0x4] sm:$0xf]
      %v2386 = vld [vmem:[%s2383 + $0x8] sm:$0xf]
      %v2387 = vld [vmem:[%s2383 + $0xc] sm:$0xf]
      %v2388 = vld [vmem:[%s2383 + $0x10] sm:$0xf]
      %v2389 = vld [vmem:[%s2383 + $0x14] sm:$0xf]
      %v2390 = vld [vmem:[%s2383 + $0x18] sm:$0xf]
      %v2391 = vld [vmem:[%s2383 + $0x1c] sm:$0xf]
      %v2392 = vld [vmem:[%s2383 + $0x20] sm:$0xf]
      %v2393 = vld [vmem:[%s2383 + $0x24] sm:$0xf]
      %v2394 = vld [vmem:[%s2383 + $0x28] sm:$0xf]
      %v2395 = vld [vmem:[%s2383 + $0x2c] sm:$0xf]
      %v2396 = vld [vmem:[%s2383 + $0x30] sm:$0xf]
      %v2397 = vld [vmem:[%s2383 + $0x34] sm:$0xf]
      %v2398 = vld [vmem:[%s2383 + $0x38] sm:$0xf]
      %v2399 = vld [vmem:[%s2383 + $0x3c] sm:$0xf]
      %v2416 = vunpack.c.l.b16 %v2384
      %v2417 = vunpack.c.l.b16 %v2385
      %v2418 = vunpack.c.l.b16 %v2386
      %v2419 = vunpack.c.l.b16 %v2387
      %v2420 = vunpack.c.l.b16 %v2388
      %v2421 = vunpack.c.l.b16 %v2389
      %v2422 = vunpack.c.l.b16 %v2390
      %v2423 = vunpack.c.l.b16 %v2391
      %v2424 = vunpack.c.l.b16 %v2392
      %v2425 = vunpack.c.l.b16 %v2393
      %v2426 = vunpack.c.l.b16 %v2394
      %v2427 = vunpack.c.l.b16 %v2395
      %v2428 = vunpack.c.l.b16 %v2396
      %v2429 = vunpack.c.l.b16 %v2397
      %v2430 = vunpack.c.l.b16 %v2398
      %v2431 = vunpack.c.l.b16 %v2399
      %v2432 = vpack.c.b16 %v2417, %v2416
      %v2433 = vpack.c.b16 %v2419, %v2418
      %v2434 = vpack.c.b16 %v2421, %v2420
      %v2435 = vpack.c.b16 %v2423, %v2422
      %v2436 = vpack.c.b16 %v2425, %v2424
      %v2437 = vpack.c.b16 %v2427, %v2426
      %v2438 = vpack.c.b16 %v2429, %v2428
      %v2439 = vpack.c.b16 %v2431, %v2430
      %2448 = vmatprep.subr.bf16.mxu0 0
      %2449 = vmatpush1.bf16.msra.mxu0 %v2432
      %2450 = vmatprep.subr.bf16.mxu0 0
      %2451 = vmatpush1.bf16.msra.mxu0 %v2433
      %2452 = vmatprep.subr.bf16.mxu0 0
      %2453 = vmatpush1.bf16.msra.mxu0 %v2434
      %2454 = vmatprep.subr.bf16.mxu0 0
      %2455 = vmatpush1.bf16.msra.mxu0 %v2435
      %2456 = vmatprep.subr.bf16.mxu0 0
      %2457 = vmatpush1.bf16.msra.mxu0 %v2436
      %2458 = vmatprep.subr.bf16.mxu0 0
      %2459 = vmatpush1.bf16.msra.mxu0 %v2437
      %2460 = vmatprep.subr.bf16.mxu0 0
      %2461 = vmatpush1.bf16.msra.mxu0 %v2438
      %2462 = vmatprep.subr.bf16.mxu0 0
      %2463 = vmatpush1.bf16.msra.mxu0 %v2439
      %2464 = vmatprep.subr.bf16.mxu0 0
      %2465 = vmatpush1.bf16.msra.mxu0 0
      %2466 = vmatprep.subr.bf16.mxu0 0
      %2467 = vmatpush1.bf16.msra.mxu0 0
      %2468 = vmatprep.subr.bf16.mxu0 0
      %2469 = vmatpush1.bf16.msra.mxu0 0
      %2470 = vmatprep.subr.bf16.mxu0 0
      %2471 = vmatpush1.bf16.msra.mxu0 0
      %2472 = vmatprep.subr.bf16.mxu0 0
      %2473 = vmatpush1.bf16.msra.mxu0 0
      %2474 = vmatprep.subr.bf16.mxu0 0
      %2475 = vmatpush1.bf16.msra.mxu0 0
      %2476 = vmatprep.subr.bf16.mxu0 0
      %2477 = vmatpush1.bf16.msra.mxu0 0
      %2478 = vmatprep.subr.bf16.mxu0 0
      %2479 = vmatpush1.bf16.msra.mxu0 0
      %2480 = vmatprep.mubr.bf16.mxu0 0
      %2481 = vmatmul.mubr.bf16.gmra.mrb[0].mxu0 %v389
      %v2482 = vpop.f32.mrb[0].mxu0
      %v2483 = vadd.f32 0.0, %v2482
      %v2484 = vpop.f32.mrb[0].mxu0
      %v2485 = vpop.f32.mrb[0].mxu0
      %v2486 = vadd.f32 0.0, %v2485
      %v2487 = vpop.f32.mrb[0].mxu0
      %2488 = vmatprep.mubr.bf16.mxu0 0
      %2489 = vmatmul.mubr.bf16.gmra.mrb[0].mxu0 %v391
      %v2490 = vpop.f32.mrb[0].mxu0
      %v2491 = vadd.f32 0.0, %v2490
      %v2492 = vpop.f32.mrb[0].mxu0
      %v2493 = vpop.f32.mrb[0].mxu0
      %v2494 = vadd.f32 0.0, %v2493
      %v2495 = vpop.f32.mrb[0].mxu0
      %2496 = vmatprep.mubr.bf16.mxu0 0
      %2497 = vmatmul.mubr.bf16.gmra.mrb[0].mxu0 %v393
      %v2498 = vpop.f32.mrb[0].mxu0
      %v2499 = vadd.f32 0.0, %v2498
      %v2500 = vpop.f32.mrb[0].mxu0
      %v2501 = vpop.f32.mrb[0].mxu0
      %v2502 = vadd.f32 0.0, %v2501
      %v2503 = vpop.f32.mrb[0].mxu0
      %2504 = vmatprep.mubr.bf16.mxu0 0
      %2505 = vmatmul.mubr.bf16.gmra.mrb[0].mxu0 %v395
      %v2506 = vpop.f32.mrb[0].mxu0
      %v2507 = vadd.f32 0.0, %v2506
      %v2508 = vpop.f32.mrb[0].mxu0
      %v2509 = vpop.f32.mrb[0].mxu0
      %v2510 = vadd.f32 0.0, %v2509
      %v2511 = vpop.f32.mrb[0].mxu0
      %2512 = vmatprep.mubr.bf16.mxu0 0
      %2513 = vmatmul.mubr.bf16.gmra.mrb[0].mxu0 %v397
      %v2514 = vpop.f32.mrb[0].mxu0
      %v2515 = vadd.f32 0.0, %v2514
      %v2516 = vpop.f32.mrb[0].mxu0
      %v2517 = vpop.f32.mrb[0].mxu0
      %v2518 = vadd.f32 0.0, %v2517
      %v2519 = vpop.f32.mrb[0].mxu0
      %2520 = vmatprep.mubr.bf16.mxu0 0
      %2521 = vmatmul.mubr.bf16.gmra.mrb[0].mxu0 %v399
      %v2522 = vpop.f32.mrb[0].mxu0
      %v2523 = vadd.f32 0.0, %v2522
      %v2524 = vpop.f32.mrb[0].mxu0
      %v2525 = vpop.f32.mrb[0].mxu0
      %v2526 = vadd.f32 0.0, %v2525
      %v2527 = vpop.f32.mrb[0].mxu0
      %2528 = vmatprep.mubr.bf16.mxu0 0
      %2529 = vmatmul.mubr.bf16.gmra.mrb[0].mxu0 %v401
      %v2530 = vpop.f32.mrb[0].mxu0
      %v2531 = vadd.f32 0.0, %v2530
      %v2532 = vpop.f32.mrb[0].mxu0
      %v2533 = vpop.f32.mrb[0].mxu0
      %v2534 = vadd.f32 0.0, %v2533
      %v2535 = vpop.f32.mrb[0].mxu0
      %2536 = vmatprep.mubr.bf16.mxu0 0
      %2537 = vmatmul.mubr.bf16.gmra.mrb[0].mxu0 %v403
      %v2538 = vpop.f32.mrb[0].mxu0
      %v2539 = vadd.f32 0.0, %v2538
      %v2540 = vpop.f32.mrb[0].mxu0
      %v2541 = vpop.f32.mrb[0].mxu0
      %v2542 = vadd.f32 0.0, %v2541
      %v2543 = vpop.f32.mrb[0].mxu0
      %2544 = vmatprep.mubr.bf16.mxu0 0
      %2545 = vmatmul.mubr.bf16.gmra.mrb[0].mxu0 %v405
      %v2546 = vpop.f32.mrb[0].mxu0
      %v2547 = vadd.f32 0.0, %v2546
      %v2548 = vpop.f32.mrb[0].mxu0
      %v2549 = vpop.f32.mrb[0].mxu0
      %v2550 = vadd.f32 0.0, %v2549
      %v2551 = vpop.f32.mrb[0].mxu0
      %2552 = vmatprep.mubr.bf16.mxu0 0
      %2553 = vmatmul.mubr.bf16.gmra.mrb[0].mxu0 %v407
      %v2554 = vpop.f32.mrb[0].mxu0
      %v2555 = vadd.f32 0.0, %v2554
      %v2556 = vpop.f32.mrb[0].mxu0
      %v2557 = vpop.f32.mrb[0].mxu0
      %v2558 = vadd.f32 0.0, %v2557
      %v2559 = vpop.f32.mrb[0].mxu0
      %2560 = vmatprep.mubr.bf16.mxu0 0
      %2561 = vmatmul.mubr.bf16.gmra.mrb[0].mxu0 %v409
      %v2562 = vpop.f32.mrb[0].mxu0
      %v2563 = vadd.f32 0.0, %v2562
      %v2564 = vpop.f32.mrb[0].mxu0
      %v2565 = vpop.f32.mrb[0].mxu0
      %v2566 = vadd.f32 0.0, %v2565
      %v2567 = vpop.f32.mrb[0].mxu0
      %2568 = vmatprep.mubr.bf16.mxu0 0
      %2569 = vmatmul.mubr.bf16.gmra.mrb[0].mxu0 %v411
      %v2570 = vpop.f32.mrb[0].mxu0
      %v2571 = vadd.f32 0.0, %v2570
      %v2572 = vpop.f32.mrb[0].mxu0
      %v2573 = vpop.f32.mrb[0].mxu0
      %v2574 = vadd.f32 0.0, %v2573
      %v2575 = vpop.f32.mrb[0].mxu0
      %2576 = vmatprep.mubr.bf16.mxu0 0
      %2577 = vmatmul.mubr.bf16.gmra.mrb[0].mxu0 %v413
      %v2578 = vpop.f32.mrb[0].mxu0
      %v2579 = vadd.f32 0.0, %v2578
      %v2580 = vpop.f32.mrb[0].mxu0
      %v2581 = vpop.f32.mrb[0].mxu0
      %v2582 = vadd.f32 0.0, %v2581
      %v2583 = vpop.f32.mrb[0].mxu0
      %2584 = vmatprep.mubr.bf16.mxu0 0
      %2585 = vmatmul.mubr.bf16.gmra.mrb[0].mxu0 %v415
      %v2586 = vpop.f32.mrb[0].mxu0
      %v2587 = vadd.f32 0.0, %v2586
      %v2588 = vpop.f32.mrb[0].mxu0
      %v2589 = vpop.f32.mrb[0].mxu0
      %v2590 = vadd.f32 0.0, %v2589
      %v2591 = vpop.f32.mrb[0].mxu0
      %2592 = vmatprep.mubr.bf16.mxu0 0
      %2593 = vmatmul.mubr.bf16.gmra.mrb[0].mxu0 %v417
      %v2594 = vpop.f32.mrb[0].mxu0
      %v2595 = vadd.f32 0.0, %v2594
      %v2596 = vpop.f32.mrb[0].mxu0
      %v2597 = vpop.f32.mrb[0].mxu0
      %v2598 = vadd.f32 0.0, %v2597
      %v2599 = vpop.f32.mrb[0].mxu0
      %2600 = vmatprep.mubr.bf16.mxu0 0
      %2601 = vmatmul.mubr.bf16.gmra.mrb[0].mxu0 %v419
      %v2602 = vpop.f32.mrb[0].mxu0
      %v2603 = vadd.f32 0.0, %v2602
      %v2604 = vpop.f32.mrb[0].mxu0
      %v2605 = vpop.f32.mrb[0].mxu0
      %v2606 = vadd.f32 0.0, %v2605
      %v2607 = vpop.f32.mrb[0].mxu0
      %2608 = vmatprep.mubr.bf16.mxu0 0
      %2609 = vmatmul.mubr.bf16.gmra.mrb[0].mxu0 %v421
      %v2610 = vpop.f32.mrb[0].mxu0
      %v2611 = vadd.f32 0.0, %v2610
      %v2612 = vpop.f32.mrb[0].mxu0
      %v2613 = vpop.f32.mrb[0].mxu0
      %v2614 = vadd.f32 0.0, %v2613
      %v2615 = vpop.f32.mrb[0].mxu0
      %2616 = vmatprep.mubr.bf16.mxu0 0
      %2617 = vmatmul.mubr.bf16.gmra.mrb[0].mxu0 %v423
      %v2618 = vpop.f32.mrb[0].mxu0
      %v2619 = vadd.f32 0.0, %v2618
      %v2620 = vpop.f32.mrb[0].mxu0
      %v2621 = vpop.f32.mrb[0].mxu0
      %v2622 = vadd.f32 0.0, %v2621
      %v2623 = vpop.f32.mrb[0].mxu0
      %2624 = vdwg.mxu0
      %v2625 = vadd.f32 %v2347, %v2483
      %v2626 = vadd.f32 %v2348, %v2486
      %v2627 = vadd.f32 %v2349, %v2491
      %v2628 = vadd.f32 %v2350, %v2494
      %v2629 = vadd.f32 %v2351, %v2499
      %v2630 = vadd.f32 %v2352, %v2502
      %v2631 = vadd.f32 %v2353, %v2507
      %v2632 = vadd.f32 %v2354, %v2510
      %v2633 = vadd.f32 %v2355, %v2515
      %v2634 = vadd.f32 %v2356, %v2518
      %v2635 = vadd.f32 %v2357, %v2523
      %v2636 = vadd.f32 %v2358, %v2526
      %v2637 = vadd.f32 %v2359, %v2531
      %v2638 = vadd.f32 %v2360, %v2534
      %v2639 = vadd.f32 %v2361, %v2539
      %v2640 = vadd.f32 %v2362, %v2542
      %v2641 = vadd.f32 %v2363, %v2547
      %v2642 = vadd.f32 %v2364, %v2550
      %v2643 = vadd.f32 %v2365, %v2555
      %v2644 = vadd.f32 %v2366, %v2558
      %v2645 = vadd.f32 %v2367, %v2563
      %v2646 = vadd.f32 %v2368, %v2566
      %v2647 = vadd.f32 %v2369, %v2571
      %v2648 = vadd.f32 %v2370, %v2574
      %v2649 = vadd.f32 %v2371, %v2579
      %v2650 = vadd.f32 %v2372, %v2582
      %v2651 = vadd.f32 %v2373, %v2587
      %v2652 = vadd.f32 %v2374, %v2590
      %v2653 = vadd.f32 %v2375, %v2595
      %v2654 = vadd.f32 %v2376, %v2598
      %v2655 = vadd.f32 %v2377, %v2603
      %v2656 = vadd.f32 %v2378, %v2606
      %v2657 = vadd.f32 %v2379, %v2611
      %v2658 = vadd.f32 %v2380, %v2614
      %v2659 = vadd.f32 %v2381, %v2619
      %v2660 = vadd.f32 %v2382, %v2622
      %v2662 = vshrl.u32 %v423, 16
      %v2664 = vshll.u32 %v423, 16
      %v2666 = vrot.slane %v2664, 1
      %v2667 = vor.u32 %v2662, %v2666
      %v2669 = vshll.u32 %v424, 16
      %v2671 = vrot.slane %v2669, 1
      %v2672 = vsel %vm441, %v2667, %v2671
      %s2674 = scalar_lea.vmem %s1, 448
      %v2675 = vld [vmem:[%s2674] sm:$0xf]
      %v2676 = vld [vmem:[%s2674 + $0x4] sm:$0xf]
      %v2677 = vld [vmem:[%s2674 + $0x8] sm:$0xf]
      %v2678 = vld [vmem:[%s2674 + $0xc] sm:$0xf]
      %v2679 = vld [vmem:[%s2674 + $0x10] sm:$0xf]
      %v2680 = vld [vmem:[%s2674 + $0x14] sm:$0xf]
      %v2681 = vld [vmem:[%s2674 + $0x18] sm:$0xf]
      %v2682 = vld [vmem:[%s2674 + $0x1c] sm:$0xf]
      %v2683 = vld [vmem:[%s2674 + $0x20] sm:$0xf]
      %v2684 = vld [vmem:[%s2674 + $0x24] sm:$0xf]
      %v2685 = vld [vmem:[%s2674 + $0x28] sm:$0xf]
      %v2686 = vld [vmem:[%s2674 + $0x2c] sm:$0xf]
      %v2687 = vld [vmem:[%s2674 + $0x30] sm:$0xf]
      %v2688 = vld [vmem:[%s2674 + $0x34] sm:$0xf]
      %v2689 = vld [vmem:[%s2674 + $0x38] sm:$0xf]
      %v2690 = vld [vmem:[%s2674 + $0x3c] sm:$0xf]
      %v2707 = vunpack.c.l.b16 %v2675
      %v2708 = vunpack.c.l.b16 %v2676
      %v2709 = vunpack.c.l.b16 %v2677
      %v2710 = vunpack.c.l.b16 %v2678
      %v2711 = vunpack.c.l.b16 %v2679
      %v2712 = vunpack.c.l.b16 %v2680
      %v2713 = vunpack.c.l.b16 %v2681
      %v2714 = vunpack.c.l.b16 %v2682
      %v2715 = vunpack.c.l.b16 %v2683
      %v2716 = vunpack.c.l.b16 %v2684
      %v2717 = vunpack.c.l.b16 %v2685
      %v2718 = vunpack.c.l.b16 %v2686
      %v2719 = vunpack.c.l.b16 %v2687
      %v2720 = vunpack.c.l.b16 %v2688
      %v2721 = vunpack.c.l.b16 %v2689
      %v2722 = vunpack.c.l.b16 %v2690
      %v2723 = vpack.c.b16 %v2708, %v2707
      %v2724 = vpack.c.b16 %v2710, %v2709
      %v2725 = vpack.c.b16 %v2712, %v2711
      %v2726 = vpack.c.b16 %v2714, %v2713
      %v2727 = vpack.c.b16 %v2716, %v2715
      %v2728 = vpack.c.b16 %v2718, %v2717
      %v2729 = vpack.c.b16 %v2720, %v2719
      %v2730 = vpack.c.b16 %v2722, %v2721
      %2739 = vmatprep.subr.bf16.mxu0 0
      %2740 = vmatpush1.bf16.msra.mxu0 %v2723
      %2741 = vmatprep.subr.bf16.mxu0 0
      %2742 = vmatpush1.bf16.msra.mxu0 %v2724
      %2743 = vmatprep.subr.bf16.mxu0 0
      %2744 = vmatpush1.bf16.msra.mxu0 %v2725
      %2745 = vmatprep.subr.bf16.mxu0 0
      %2746 = vmatpush1.bf16.msra.mxu0 %v2726
      %2747 = vmatprep.subr.bf16.mxu0 0
      %2748 = vmatpush1.bf16.msra.mxu0 %v2727
      %2749 = vmatprep.subr.bf16.mxu0 0
      %2750 = vmatpush1.bf16.msra.mxu0 %v2728
      %2751 = vmatprep.subr.bf16.mxu0 0
      %2752 = vmatpush1.bf16.msra.mxu0 %v2729
      %2753 = vmatprep.subr.bf16.mxu0 0
      %2754 = vmatpush1.bf16.msra.mxu0 %v2730
      %2755 = vmatprep.subr.bf16.mxu0 0
      %2756 = vmatpush1.bf16.msra.mxu0 0
      %2757 = vmatprep.subr.bf16.mxu0 0
      %2758 = vmatpush1.bf16.msra.mxu0 0
      %2759 = vmatprep.subr.bf16.mxu0 0
      %2760 = vmatpush1.bf16.msra.mxu0 0
      %2761 = vmatprep.subr.bf16.mxu0 0
      %2762 = vmatpush1.bf16.msra.mxu0 0
      %2763 = vmatprep.subr.bf16.mxu0 0
      %2764 = vmatpush1.bf16.msra.mxu0 0
      %2765 = vmatprep.subr.bf16.mxu0 0
      %2766 = vmatpush1.bf16.msra.mxu0 0
      %2767 = vmatprep.subr.bf16.mxu0 0
      %2768 = vmatpush1.bf16.msra.mxu0 0
      %2769 = vmatprep.subr.bf16.mxu0 0
      %2770 = vmatpush1.bf16.msra.mxu0 0
      %2771 = vmatprep.mubr.bf16.mxu0 0
      %2772 = vmatmul.mubr.bf16.gmra.mrb[0].mxu0 %v477
      %v2773 = vpop.f32.mrb[0].mxu0
      %v2774 = vadd.f32 0.0, %v2773
      %v2775 = vpop.f32.mrb[0].mxu0
      %v2776 = vpop.f32.mrb[0].mxu0
      %v2777 = vadd.f32 0.0, %v2776
      %v2778 = vpop.f32.mrb[0].mxu0
      %2779 = vmatprep.mubr.bf16.mxu0 0
      %2780 = vmatmul.mubr.bf16.gmra.mrb[0].mxu0 %v489
      %v2781 = vpop.f32.mrb[0].mxu0
      %v2782 = vadd.f32 0.0, %v2781
      %v2783 = vpop.f32.mrb[0].mxu0
      %v2784 = vpop.f32.mrb[0].mxu0
      %v2785 = vadd.f32 0.0, %v2784
      %v2786 = vpop.f32.mrb[0].mxu0
      %2787 = vmatprep.mubr.bf16.mxu0 0
      %2788 = vmatmul.mubr.bf16.gmra.mrb[0].mxu0 %v501
      %v2789 = vpop.f32.mrb[0].mxu0
      %v2790 = vadd.f32 0.0, %v2789
      %v2791 = vpop.f32.mrb[0].mxu0
      %v2792 = vpop.f32.mrb[0].mxu0
      %v2793 = vadd.f32 0.0, %v2792
      %v2794 = vpop.f32.mrb[0].mxu0
      %2795 = vmatprep.mubr.bf16.mxu0 0
      %2796 = vmatmul.mubr.bf16.gmra.mrb[0].mxu0 %v513
      %v2797 = vpop.f32.mrb[0].mxu0
      %v2798 = vadd.f32 0.0, %v2797
      %v2799 = vpop.f32.mrb[0].mxu0
      %v2800 = vpop.f32.mrb[0].mxu0
      %v2801 = vadd.f32 0.0, %v2800
      %v2802 = vpop.f32.mrb[0].mxu0
      %2803 = vmatprep.mubr.bf16.mxu0 0
      %2804 = vmatmul.mubr.bf16.gmra.mrb[0].mxu0 %v525
      %v2805 = vpop.f32.mrb[0].mxu0
      %v2806 = vadd.f32 0.0, %v2805
      %v2807 = vpop.f32.mrb[0].mxu0
      %v2808 = vpop.f32.mrb[0].mxu0
      %v2809 = vadd.f32 0.0, %v2808
      %v2810 = vpop.f32.mrb[0].mxu0
      %2811 = vmatprep.mubr.bf16.mxu0 0
      %2812 = vmatmul.mubr.bf16.gmra.mrb[0].mxu0 %v537
      %v2813 = vpop.f32.mrb[0].mxu0
      %v2814 = vadd.f32 0.0, %v2813
      %v2815 = vpop.f32.mrb[0].mxu0
      %v2816 = vpop.f32.mrb[0].mxu0
      %v2817 = vadd.f32 0.0, %v2816
      %v2818 = vpop.f32.mrb[0].mxu0
      %2819 = vmatprep.mubr.bf16.mxu0 0
      %2820 = vmatmul.mubr.bf16.gmra.mrb[0].mxu0 %v549
      %v2821 = vpop.f32.mrb[0].mxu0
      %v2822 = vadd.f32 0.0, %v2821
      %v2823 = vpop.f32.mrb[0].mxu0
      %v2824 = vpop.f32.mrb[0].mxu0
      %v2825 = vadd.f32 0.0, %v2824
      %v2826 = vpop.f32.mrb[0].mxu0
      %2827 = vmatprep.mubr.bf16.mxu0 0
      %2828 = vmatmul.mubr.bf16.gmra.mrb[0].mxu0 %v561
      %v2829 = vpop.f32.mrb[0].mxu0
      %v2830 = vadd.f32 0.0, %v2829
      %v2831 = vpop.f32.mrb[0].mxu0
      %v2832 = vpop.f32.mrb[0].mxu0
      %v2833 = vadd.f32 0.0, %v2832
      %v2834 = vpop.f32.mrb[0].mxu0
      %2835 = vmatprep.mubr.bf16.mxu0 0
      %2836 = vmatmul.mubr.bf16.gmra.mrb[0].mxu0 %v573
      %v2837 = vpop.f32.mrb[0].mxu0
      %v2838 = vadd.f32 0.0, %v2837
      %v2839 = vpop.f32.mrb[0].mxu0
      %v2840 = vpop.f32.mrb[0].mxu0
      %v2841 = vadd.f32 0.0, %v2840
      %v2842 = vpop.f32.mrb[0].mxu0
      %2843 = vmatprep.mubr.bf16.mxu0 0
      %2844 = vmatmul.mubr.bf16.gmra.mrb[0].mxu0 %v585
      %v2845 = vpop.f32.mrb[0].mxu0
      %v2846 = vadd.f32 0.0, %v2845
      %v2847 = vpop.f32.mrb[0].mxu0
      %v2848 = vpop.f32.mrb[0].mxu0
      %v2849 = vadd.f32 0.0, %v2848
      %v2850 = vpop.f32.mrb[0].mxu0
      %2851 = vmatprep.mubr.bf16.mxu0 0
      %2852 = vmatmul.mubr.bf16.gmra.mrb[0].mxu0 %v597
      %v2853 = vpop.f32.mrb[0].mxu0
      %v2854 = vadd.f32 0.0, %v2853
      %v2855 = vpop.f32.mrb[0].mxu0
      %v2856 = vpop.f32.mrb[0].mxu0
      %v2857 = vadd.f32 0.0, %v2856
      %v2858 = vpop.f32.mrb[0].mxu0
      %2859 = vmatprep.mubr.bf16.mxu0 0
      %2860 = vmatmul.mubr.bf16.gmra.mrb[0].mxu0 %v609
      %v2861 = vpop.f32.mrb[0].mxu0
      %v2862 = vadd.f32 0.0, %v2861
      %v2863 = vpop.f32.mrb[0].mxu0
      %v2864 = vpop.f32.mrb[0].mxu0
      %v2865 = vadd.f32 0.0, %v2864
      %v2866 = vpop.f32.mrb[0].mxu0
      %2867 = vmatprep.mubr.bf16.mxu0 0
      %2868 = vmatmul.mubr.bf16.gmra.mrb[0].mxu0 %v621
      %v2869 = vpop.f32.mrb[0].mxu0
      %v2870 = vadd.f32 0.0, %v2869
      %v2871 = vpop.f32.mrb[0].mxu0
      %v2872 = vpop.f32.mrb[0].mxu0
      %v2873 = vadd.f32 0.0, %v2872
      %v2874 = vpop.f32.mrb[0].mxu0
      %2875 = vmatprep.mubr.bf16.mxu0 0
      %2876 = vmatmul.mubr.bf16.gmra.mrb[0].mxu0 %v633
      %v2877 = vpop.f32.mrb[0].mxu0
      %v2878 = vadd.f32 0.0, %v2877
      %v2879 = vpop.f32.mrb[0].mxu0
      %v2880 = vpop.f32.mrb[0].mxu0
      %v2881 = vadd.f32 0.0, %v2880
      %v2882 = vpop.f32.mrb[0].mxu0
      %2883 = vmatprep.mubr.bf16.mxu0 0
      %2884 = vmatmul.mubr.bf16.gmra.mrb[0].mxu0 %v645
      %v2885 = vpop.f32.mrb[0].mxu0
      %v2886 = vadd.f32 0.0, %v2885
      %v2887 = vpop.f32.mrb[0].mxu0
      %v2888 = vpop.f32.mrb[0].mxu0
      %v2889 = vadd.f32 0.0, %v2888
      %v2890 = vpop.f32.mrb[0].mxu0
      %2891 = vmatprep.mubr.bf16.mxu0 0
      %2892 = vmatmul.mubr.bf16.gmra.mrb[0].mxu0 %v657
      %v2893 = vpop.f32.mrb[0].mxu0
      %v2894 = vadd.f32 0.0, %v2893
      %v2895 = vpop.f32.mrb[0].mxu0
      %v2896 = vpop.f32.mrb[0].mxu0
      %v2897 = vadd.f32 0.0, %v2896
      %v2898 = vpop.f32.mrb[0].mxu0
      %2899 = vmatprep.mubr.bf16.mxu0 0
      %2900 = vmatmul.mubr.bf16.gmra.mrb[0].mxu0 %v1819
      %v2901 = vpop.f32.mrb[0].mxu0
      %v2902 = vadd.f32 0.0, %v2901
      %v2903 = vpop.f32.mrb[0].mxu0
      %v2904 = vpop.f32.mrb[0].mxu0
      %v2905 = vadd.f32 0.0, %v2904
      %v2906 = vpop.f32.mrb[0].mxu0
      %2907 = vmatprep.mubr.bf16.mxu0 0
      %2908 = vmatmul.mubr.bf16.gmra.mrb[0].mxu0 %v2672
      %v2909 = vpop.f32.mrb[0].mxu0
      %v2910 = vadd.f32 0.0, %v2909
      %v2911 = vpop.f32.mrb[0].mxu0
      %v2912 = vpop.f32.mrb[0].mxu0
      %v2913 = vadd.f32 0.0, %v2912
      %v2914 = vpop.f32.mrb[0].mxu0
      %2915 = vdwg.mxu0
      %v2916 = vadd.f32 %v2625, %v2774
      %v2917 = vadd.f32 %v2626, %v2777
      %v2918 = vadd.f32 %v2627, %v2782
      %v2919 = vadd.f32 %v2628, %v2785
      %v2920 = vadd.f32 %v2629, %v2790
      %v2921 = vadd.f32 %v2630, %v2793
      %v2922 = vadd.f32 %v2631, %v2798
      %v2923 = vadd.f32 %v2632, %v2801
      %v2924 = vadd.f32 %v2633, %v2806
      %v2925 = vadd.f32 %v2634, %v2809
      %v2926 = vadd.f32 %v2635, %v2814
      %v2927 = vadd.f32 %v2636, %v2817
      %v2928 = vadd.f32 %v2637, %v2822
      %v2929 = vadd.f32 %v2638, %v2825
      %v2930 = vadd.f32 %v2639, %v2830
      %v2931 = vadd.f32 %v2640, %v2833
      %v2932 = vadd.f32 %v2641, %v2838
      %v2933 = vadd.f32 %v2642, %v2841
      %v2934 = vadd.f32 %v2643, %v2846
      %v2935 = vadd.f32 %v2644, %v2849
      %v2936 = vadd.f32 %v2645, %v2854
      %v2937 = vadd.f32 %v2646, %v2857
      %v2938 = vadd.f32 %v2647, %v2862
      %v2939 = vadd.f32 %v2648, %v2865
      %v2940 = vadd.f32 %v2649, %v2870
      %v2941 = vadd.f32 %v2650, %v2873
      %v2942 = vadd.f32 %v2651, %v2878
      %v2943 = vadd.f32 %v2652, %v2881
      %v2944 = vadd.f32 %v2653, %v2886
      %v2945 = vadd.f32 %v2654, %v2889
      %v2946 = vadd.f32 %v2655, %v2894
      %v2947 = vadd.f32 %v2656, %v2897
      %v2948 = vadd.f32 %v2657, %v2902
      %v2949 = vadd.f32 %v2658, %v2905
      %v2950 = vadd.f32 %v2659, %v2910
      %v2951 = vadd.f32 %v2660, %v2913
      %v2954 = vrot.slane %v423, 1
      %v2955 = vrot.slane %v424, 1
      %v2956 = vsel %vm1179, %v2954, %v2955
      %s2958 = scalar_lea.vmem %s1, 512
      %v2959 = vld [vmem:[%s2958] sm:$0xf]
      %v2960 = vld [vmem:[%s2958 + $0x4] sm:$0xf]
      %v2961 = vld [vmem:[%s2958 + $0x8] sm:$0xf]
      %v2962 = vld [vmem:[%s2958 + $0xc] sm:$0xf]
      %v2963 = vld [vmem:[%s2958 + $0x10] sm:$0xf]
      %v2964 = vld [vmem:[%s2958 + $0x14] sm:$0xf]
      %v2965 = vld [vmem:[%s2958 + $0x18] sm:$0xf]
      %v2966 = vld [vmem:[%s2958 + $0x1c] sm:$0xf]
      %v2967 = vld [vmem:[%s2958 + $0x20] sm:$0xf]
      %v2968 = vld [vmem:[%s2958 + $0x24] sm:$0xf]
      %v2969 = vld [vmem:[%s2958 + $0x28] sm:$0xf]
      %v2970 = vld [vmem:[%s2958 + $0x2c] sm:$0xf]
      %v2971 = vld [vmem:[%s2958 + $0x30] sm:$0xf]
      %v2972 = vld [vmem:[%s2958 + $0x34] sm:$0xf]
      %v2973 = vld [vmem:[%s2958 + $0x38] sm:$0xf]
      %v2974 = vld [vmem:[%s2958 + $0x3c] sm:$0xf]
      %v2991 = vunpack.c.l.b16 %v2959
      %v2992 = vunpack.c.l.b16 %v2960
      %v2993 = vunpack.c.l.b16 %v2961
      %v2994 = vunpack.c.l.b16 %v2962
      %v2995 = vunpack.c.l.b16 %v2963
      %v2996 = vunpack.c.l.b16 %v2964
      %v2997 = vunpack.c.l.b16 %v2965
      %v2998 = vunpack.c.l.b16 %v2966
      %v2999 = vunpack.c.l.b16 %v2967
      %v3000 = vunpack.c.l.b16 %v2968
      %v3001 = vunpack.c.l.b16 %v2969
      %v3002 = vunpack.c.l.b16 %v2970
      %v3003 = vunpack.c.l.b16 %v2971
      %v3004 = vunpack.c.l.b16 %v2972
      %v3005 = vunpack.c.l.b16 %v2973
      %v3006 = vunpack.c.l.b16 %v2974
      %v3007 = vpack.c.b16 %v2992, %v2991
      %v3008 = vpack.c.b16 %v2994, %v2993
      %v3009 = vpack.c.b16 %v2996, %v2995
      %v3010 = vpack.c.b16 %v2998, %v2997
      %v3011 = vpack.c.b16 %v3000, %v2999
      %v3012 = vpack.c.b16 %v3002, %v3001
      %v3013 = vpack.c.b16 %v3004, %v3003
      %v3014 = vpack.c.b16 %v3006, %v3005
      %3023 = vmatprep.subr.bf16.mxu0 0
      %3024 = vmatpush1.bf16.msra.mxu0 %v3007
      %3025 = vmatprep.subr.bf16.mxu0 0
      %3026 = vmatpush1.bf16.msra.mxu0 %v3008
      %3027 = vmatprep.subr.bf16.mxu0 0
      %3028 = vmatpush1.bf16.msra.mxu0 %v3009
      %3029 = vmatprep.subr.bf16.mxu0 0
      %3030 = vmatpush1.bf16.msra.mxu0 %v3010
      %3031 = vmatprep.subr.bf16.mxu0 0
      %3032 = vmatpush1.bf16.msra.mxu0 %v3011
      %3033 = vmatprep.subr.bf16.mxu0 0
      %3034 = vmatpush1.bf16.msra.mxu0 %v3012
      %3035 = vmatprep.subr.bf16.mxu0 0
      %3036 = vmatpush1.bf16.msra.mxu0 %v3013
      %3037 = vmatprep.subr.bf16.mxu0 0
      %3038 = vmatpush1.bf16.msra.mxu0 %v3014
      %3039 = vmatprep.subr.bf16.mxu0 0
      %3040 = vmatpush1.bf16.msra.mxu0 0
      %3041 = vmatprep.subr.bf16.mxu0 0
      %3042 = vmatpush1.bf16.msra.mxu0 0
      %3043 = vmatprep.subr.bf16.mxu0 0
      %3044 = vmatpush1.bf16.msra.mxu0 0
      %3045 = vmatprep.subr.bf16.mxu0 0
      %3046 = vmatpush1.bf16.msra.mxu0 0
      %3047 = vmatprep.subr.bf16.mxu0 0
      %3048 = vmatpush1.bf16.msra.mxu0 0
      %3049 = vmatprep.subr.bf16.mxu0 0
      %3050 = vmatpush1.bf16.msra.mxu0 0
      %3051 = vmatprep.subr.bf16.mxu0 0
      %3052 = vmatpush1.bf16.msra.mxu0 0
      %3053 = vmatprep.subr.bf16.mxu0 0
      %3054 = vmatpush1.bf16.msra.mxu0 0
      %3055 = vmatprep.mubr.bf16.mxu0 0
      %3056 = vmatmul.mubr.bf16.gmra.mrb[0].mxu0 %v1188
      %v3057 = vpop.f32.mrb[0].mxu0
      %v3058 = vadd.f32 0.0, %v3057
      %v3059 = vpop.f32.mrb[0].mxu0
      %v3060 = vpop.f32.mrb[0].mxu0
      %v3061 = vadd.f32 0.0, %v3060
      %v3062 = vpop.f32.mrb[0].mxu0
      %3063 = vmatprep.mubr.bf16.mxu0 0
      %3064 = vmatmul.mubr.bf16.gmra.mrb[0].mxu0 %v1191
      %v3065 = vpop.f32.mrb[0].mxu0
      %v3066 = vadd.f32 0.0, %v3065
      %v3067 = vpop.f32.mrb[0].mxu0
      %v3068 = vpop.f32.mrb[0].mxu0
      %v3069 = vadd.f32 0.0, %v3068
      %v3070 = vpop.f32.mrb[0].mxu0
      %3071 = vmatprep.mubr.bf16.mxu0 0
      %3072 = vmatmul.mubr.bf16.gmra.mrb[0].mxu0 %v1194
      %v3073 = vpop.f32.mrb[0].mxu0
      %v3074 = vadd.f32 0.0, %v3073
      %v3075 = vpop.f32.mrb[0].mxu0
      %v3076 = vpop.f32.mrb[0].mxu0
      %v3077 = vadd.f32 0.0, %v3076
      %v3078 = vpop.f32.mrb[0].mxu0
      %3079 = vmatprep.mubr.bf16.mxu0 0
      %3080 = vmatmul.mubr.bf16.gmra.mrb[0].mxu0 %v1197
      %v3081 = vpop.f32.mrb[0].mxu0
      %v3082 = vadd.f32 0.0, %v3081
      %v3083 = vpop.f32.mrb[0].mxu0
      %v3084 = vpop.f32.mrb[0].mxu0
      %v3085 = vadd.f32 0.0, %v3084
      %v3086 = vpop.f32.mrb[0].mxu0
      %3087 = vmatprep.mubr.bf16.mxu0 0
      %3088 = vmatmul.mubr.bf16.gmra.mrb[0].mxu0 %v1200
      %v3089 = vpop.f32.mrb[0].mxu0
      %v3090 = vadd.f32 0.0, %v3089
      %v3091 = vpop.f32.mrb[0].mxu0
      %v3092 = vpop.f32.mrb[0].mxu0
      %v3093 = vadd.f32 0.0, %v3092
      %v3094 = vpop.f32.mrb[0].mxu0
      %3095 = vmatprep.mubr.bf16.mxu0 0
      %3096 = vmatmul.mubr.bf16.gmra.mrb[0].mxu0 %v1203
      %v3097 = vpop.f32.mrb[0].mxu0
      %v3098 = vadd.f32 0.0, %v3097
      %v3099 = vpop.f32.mrb[0].mxu0
      %v3100 = vpop.f32.mrb[0].mxu0
      %v3101 = vadd.f32 0.0, %v3100
      %v3102 = vpop.f32.mrb[0].mxu0
      %3103 = vmatprep.mubr.bf16.mxu0 0
      %3104 = vmatmul.mubr.bf16.gmra.mrb[0].mxu0 %v1206
      %v3105 = vpop.f32.mrb[0].mxu0
      %v3106 = vadd.f32 0.0, %v3105
      %v3107 = vpop.f32.mrb[0].mxu0
      %v3108 = vpop.f32.mrb[0].mxu0
      %v3109 = vadd.f32 0.0, %v3108
      %v3110 = vpop.f32.mrb[0].mxu0
      %3111 = vmatprep.mubr.bf16.mxu0 0
      %3112 = vmatmul.mubr.bf16.gmra.mrb[0].mxu0 %v1209
      %v3113 = vpop.f32.mrb[0].mxu0
      %v3114 = vadd.f32 0.0, %v3113
      %v3115 = vpop.f32.mrb[0].mxu0
      %v3116 = vpop.f32.mrb[0].mxu0
      %v3117 = vadd.f32 0.0, %v3116
      %v3118 = vpop.f32.mrb[0].mxu0
      %3119 = vmatprep.mubr.bf16.mxu0 0
      %3120 = vmatmul.mubr.bf16.gmra.mrb[0].mxu0 %v1212
      %v3121 = vpop.f32.mrb[0].mxu0
      %v3122 = vadd.f32 0.0, %v3121
      %v3123 = vpop.f32.mrb[0].mxu0
      %v3124 = vpop.f32.mrb[0].mxu0
      %v3125 = vadd.f32 0.0, %v3124
      %v3126 = vpop.f32.mrb[0].mxu0
      %3127 = vmatprep.mubr.bf16.mxu0 0
      %3128 = vmatmul.mubr.bf16.gmra.mrb[0].mxu0 %v1215
      %v3129 = vpop.f32.mrb[0].mxu0
      %v3130 = vadd.f32 0.0, %v3129
      %v3131 = vpop.f32.mrb[0].mxu0
      %v3132 = vpop.f32.mrb[0].mxu0
      %v3133 = vadd.f32 0.0, %v3132
      %v3134 = vpop.f32.mrb[0].mxu0
      %3135 = vmatprep.mubr.bf16.mxu0 0
      %3136 = vmatmul.mubr.bf16.gmra.mrb[0].mxu0 %v1218
      %v3137 = vpop.f32.mrb[0].mxu0
      %v3138 = vadd.f32 0.0, %v3137
      %v3139 = vpop.f32.mrb[0].mxu0
      %v3140 = vpop.f32.mrb[0].mxu0
      %v3141 = vadd.f32 0.0, %v3140
      %v3142 = vpop.f32.mrb[0].mxu0
      %3143 = vmatprep.mubr.bf16.mxu0 0
      %3144 = vmatmul.mubr.bf16.gmra.mrb[0].mxu0 %v1221
      %v3145 = vpop.f32.mrb[0].mxu0
      %v3146 = vadd.f32 0.0, %v3145
      %v3147 = vpop.f32.mrb[0].mxu0
      %v3148 = vpop.f32.mrb[0].mxu0
      %v3149 = vadd.f32 0.0, %v3148
      %v3150 = vpop.f32.mrb[0].mxu0
      %3151 = vmatprep.mubr.bf16.mxu0 0
      %3152 = vmatmul.mubr.bf16.gmra.mrb[0].mxu0 %v1224
      %v3153 = vpop.f32.mrb[0].mxu0
      %v3154 = vadd.f32 0.0, %v3153
      %v3155 = vpop.f32.mrb[0].mxu0
      %v3156 = vpop.f32.mrb[0].mxu0
      %v3157 = vadd.f32 0.0, %v3156
      %v3158 = vpop.f32.mrb[0].mxu0
      %3159 = vmatprep.mubr.bf16.mxu0 0
      %3160 = vmatmul.mubr.bf16.gmra.mrb[0].mxu0 %v1227
      %v3161 = vpop.f32.mrb[0].mxu0
      %v3162 = vadd.f32 0.0, %v3161
      %v3163 = vpop.f32.mrb[0].mxu0
      %v3164 = vpop.f32.mrb[0].mxu0
      %v3165 = vadd.f32 0.0, %v3164
      %v3166 = vpop.f32.mrb[0].mxu0
      %3167 = vmatprep.mubr.bf16.mxu0 0
      %3168 = vmatmul.mubr.bf16.gmra.mrb[0].mxu0 %v1230
      %v3169 = vpop.f32.mrb[0].mxu0
      %v3170 = vadd.f32 0.0, %v3169
      %v3171 = vpop.f32.mrb[0].mxu0
      %v3172 = vpop.f32.mrb[0].mxu0
      %v3173 = vadd.f32 0.0, %v3172
      %v3174 = vpop.f32.mrb[0].mxu0
      %3175 = vmatprep.mubr.bf16.mxu0 0
      %3176 = vmatmul.mubr.bf16.gmra.mrb[0].mxu0 %v1233
      %v3177 = vpop.f32.mrb[0].mxu0
      %v3178 = vadd.f32 0.0, %v3177
      %v3179 = vpop.f32.mrb[0].mxu0
      %v3180 = vpop.f32.mrb[0].mxu0
      %v3181 = vadd.f32 0.0, %v3180
      %v3182 = vpop.f32.mrb[0].mxu0
      %3183 = vmatprep.mubr.bf16.mxu0 0
      %3184 = vmatmul.mubr.bf16.gmra.mrb[0].mxu0 %v2103
      %v3185 = vpop.f32.mrb[0].mxu0
      %v3186 = vadd.f32 0.0, %v3185
      %v3187 = vpop.f32.mrb[0].mxu0
      %v3188 = vpop.f32.mrb[0].mxu0
      %v3189 = vadd.f32 0.0, %v3188
      %v3190 = vpop.f32.mrb[0].mxu0
      %3191 = vmatprep.mubr.bf16.mxu0 0
      %3192 = vmatmul.mubr.bf16.gmra.mrb[0].mxu0 %v2956
      %v3193 = vpop.f32.mrb[0].mxu0
      %v3194 = vadd.f32 0.0, %v3193
      %v3195 = vpop.f32.mrb[0].mxu0
      %v3196 = vpop.f32.mrb[0].mxu0
      %v3197 = vadd.f32 0.0, %v3196
      %v3198 = vpop.f32.mrb[0].mxu0
      %3199 = vdwg.mxu0
      %v3200 = vadd.f32 %v2916, %v3058
      %v3201 = vadd.f32 %v2917, %v3061
      %v3202 = vadd.f32 %v2918, %v3066
      %v3203 = vadd.f32 %v2919, %v3069
      %v3204 = vadd.f32 %v2920, %v3074
      %v3205 = vadd.f32 %v2921, %v3077
      %v3206 = vadd.f32 %v2922, %v3082
      %v3207 = vadd.f32 %v2923, %v3085
      %v3208 = vadd.f32 %v2924, %v3090
      %v3209 = vadd.f32 %v2925, %v3093
      %v3210 = vadd.f32 %v2926, %v3098
      %v3211 = vadd.f32 %v2927, %v3101
      %v3212 = vadd.f32 %v2928, %v3106
      %v3213 = vadd.f32 %v2929, %v3109
      %v3214 = vadd.f32 %v2930, %v3114
      %v3215 = vadd.f32 %v2931, %v3117
      %v3216 = vadd.f32 %v2932, %v3122
      %v3217 = vadd.f32 %v2933, %v3125
      %v3218 = vadd.f32 %v2934, %v3130
      %v3219 = vadd.f32 %v2935, %v3133
      %v3220 = vadd.f32 %v2936, %v3138
      %v3221 = vadd.f32 %v2937, %v3141
      %v3222 = vadd.f32 %v2938, %v3146
      %v3223 = vadd.f32 %v2939, %v3149
      %v3224 = vadd.f32 %v2940, %v3154
      %v3225 = vadd.f32 %v2941, %v3157
      %v3226 = vadd.f32 %v2942, %v3162
      %v3227 = vadd.f32 %v2943, %v3165
      %v3228 = vadd.f32 %v2944, %v3170
      %v3229 = vadd.f32 %v2945, %v3173
      %v3230 = vadd.f32 %v2946, %v3178
      %v3231 = vadd.f32 %v2947, %v3181
      %v3232 = vadd.f32 %v2948, %v3186
      %v3233 = vadd.f32 %v2949, %v3189
      %v3234 = vadd.f32 %v2950, %v3194
      %v3235 = vadd.f32 %v2951, %v3197
      %v3236 = vld [vmem:[%s2] sm:$0x1]
      %v3238 = vlaneseq
      %v3239 = vshrl.u32 %v3238, 7
      %v3240 = vsub.s32 0, %v3239
      %v3241 = vrot.slane %v3236, %v3240
      %v3243 = vadd.f32 %v3200, %v3241
      %v3244 = vadd.f32 %v3201, %v3241
      %v3245 = vadd.f32 %v3202, %v3241
      %v3246 = vadd.f32 %v3203, %v3241
      %v3247 = vadd.f32 %v3204, %v3241
      %v3248 = vadd.f32 %v3205, %v3241
      %v3249 = vadd.f32 %v3206, %v3241
      %v3250 = vadd.f32 %v3207, %v3241
      %v3251 = vadd.f32 %v3208, %v3241
      %v3252 = vadd.f32 %v3209, %v3241
      %v3253 = vadd.f32 %v3210, %v3241
      %v3254 = vadd.f32 %v3211, %v3241
      %v3255 = vadd.f32 %v3212, %v3241
      %v3256 = vadd.f32 %v3213, %v3241
      %v3257 = vadd.f32 %v3214, %v3241
      %v3258 = vadd.f32 %v3215, %v3241
      %v3259 = vadd.f32 %v3216, %v3241
      %v3260 = vadd.f32 %v3217, %v3241
      %v3261 = vadd.f32 %v3218, %v3241
      %v3262 = vadd.f32 %v3219, %v3241
      %v3263 = vadd.f32 %v3220, %v3241
      %v3264 = vadd.f32 %v3221, %v3241
      %v3265 = vadd.f32 %v3222, %v3241
      %v3266 = vadd.f32 %v3223, %v3241
      %v3267 = vadd.f32 %v3224, %v3241
      %v3268 = vadd.f32 %v3225, %v3241
      %v3269 = vadd.f32 %v3226, %v3241
      %v3270 = vadd.f32 %v3227, %v3241
      %v3271 = vadd.f32 %v3228, %v3241
      %v3272 = vadd.f32 %v3229, %v3241
      %v3273 = vadd.f32 %v3230, %v3241
      %v3274 = vadd.f32 %v3231, %v3241
      %v3275 = vadd.f32 %v3232, %v3241
      %v3276 = vadd.f32 %v3233, %v3241
      %v3277 = vadd.f32 %v3234, %v3241
      %v3278 = vadd.f32 %v3235, %v3241
      %v3279 = vmax.f32 %v3243, 0.0
      %v3280 = vmax.f32 %v3244, 0.0
      %v3281 = vmax.f32 %v3245, 0.0
      %v3282 = vmax.f32 %v3246, 0.0
      %v3283 = vmax.f32 %v3247, 0.0
      %v3284 = vmax.f32 %v3248, 0.0
      %v3285 = vmax.f32 %v3249, 0.0
      %v3286 = vmax.f32 %v3250, 0.0
      %v3287 = vmax.f32 %v3251, 0.0
      %v3288 = vmax.f32 %v3252, 0.0
      %v3289 = vmax.f32 %v3253, 0.0
      %v3290 = vmax.f32 %v3254, 0.0
      %v3291 = vmax.f32 %v3255, 0.0
      %v3292 = vmax.f32 %v3256, 0.0
      %v3293 = vmax.f32 %v3257, 0.0
      %v3294 = vmax.f32 %v3258, 0.0
      %v3295 = vmax.f32 %v3259, 0.0
      %v3296 = vmax.f32 %v3260, 0.0
      %v3297 = vmax.f32 %v3261, 0.0
      %v3298 = vmax.f32 %v3262, 0.0
      %v3299 = vmax.f32 %v3263, 0.0
      %v3300 = vmax.f32 %v3264, 0.0
      %v3301 = vmax.f32 %v3265, 0.0
      %v3302 = vmax.f32 %v3266, 0.0
      %v3303 = vmax.f32 %v3267, 0.0
      %v3304 = vmax.f32 %v3268, 0.0
      %v3305 = vmax.f32 %v3269, 0.0
      %v3306 = vmax.f32 %v3270, 0.0
      %v3307 = vmax.f32 %v3271, 0.0
      %v3308 = vmax.f32 %v3272, 0.0
      %v3309 = vmax.f32 %v3273, 0.0
      %v3310 = vmax.f32 %v3274, 0.0
      %v3311 = vmax.f32 %v3275, 0.0
      %v3312 = vmax.f32 %v3276, 0.0
      %v3313 = vmax.f32 %v3277, 0.0
      %v3314 = vmax.f32 %v3278, 0.0
      %3315 = vst [vmem:[#allocation2] sm:$0xff] 0
      %3316 = vst [vmem:[#allocation2 + $0x18] sm:$0xff] 0
      %3317 = vst [vmem:[#allocation2 + $0x30] sm:$0xff] 0
      %3318 = vst [vmem:[#allocation2 + $0x48] sm:$0xff] 0
      %3319 = vst [vmem:[#allocation2 + $0x60] sm:$0xff] 0
      %3320 = vst [vmem:[#allocation2 + $0x78] sm:$0xff] 0
      %3321 = vst [vmem:[#allocation2 + $0x90] sm:$0xff] 0
      %3322 = vst [vmem:[#allocation2 + $0xa8] sm:$0xff] 0
      %3323 = vst [vmem:[#allocation2 + $0xc0] sm:$0xff] 0
      %3324 = vst [vmem:[#allocation2 + $0xd8] sm:$0xff] 0
      %3325 = vst [vmem:[#allocation2 + $0xf0] sm:$0xff] 0
      %3326 = vst [vmem:[#allocation2 + $0x108] sm:$0xff] 0
      %3327 = vst [vmem:[#allocation2 + $0x120] sm:$0xff] 0
      %3328 = vst [vmem:[#allocation2 + $0x138] sm:$0xff] 0
      %3329 = vst [vmem:[#allocation2 + $0x150] sm:$0xff] 0
      %3330 = vst [vmem:[#allocation2 + $0x168] sm:$0xff] 0
      %3331 = vst [vmem:[#allocation2 + $0x180] sm:$0xff] 0
      %3332 = vst [vmem:[#allocation2 + $0x198] sm:$0xff] 0
      %3333 = vst [vmem:[#allocation2 + $0x10] sm:$0xff] 0
      %3334 = vst [vmem:[#allocation2 + $0x28] sm:$0xff] 0
      %3335 = vst [vmem:[#allocation2 + $0x40] sm:$0xff] 0
      %3336 = vst [vmem:[#allocation2 + $0x58] sm:$0xff] 0
      %3337 = vst [vmem:[#allocation2 + $0x70] sm:$0xff] 0
      %3338 = vst [vmem:[#allocation2 + $0x88] sm:$0xff] 0
      %3339 = vst [vmem:[#allocation2 + $0xa0] sm:$0xff] 0
      %3340 = vst [vmem:[#allocation2 + $0xb8] sm:$0xff] 0
      %3341 = vst [vmem:[#allocation2 + $0xd0] sm:$0xff] 0
      %3342 = vst [vmem:[#allocation2 + $0xe8] sm:$0xff] 0
      %3343 = vst [vmem:[#allocation2 + $0x100] sm:$0xff] 0
      %3344 = vst [vmem:[#allocation2 + $0x118] sm:$0xff] 0
      %3345 = vst [vmem:[#allocation2 + $0x130] sm:$0xff] 0
      %3346 = vst [vmem:[#allocation2 + $0x148] sm:$0xff] 0
      %3347 = vst [vmem:[#allocation2 + $0x160] sm:$0xff] 0
      %3348 = vst [vmem:[#allocation2 + $0x178] sm:$0xff] 0
      %3349 = vst [vmem:[#allocation2 + $0x190] sm:$0xff] 0
      %3350 = vst [vmem:[#allocation2 + $0x1a8] sm:$0xff] 0
      %v3351 = vpack.c.bf16 %v3280, %v3279
      %v3352 = vpack.c.bf16 %v3282, %v3281
      %v3353 = vpack.c.bf16 %v3284, %v3283
      %v3354 = vpack.c.bf16 %v3286, %v3285
      %v3355 = vpack.c.bf16 %v3288, %v3287
      %v3356 = vpack.c.bf16 %v3290, %v3289
      %v3357 = vpack.c.bf16 %v3292, %v3291
      %v3358 = vpack.c.bf16 %v3294, %v3293
      %v3359 = vpack.c.bf16 %v3296, %v3295
      %v3360 = vpack.c.bf16 %v3298, %v3297
      %v3361 = vpack.c.bf16 %v3300, %v3299
      %v3362 = vpack.c.bf16 %v3302, %v3301
      %v3363 = vpack.c.bf16 %v3304, %v3303
      %v3364 = vpack.c.bf16 %v3306, %v3305
      %v3365 = vpack.c.bf16 %v3308, %v3307
      %v3366 = vpack.c.bf16 %v3310, %v3309
      %v3367 = vpack.c.bf16 %v3312, %v3311
      %v3368 = vpack.c.bf16 %v3314, %v3313
      %3369 = vst [vmem:[#allocation2 + $0x8] sm:$0xff] %v3351
      %3370 = vst [vmem:[#allocation2 + $0x20] sm:$0xff] %v3352
      %3371 = vst [vmem:[#allocation2 + $0x38] sm:$0xff] %v3353
      %3372 = vst [vmem:[#allocation2 + $0x50] sm:$0xff] %v3354
      %3373 = vst [vmem:[#allocation2 + $0x68] sm:$0xff] %v3355
      %3374 = vst [vmem:[#allocation2 + $0x80] sm:$0xff] %v3356
      %3375 = vst [vmem:[#allocation2 + $0x98] sm:$0xff] %v3357
      %3376 = vst [vmem:[#allocation2 + $0xb0] sm:$0xff] %v3358
      %3377 = vst [vmem:[#allocation2 + $0xc8] sm:$0xff] %v3359
      %3378 = vst [vmem:[#allocation2 + $0xe0] sm:$0xff] %v3360
      %3379 = vst [vmem:[#allocation2 + $0xf8] sm:$0xff] %v3361
      %3380 = vst [vmem:[#allocation2 + $0x110] sm:$0xff] %v3362
      %3381 = vst [vmem:[#allocation2 + $0x128] sm:$0xff] %v3363
      %3382 = vst [vmem:[#allocation2 + $0x140] sm:$0xff] %v3364
      %3383 = vst [vmem:[#allocation2 + $0x158] sm:$0xff] %v3365
      %3384 = vst [vmem:[#allocation2 + $0x170] sm:$0xff] %v3366
      %3385 = vst [vmem:[#allocation2 + $0x188] sm:$0xff] %v3367
      %3386 = vst [vmem:[#allocation2 + $0x1a0] sm:$0xff] %v3368
      %p3387 = scmp.eq.s32.totalorder %s21, 0
      // Predicated region
      $region41: #{residual_block_pallas.1} parent=39 // pred_check
        %p3388 = pneg %p3387
      $region42: #{residual_block_pallas.1} parent=39 // pred_check_branch
        %3390 = sbr.rel (%p3388) target = $region44
      $region43: #{residual_block_pallas.1} parent=39 // pred_region
        %3391 = vst [vmem:[#allocation2] sm:$0xff] 0
        %3392 = vst [vmem:[#allocation2 + $0x8] sm:$0xff] 0
        %3393 = vst [vmem:[#allocation2 + $0x10] sm:$0xff] 0
        %s3394 = scalar_lea.vmem [#allocation2], 408
        %3395 = vst [vmem:[%s3394] sm:$0xff] 0
        %3396 = vst [vmem:[%s3394 + $0x8] sm:$0xff] 0
        %3397 = vst [vmem:[%s3394 + $0x10] sm:$0xff] 0
      $region44: #{residual_block_pallas.1} parent=39 // pred_fallthru
        _
      %v3398 = vld [vmem:[#allocation2] sm:$0x80]
      %v3399 = vld [vmem:[#allocation2 + $0x8] sm:$0xff]
      %v3400 = vld [vmem:[#allocation2 + $0x18] sm:$0x80]
      %v3401 = vld [vmem:[#allocation2 + $0x20] sm:$0xff]
      %v3402 = vld [vmem:[#allocation2 + $0x30] sm:$0x80]
      %v3403 = vld [vmem:[#allocation2 + $0x38] sm:$0xff]
      %v3404 = vld [vmem:[#allocation2 + $0x48] sm:$0x80]
      %v3405 = vld [vmem:[#allocation2 + $0x50] sm:$0xff]
      %v3406 = vld [vmem:[#allocation2 + $0x60] sm:$0x80]
      %v3407 = vld [vmem:[#allocation2 + $0x68] sm:$0xff]
      %v3408 = vld [vmem:[#allocation2 + $0x78] sm:$0x80]
      %v3409 = vld [vmem:[#allocation2 + $0x80] sm:$0xff]
      %v3410 = vld [vmem:[#allocation2 + $0x90] sm:$0x80]
      %v3411 = vld [vmem:[#allocation2 + $0x98] sm:$0xff]
      %v3412 = vld [vmem:[#allocation2 + $0xa8] sm:$0x80]
      %v3413 = vld [vmem:[#allocation2 + $0xb0] sm:$0xff]
      %v3414 = vld [vmem:[#allocation2 + $0xc0] sm:$0x80]
      %v3415 = vld [vmem:[#allocation2 + $0xc8] sm:$0xff]
      %v3416 = vld [vmem:[#allocation2 + $0xd8] sm:$0x80]
      %v3417 = vld [vmem:[#allocation2 + $0xe0] sm:$0xff]
      %v3418 = vld [vmem:[#allocation2 + $0xf0] sm:$0x80]
      %v3419 = vld [vmem:[#allocation2 + $0xf8] sm:$0xff]
      %v3420 = vld [vmem:[#allocation2 + $0x108] sm:$0x80]
      %v3421 = vld [vmem:[#allocation2 + $0x110] sm:$0xff]
      %v3422 = vld [vmem:[#allocation2 + $0x120] sm:$0x80]
      %v3423 = vld [vmem:[#allocation2 + $0x128] sm:$0xff]
      %v3424 = vld [vmem:[#allocation2 + $0x138] sm:$0x80]
      %v3425 = vld [vmem:[#allocation2 + $0x140] sm:$0xff]
      %v3426 = vld [vmem:[#allocation2 + $0x150] sm:$0x80]
      %v3427 = vld [vmem:[#allocation2 + $0x158] sm:$0xff]
      %v3428 = vld [vmem:[#allocation2 + $0x168] sm:$0x80]
      %v3429 = vld [vmem:[#allocation2 + $0x170] sm:$0xff]
      %v3430 = vld [vmem:[#allocation2 + $0x180] sm:$0x80]
      %v3431 = vld [vmem:[#allocation2 + $0x188] sm:$0xff]
      %v3432 = vld [vmem:[#allocation2 + $0x198] sm:$0x80]
      %v3433 = vld [vmem:[#allocation2 + $0x1a0] sm:$0xff]
      %v3434 = vld [vmem:[#allocation2 + $0x8] sm:$0xff]
      %v3435 = vld [vmem:[#allocation2 + $0x10] sm:$0x1]
      %v3436 = vld [vmem:[#allocation2 + $0x20] sm:$0xff]
      %v3437 = vld [vmem:[#allocation2 + $0x28] sm:$0x1]
      %v3438 = vld [vmem:[#allocation2 + $0x38] sm:$0xff]
      %v3439 = vld [vmem:[#allocation2 + $0x40] sm:$0x1]
      %v3440 = vld [vmem:[#allocation2 + $0x50] sm:$0xff]
      %v3441 = vld [vmem:[#allocation2 + $0x58] sm:$0x1]
      %v3442 = vld [vmem:[#allocation2 + $0x68] sm:$0xff]
      %v3443 = vld [vmem:[#allocation2 + $0x70] sm:$0x1]
      %v3444 = vld [vmem:[#allocation2 + $0x80] sm:$0xff]
      %v3445 = vld [vmem:[#allocation2 + $0x88] sm:$0x1]
      %v3446 = vld [vmem:[#allocation2 + $0x98] sm:$0xff]
      %v3447 = vld [vmem:[#allocation2 + $0xa0] sm:$0x1]
      %v3448 = vld [vmem:[#allocation2 + $0xb0] sm:$0xff]
      %v3449 = vld [vmem:[#allocation2 + $0xb8] sm:$0x1]
      %v3450 = vld [vmem:[#allocation2 + $0xc8] sm:$0xff]
      %v3451 = vld [vmem:[#allocation2 + $0xd0] sm:$0x1]
      %v3452 = vld [vmem:[#allocation2 + $0xe0] sm:$0xff]
      %v3453 = vld [vmem:[#allocation2 + $0xe8] sm:$0x1]
      %v3454 = vld [vmem:[#allocation2 + $0xf8] sm:$0xff]
      %v3455 = vld [vmem:[#allocation2 + $0x100] sm:$0x1]
      %v3456 = vld [vmem:[#allocation2 + $0x110] sm:$0xff]
      %v3457 = vld [vmem:[#allocation2 + $0x118] sm:$0x1]
      %v3458 = vld [vmem:[#allocation2 + $0x128] sm:$0xff]
      %v3459 = vld [vmem:[#allocation2 + $0x130] sm:$0x1]
      %v3460 = vld [vmem:[#allocation2 + $0x140] sm:$0xff]
      %v3461 = vld [vmem:[#allocation2 + $0x148] sm:$0x1]
      %v3462 = vld [vmem:[#allocation2 + $0x158] sm:$0xff]
      %v3463 = vld [vmem:[#allocation2 + $0x160] sm:$0x1]
      %v3464 = vld [vmem:[#allocation2 + $0x170] sm:$0xff]
      %v3465 = vld [vmem:[#allocation2 + $0x178] sm:$0x1]
      %v3466 = vld [vmem:[#allocation2 + $0x188] sm:$0xff]
      %v3467 = vld [vmem:[#allocation2 + $0x190] sm:$0x1]
      %v3468 = vld [vmem:[#allocation2 + $0x1a0] sm:$0xff]
      %v3469 = vld [vmem:[#allocation2 + $0x1a8] sm:$0x1]
      %vm3470 = vsmask.f32 256
      %v3472 = vshrl.u32 %v3398, 16
      %v3474 = vrot.slane %v3472, 7
      %v3476 = vshrl.u32 %v3399, 16
      %v3478 = vrot.slane %v3476, 7
      %v3479 = vshll.u32 %v3399, 16
      %v3481 = vor.u32 %v3478, %v3479
      %v3482 = vsel %vm3470, %v3474, %v3481
      %v3484 = vshrl.u32 %v3400, 16
      %v3486 = vrot.slane %v3484, 7
      %v3488 = vshrl.u32 %v3401, 16
      %v3490 = vrot.slane %v3488, 7
      %v3491 = vshll.u32 %v3401, 16
      %v3493 = vor.u32 %v3490, %v3491
      %v3494 = vsel %vm3470, %v3486, %v3493
      %v3496 = vshrl.u32 %v3402, 16
      %v3498 = vrot.slane %v3496, 7
      %v3500 = vshrl.u32 %v3403, 16
      %v3502 = vrot.slane %v3500, 7
      %v3503 = vshll.u32 %v3403, 16
      %v3505 = vor.u32 %v3502, %v3503
      %v3506 = vsel %vm3470, %v3498, %v3505
      %v3508 = vshrl.u32 %v3404, 16
      %v3510 = vrot.slane %v3508, 7
      %v3512 = vshrl.u32 %v3405, 16
      %v3514 = vrot.slane %v3512, 7
      %v3515 = vshll.u32 %v3405, 16
      %v3517 = vor.u32 %v3514, %v3515
      %v3518 = vsel %vm3470, %v3510, %v3517
      %v3520 = vshrl.u32 %v3406, 16
      %v3522 = vrot.slane %v3520, 7
      %v3524 = vshrl.u32 %v3407, 16
      %v3526 = vrot.slane %v3524, 7
      %v3527 = vshll.u32 %v3407, 16
      %v3529 = vor.u32 %v3526, %v3527
      %v3530 = vsel %vm3470, %v3522, %v3529
      %v3532 = vshrl.u32 %v3408, 16
      %v3534 = vrot.slane %v3532, 7
      %v3536 = vshrl.u32 %v3409, 16
      %v3538 = vrot.slane %v3536, 7
      %v3539 = vshll.u32 %v3409, 16
      %v3541 = vor.u32 %v3538, %v3539
      %v3542 = vsel %vm3470, %v3534, %v3541
      %v3544 = vshrl.u32 %v3410, 16
      %v3546 = vrot.slane %v3544, 7
      %v3548 = vshrl.u32 %v3411, 16
      %v3550 = vrot.slane %v3548, 7
      %v3551 = vshll.u32 %v3411, 16
      %v3553 = vor.u32 %v3550, %v3551
      %v3554 = vsel %vm3470, %v3546, %v3553
      %v3556 = vshrl.u32 %v3412, 16
      %v3558 = vrot.slane %v3556, 7
      %v3560 = vshrl.u32 %v3413, 16
      %v3562 = vrot.slane %v3560, 7
      %v3563 = vshll.u32 %v3413, 16
      %v3565 = vor.u32 %v3562, %v3563
      %v3566 = vsel %vm3470, %v3558, %v3565
      %v3568 = vshrl.u32 %v3414, 16
      %v3570 = vrot.slane %v3568, 7
      %v3572 = vshrl.u32 %v3415, 16
      %v3574 = vrot.slane %v3572, 7
      %v3575 = vshll.u32 %v3415, 16
      %v3577 = vor.u32 %v3574, %v3575
      %v3578 = vsel %vm3470, %v3570, %v3577
      %v3580 = vshrl.u32 %v3416, 16
      %v3582 = vrot.slane %v3580, 7
      %v3584 = vshrl.u32 %v3417, 16
      %v3586 = vrot.slane %v3584, 7
      %v3587 = vshll.u32 %v3417, 16
      %v3589 = vor.u32 %v3586, %v3587
      %v3590 = vsel %vm3470, %v3582, %v3589
      %v3592 = vshrl.u32 %v3418, 16
      %v3594 = vrot.slane %v3592, 7
      %v3596 = vshrl.u32 %v3419, 16
      %v3598 = vrot.slane %v3596, 7
      %v3599 = vshll.u32 %v3419, 16
      %v3601 = vor.u32 %v3598, %v3599
      %v3602 = vsel %vm3470, %v3594, %v3601
      %v3604 = vshrl.u32 %v3420, 16
      %v3606 = vrot.slane %v3604, 7
      %v3608 = vshrl.u32 %v3421, 16
      %v3610 = vrot.slane %v3608, 7
      %v3611 = vshll.u32 %v3421, 16
      %v3613 = vor.u32 %v3610, %v3611
      %v3614 = vsel %vm3470, %v3606, %v3613
      %v3616 = vshrl.u32 %v3422, 16
      %v3618 = vrot.slane %v3616, 7
      %v3620 = vshrl.u32 %v3423, 16
      %v3622 = vrot.slane %v3620, 7
      %v3623 = vshll.u32 %v3423, 16
      %v3625 = vor.u32 %v3622, %v3623
      %v3626 = vsel %vm3470, %v3618, %v3625
      %v3628 = vshrl.u32 %v3424, 16
      %v3630 = vrot.slane %v3628, 7
      %v3632 = vshrl.u32 %v3425, 16
      %v3634 = vrot.slane %v3632, 7
      %v3635 = vshll.u32 %v3425, 16
      %v3637 = vor.u32 %v3634, %v3635
      %v3638 = vsel %vm3470, %v3630, %v3637
      %v3640 = vshrl.u32 %v3426, 16
      %v3642 = vrot.slane %v3640, 7
      %v3644 = vshrl.u32 %v3427, 16
      %v3646 = vrot.slane %v3644, 7
      %v3647 = vshll.u32 %v3427, 16
      %v3649 = vor.u32 %v3646, %v3647
      %v3650 = vsel %vm3470, %v3642, %v3649
      %v3652 = vshrl.u32 %v3428, 16
      %v3654 = vrot.slane %v3652, 7
      %v3656 = vshrl.u32 %v3429, 16
      %v3658 = vrot.slane %v3656, 7
      %v3659 = vshll.u32 %v3429, 16
      %v3661 = vor.u32 %v3658, %v3659
      %v3662 = vsel %vm3470, %v3654, %v3661
      %v3679 = vld [vmem:[%s3] sm:$0xf]
      %v3680 = vld [vmem:[%s3 + $0x4] sm:$0xf]
      %v3681 = vld [vmem:[%s3 + $0x8] sm:$0xf]
      %v3682 = vld [vmem:[%s3 + $0xc] sm:$0xf]
      %v3683 = vld [vmem:[%s3 + $0x10] sm:$0xf]
      %v3684 = vld [vmem:[%s3 + $0x14] sm:$0xf]
      %v3685 = vld [vmem:[%s3 + $0x18] sm:$0xf]
      %v3686 = vld [vmem:[%s3 + $0x1c] sm:$0xf]
      %v3687 = vld [vmem:[%s3 + $0x20] sm:$0xf]
      %v3688 = vld [vmem:[%s3 + $0x24] sm:$0xf]
      %v3689 = vld [vmem:[%s3 + $0x28] sm:$0xf]
      %v3690 = vld [vmem:[%s3 + $0x2c] sm:$0xf]
      %v3691 = vld [vmem:[%s3 + $0x30] sm:$0xf]
      %v3692 = vld [vmem:[%s3 + $0x34] sm:$0xf]
      %v3693 = vld [vmem:[%s3 + $0x38] sm:$0xf]
      %v3694 = vld [vmem:[%s3 + $0x3c] sm:$0xf]
      %s3695 = scalar_lea.vmem %s3, 64
      %v3696 = vld [vmem:[%s3695] sm:$0xf]
      %v3697 = vld [vmem:[%s3695 + $0x4] sm:$0xf]
      %v3698 = vld [vmem:[%s3695 + $0x8] sm:$0xf]
      %v3699 = vld [vmem:[%s3695 + $0xc] sm:$0xf]
      %v3700 = vld [vmem:[%s3695 + $0x10] sm:$0xf]
      %v3701 = vld [vmem:[%s3695 + $0x14] sm:$0xf]
      %v3702 = vld [vmem:[%s3695 + $0x18] sm:$0xf]
      %v3703 = vld [vmem:[%s3695 + $0x1c] sm:$0xf]
      %v3704 = vld [vmem:[%s3695 + $0x20] sm:$0xf]
      %v3705 = vld [vmem:[%s3695 + $0x24] sm:$0xf]
      %v3706 = vld [vmem:[%s3695 + $0x28] sm:$0xf]
      %v3707 = vld [vmem:[%s3695 + $0x2c] sm:$0xf]
      %v3708 = vld [vmem:[%s3695 + $0x30] sm:$0xf]
      %v3709 = vld [vmem:[%s3695 + $0x34] sm:$0xf]
      %v3710 = vld [vmem:[%s3695 + $0x38] sm:$0xf]
      %v3711 = vld [vmem:[%s3695 + $0x3c] sm:$0xf]
      %v3728 = vunpack.c.l.b16 %v3696
      %v3729 = vunpack.c.l.b16 %v3697
      %v3730 = vunpack.c.l.b16 %v3698
      %v3731 = vunpack.c.l.b16 %v3699
      %v3732 = vunpack.c.l.b16 %v3700
      %v3733 = vunpack.c.l.b16 %v3701
      %v3734 = vunpack.c.l.b16 %v3702
      %v3735 = vunpack.c.l.b16 %v3703
      %v3736 = vunpack.c.l.b16 %v3704
      %v3737 = vunpack.c.l.b16 %v3705
      %v3738 = vunpack.c.l.b16 %v3706
      %v3739 = vunpack.c.l.b16 %v3707
      %v3740 = vunpack.c.l.b16 %v3708
      %v3741 = vunpack.c.l.b16 %v3709
      %v3742 = vunpack.c.l.b16 %v3710
      %v3743 = vunpack.c.l.b16 %v3711
      %v3744 = vpack.c.b16 %v3729, %v3728
      %v3745 = vpack.c.b16 %v3731, %v3730
      %v3746 = vpack.c.b16 %v3733, %v3732
      %v3747 = vpack.c.b16 %v3735, %v3734
      %v3748 = vpack.c.b16 %v3737, %v3736
      %v3749 = vpack.c.b16 %v3739, %v3738
      %v3750 = vpack.c.b16 %v3741, %v3740
      %v3751 = vpack.c.b16 %v3743, %v3742
      %3760 = vmatprep.subr.bf16.mxu0 0
      %3761 = vmatpush1.bf16.msra.mxu0 %v3744
      %3762 = vmatprep.subr.bf16.mxu0 0
      %3763 = vmatpush1.bf16.msra.mxu0 %v3745
      %3764 = vmatprep.subr.bf16.mxu0 0
      %3765 = vmatpush1.bf16.msra.mxu0 %v3746
      %3766 = vmatprep.subr.bf16.mxu0 0
      %3767 = vmatpush1.bf16.msra.mxu0 %v3747
      %3768 = vmatprep.subr.bf16.mxu0 0
      %3769 = vmatpush1.bf16.msra.mxu0 %v3748
      %3770 = vmatprep.subr.bf16.mxu0 0
      %3771 = vmatpush1.bf16.msra.mxu0 %v3749
      %3772 = vmatprep.subr.bf16.mxu0 0
      %3773 = vmatpush1.bf16.msra.mxu0 %v3750
      %3774 = vmatprep.subr.bf16.mxu0 0
      %3775 = vmatpush1.bf16.msra.mxu0 %v3751
      %3776 = vmatprep.subr.bf16.mxu0 0
      %3777 = vmatpush1.bf16.msra.mxu0 0
      %3778 = vmatprep.subr.bf16.mxu0 0
      %3779 = vmatpush1.bf16.msra.mxu0 0
      %3780 = vmatprep.subr.bf16.mxu0 0
      %3781 = vmatpush1.bf16.msra.mxu0 0
      %3782 = vmatprep.subr.bf16.mxu0 0
      %3783 = vmatpush1.bf16.msra.mxu0 0
      %3784 = vmatprep.subr.bf16.mxu0 0
      %3785 = vmatpush1.bf16.msra.mxu0 0
      %3786 = vmatprep.subr.bf16.mxu0 0
      %3787 = vmatpush1.bf16.msra.mxu0 0
      %3788 = vmatprep.subr.bf16.mxu0 0
      %3789 = vmatpush1.bf16.msra.mxu0 0
      %3790 = vmatprep.subr.bf16.mxu0 0
      %3791 = vmatpush1.bf16.msra.mxu0 0
      %3792 = vmatprep.mubr.bf16.mxu0 0
      %3793 = vmatmul.mubr.bf16.gmra.mrb[0].mxu0 %v3399
      %v3794 = vpop.f32.mrb[0].mxu0
      %v3795 = vadd.f32 0.0, %v3794
      %v3796 = vpop.f32.mrb[0].mxu0
      %v3797 = vpop.f32.mrb[0].mxu0
      %v3798 = vadd.f32 0.0, %v3797
      %v3799 = vpop.f32.mrb[0].mxu0
      %3800 = vmatprep.mubr.bf16.mxu0 0
      %3801 = vmatmul.mubr.bf16.gmra.mrb[0].mxu0 %v3401
      %v3802 = vpop.f32.mrb[0].mxu0
      %v3803 = vadd.f32 0.0, %v3802
      %v3804 = vpop.f32.mrb[0].mxu0
      %v3805 = vpop.f32.mrb[0].mxu0
      %v3806 = vadd.f32 0.0, %v3805
      %v3807 = vpop.f32.mrb[0].mxu0
      %3808 = vmatprep.mubr.bf16.mxu0 0
      %3809 = vmatmul.mubr.bf16.gmra.mrb[0].mxu0 %v3403
      %v3810 = vpop.f32.mrb[0].mxu0
      %v3811 = vadd.f32 0.0, %v3810
      %v3812 = vpop.f32.mrb[0].mxu0
      %v3813 = vpop.f32.mrb[0].mxu0
      %v3814 = vadd.f32 0.0, %v3813
      %v3815 = vpop.f32.mrb[0].mxu0
      %3816 = vmatprep.mubr.bf16.mxu0 0
      %3817 = vmatmul.mubr.bf16.gmra.mrb[0].mxu0 %v3405
      %v3818 = vpop.f32.mrb[0].mxu0
      %v3819 = vadd.f32 0.0, %v3818
      %v3820 = vpop.f32.mrb[0].mxu0
      %v3821 = vpop.f32.mrb[0].mxu0
      %v3822 = vadd.f32 0.0, %v3821
      %v3823 = vpop.f32.mrb[0].mxu0
      %3824 = vmatprep.mubr.bf16.mxu0 0
      %3825 = vmatmul.mubr.bf16.gmra.mrb[0].mxu0 %v3407
      %v3826 = vpop.f32.mrb[0].mxu0
      %v3827 = vadd.f32 0.0, %v3826
      %v3828 = vpop.f32.mrb[0].mxu0
      %v3829 = vpop.f32.mrb[0].mxu0
      %v3830 = vadd.f32 0.0, %v3829
      %v3831 = vpop.f32.mrb[0].mxu0
      %3832 = vmatprep.mubr.bf16.mxu0 0
      %3833 = vmatmul.mubr.bf16.gmra.mrb[0].mxu0 %v3409
      %v3834 = vpop.f32.mrb[0].mxu0
      %v3835 = vadd.f32 0.0, %v3834
      %v3836 = vpop.f32.mrb[0].mxu0
      %v3837 = vpop.f32.mrb[0].mxu0
      %v3838 = vadd.f32 0.0, %v3837
      %v3839 = vpop.f32.mrb[0].mxu0
      %3840 = vmatprep.mubr.bf16.mxu0 0
      %3841 = vmatmul.mubr.bf16.gmra.mrb[0].mxu0 %v3411
      %v3842 = vpop.f32.mrb[0].mxu0
      %v3843 = vadd.f32 0.0, %v3842
      %v3844 = vpop.f32.mrb[0].mxu0
      %v3845 = vpop.f32.mrb[0].mxu0
      %v3846 = vadd.f32 0.0, %v3845
      %v3847 = vpop.f32.mrb[0].mxu0
      %3848 = vmatprep.mubr.bf16.mxu0 0
      %3849 = vmatmul.mubr.bf16.gmra.mrb[0].mxu0 %v3413
      %v3850 = vpop.f32.mrb[0].mxu0
      %v3851 = vadd.f32 0.0, %v3850
      %v3852 = vpop.f32.mrb[0].mxu0
      %v3853 = vpop.f32.mrb[0].mxu0
      %v3854 = vadd.f32 0.0, %v3853
      %v3855 = vpop.f32.mrb[0].mxu0
      %3856 = vmatprep.mubr.bf16.mxu0 0
      %3857 = vmatmul.mubr.bf16.gmra.mrb[0].mxu0 %v3415
      %v3858 = vpop.f32.mrb[0].mxu0
      %v3859 = vadd.f32 0.0, %v3858
      %v3860 = vpop.f32.mrb[0].mxu0
      %v3861 = vpop.f32.mrb[0].mxu0
      %v3862 = vadd.f32 0.0, %v3861
      %v3863 = vpop.f32.mrb[0].mxu0
      %3864 = vmatprep.mubr.bf16.mxu0 0
      %3865 = vmatmul.mubr.bf16.gmra.mrb[0].mxu0 %v3417
      %v3866 = vpop.f32.mrb[0].mxu0
      %v3867 = vadd.f32 0.0, %v3866
      %v3868 = vpop.f32.mrb[0].mxu0
      %v3869 = vpop.f32.mrb[0].mxu0
      %v3870 = vadd.f32 0.0, %v3869
      %v3871 = vpop.f32.mrb[0].mxu0
      %3872 = vmatprep.mubr.bf16.mxu0 0
      %3873 = vmatmul.mubr.bf16.gmra.mrb[0].mxu0 %v3419
      %v3874 = vpop.f32.mrb[0].mxu0
      %v3875 = vadd.f32 0.0, %v3874
      %v3876 = vpop.f32.mrb[0].mxu0
      %v3877 = vpop.f32.mrb[0].mxu0
      %v3878 = vadd.f32 0.0, %v3877
      %v3879 = vpop.f32.mrb[0].mxu0
      %3880 = vmatprep.mubr.bf16.mxu0 0
      %3881 = vmatmul.mubr.bf16.gmra.mrb[0].mxu0 %v3421
      %v3882 = vpop.f32.mrb[0].mxu0
      %v3883 = vadd.f32 0.0, %v3882
      %v3884 = vpop.f32.mrb[0].mxu0
      %v3885 = vpop.f32.mrb[0].mxu0
      %v3886 = vadd.f32 0.0, %v3885
      %v3887 = vpop.f32.mrb[0].mxu0
      %3888 = vmatprep.mubr.bf16.mxu0 0
      %3889 = vmatmul.mubr.bf16.gmra.mrb[0].mxu0 %v3423
      %v3890 = vpop.f32.mrb[0].mxu0
      %v3891 = vadd.f32 0.0, %v3890
      %v3892 = vpop.f32.mrb[0].mxu0
      %v3893 = vpop.f32.mrb[0].mxu0
      %v3894 = vadd.f32 0.0, %v3893
      %v3895 = vpop.f32.mrb[0].mxu0
      %3896 = vmatprep.mubr.bf16.mxu0 0
      %3897 = vmatmul.mubr.bf16.gmra.mrb[0].mxu0 %v3425
      %v3898 = vpop.f32.mrb[0].mxu0
      %v3899 = vadd.f32 0.0, %v3898
      %v3900 = vpop.f32.mrb[0].mxu0
      %v3901 = vpop.f32.mrb[0].mxu0
      %v3902 = vadd.f32 0.0, %v3901
      %v3903 = vpop.f32.mrb[0].mxu0
      %3904 = vmatprep.mubr.bf16.mxu0 0
      %3905 = vmatmul.mubr.bf16.gmra.mrb[0].mxu0 %v3427
      %v3906 = vpop.f32.mrb[0].mxu0
      %v3907 = vadd.f32 0.0, %v3906
      %v3908 = vpop.f32.mrb[0].mxu0
      %v3909 = vpop.f32.mrb[0].mxu0
      %v3910 = vadd.f32 0.0, %v3909
      %v3911 = vpop.f32.mrb[0].mxu0
      %3912 = vmatprep.mubr.bf16.mxu0 0
      %3913 = vmatmul.mubr.bf16.gmra.mrb[0].mxu0 %v3429
      %v3914 = vpop.f32.mrb[0].mxu0
      %v3915 = vadd.f32 0.0, %v3914
      %v3916 = vpop.f32.mrb[0].mxu0
      %v3917 = vpop.f32.mrb[0].mxu0
      %v3918 = vadd.f32 0.0, %v3917
      %v3919 = vpop.f32.mrb[0].mxu0
      %3920 = vdwg.mxu0
      %v3937 = vunpack.c.l.b16 %v3679
      %v3938 = vunpack.c.l.b16 %v3680
      %v3939 = vunpack.c.l.b16 %v3681
      %v3940 = vunpack.c.l.b16 %v3682
      %v3941 = vunpack.c.l.b16 %v3683
      %v3942 = vunpack.c.l.b16 %v3684
      %v3943 = vunpack.c.l.b16 %v3685
      %v3944 = vunpack.c.l.b16 %v3686
      %v3945 = vunpack.c.l.b16 %v3687
      %v3946 = vunpack.c.l.b16 %v3688
      %v3947 = vunpack.c.l.b16 %v3689
      %v3948 = vunpack.c.l.b16 %v3690
      %v3949 = vunpack.c.l.b16 %v3691
      %v3950 = vunpack.c.l.b16 %v3692
      %v3951 = vunpack.c.l.b16 %v3693
      %v3952 = vunpack.c.l.b16 %v3694
      %v3953 = vpack.c.b16 %v3938, %v3937
      %v3954 = vpack.c.b16 %v3940, %v3939
      %v3955 = vpack.c.b16 %v3942, %v3941
      %v3956 = vpack.c.b16 %v3944, %v3943
      %v3957 = vpack.c.b16 %v3946, %v3945
      %v3958 = vpack.c.b16 %v3948, %v3947
      %v3959 = vpack.c.b16 %v3950, %v3949
      %v3960 = vpack.c.b16 %v3952, %v3951
      %3969 = vmatprep.subr.bf16.mxu0 0
      %3970 = vmatpush1.bf16.msra.mxu0 %v3953
      %3971 = vmatprep.subr.bf16.mxu0 0
      %3972 = vmatpush1.bf16.msra.mxu0 %v3954
      %3973 = vmatprep.subr.bf16.mxu0 0
      %3974 = vmatpush1.bf16.msra.mxu0 %v3955
      %3975 = vmatprep.subr.bf16.mxu0 0
      %3976 = vmatpush1.bf16.msra.mxu0 %v3956
      %3977 = vmatprep.subr.bf16.mxu0 0
      %3978 = vmatpush1.bf16.msra.mxu0 %v3957
      %3979 = vmatprep.subr.bf16.mxu0 0
      %3980 = vmatpush1.bf16.msra.mxu0 %v3958
      %3981 = vmatprep.subr.bf16.mxu0 0
      %3982 = vmatpush1.bf16.msra.mxu0 %v3959
      %3983 = vmatprep.subr.bf16.mxu0 0
      %3984 = vmatpush1.bf16.msra.mxu0 %v3960
      %3985 = vmatprep.subr.bf16.mxu0 0
      %3986 = vmatpush1.bf16.msra.mxu0 0
      %3987 = vmatprep.subr.bf16.mxu0 0
      %3988 = vmatpush1.bf16.msra.mxu0 0
      %3989 = vmatprep.subr.bf16.mxu0 0
      %3990 = vmatpush1.bf16.msra.mxu0 0
      %3991 = vmatprep.subr.bf16.mxu0 0
      %3992 = vmatpush1.bf16.msra.mxu0 0
      %3993 = vmatprep.subr.bf16.mxu0 0
      %3994 = vmatpush1.bf16.msra.mxu0 0
      %3995 = vmatprep.subr.bf16.mxu0 0
      %3996 = vmatpush1.bf16.msra.mxu0 0
      %3997 = vmatprep.subr.bf16.mxu0 0
      %3998 = vmatpush1.bf16.msra.mxu0 0
      %3999 = vmatprep.subr.bf16.mxu0 0
      %4000 = vmatpush1.bf16.msra.mxu0 0
      %4001 = vmatprep.mubr.bf16.mxu0 0
      %4002 = vmatmul.mubr.bf16.gmra.mrb[0].mxu0 %v3482
      %v4003 = vpop.f32.mrb[0].mxu0
      %v4004 = vadd.f32 %v3795, %v4003
      %v4005 = vpop.f32.mrb[0].mxu0
      %v4006 = vpop.f32.mrb[0].mxu0
      %v4007 = vadd.f32 %v3798, %v4006
      %v4008 = vpop.f32.mrb[0].mxu0
      %4009 = vmatprep.mubr.bf16.mxu0 0
      %4010 = vmatmul.mubr.bf16.gmra.mrb[0].mxu0 %v3494
      %v4011 = vpop.f32.mrb[0].mxu0
      %v4012 = vadd.f32 %v3803, %v4011
      %v4013 = vpop.f32.mrb[0].mxu0
      %v4014 = vpop.f32.mrb[0].mxu0
      %v4015 = vadd.f32 %v3806, %v4014
      %v4016 = vpop.f32.mrb[0].mxu0
      %4017 = vmatprep.mubr.bf16.mxu0 0
      %4018 = vmatmul.mubr.bf16.gmra.mrb[0].mxu0 %v3506
      %v4019 = vpop.f32.mrb[0].mxu0
      %v4020 = vadd.f32 %v3811, %v4019
      %v4021 = vpop.f32.mrb[0].mxu0
      %v4022 = vpop.f32.mrb[0].mxu0
      %v4023 = vadd.f32 %v3814, %v4022
      %v4024 = vpop.f32.mrb[0].mxu0
      %4025 = vmatprep.mubr.bf16.mxu0 0
      %4026 = vmatmul.mubr.bf16.gmra.mrb[0].mxu0 %v3518
      %v4027 = vpop.f32.mrb[0].mxu0
      %v4028 = vadd.f32 %v3819, %v4027
      %v4029 = vpop.f32.mrb[0].mxu0
      %v4030 = vpop.f32.mrb[0].mxu0
      %v4031 = vadd.f32 %v3822, %v4030
      %v4032 = vpop.f32.mrb[0].mxu0
      %4033 = vmatprep.mubr.bf16.mxu0 0
      %4034 = vmatmul.mubr.bf16.gmra.mrb[0].mxu0 %v3530
      %v4035 = vpop.f32.mrb[0].mxu0
      %v4036 = vadd.f32 %v3827, %v4035
      %v4037 = vpop.f32.mrb[0].mxu0
      %v4038 = vpop.f32.mrb[0].mxu0
      %v4039 = vadd.f32 %v3830, %v4038
      %v4040 = vpop.f32.mrb[0].mxu0
      %4041 = vmatprep.mubr.bf16.mxu0 0
      %4042 = vmatmul.mubr.bf16.gmra.mrb[0].mxu0 %v3542
      %v4043 = vpop.f32.mrb[0].mxu0
      %v4044 = vadd.f32 %v3835, %v4043
      %v4045 = vpop.f32.mrb[0].mxu0
      %v4046 = vpop.f32.mrb[0].mxu0
      %v4047 = vadd.f32 %v3838, %v4046
      %v4048 = vpop.f32.mrb[0].mxu0
      %4049 = vmatprep.mubr.bf16.mxu0 0
      %4050 = vmatmul.mubr.bf16.gmra.mrb[0].mxu0 %v3554
      %v4051 = vpop.f32.mrb[0].mxu0
      %v4052 = vadd.f32 %v3843, %v4051
      %v4053 = vpop.f32.mrb[0].mxu0
      %v4054 = vpop.f32.mrb[0].mxu0
      %v4055 = vadd.f32 %v3846, %v4054
      %v4056 = vpop.f32.mrb[0].mxu0
      %4057 = vmatprep.mubr.bf16.mxu0 0
      %4058 = vmatmul.mubr.bf16.gmra.mrb[0].mxu0 %v3566
      %v4059 = vpop.f32.mrb[0].mxu0
      %v4060 = vadd.f32 %v3851, %v4059
      %v4061 = vpop.f32.mrb[0].mxu0
      %v4062 = vpop.f32.mrb[0].mxu0
      %v4063 = vadd.f32 %v3854, %v4062
      %v4064 = vpop.f32.mrb[0].mxu0
      %4065 = vmatprep.mubr.bf16.mxu0 0
      %4066 = vmatmul.mubr.bf16.gmra.mrb[0].mxu0 %v3578
      %v4067 = vpop.f32.mrb[0].mxu0
      %v4068 = vadd.f32 %v3859, %v4067
      %v4069 = vpop.f32.mrb[0].mxu0
      %v4070 = vpop.f32.mrb[0].mxu0
      %v4071 = vadd.f32 %v3862, %v4070
      %v4072 = vpop.f32.mrb[0].mxu0
      %4073 = vmatprep.mubr.bf16.mxu0 0
      %4074 = vmatmul.mubr.bf16.gmra.mrb[0].mxu0 %v3590
      %v4075 = vpop.f32.mrb[0].mxu0
      %v4076 = vadd.f32 %v3867, %v4075
      %v4077 = vpop.f32.mrb[0].mxu0
      %v4078 = vpop.f32.mrb[0].mxu0
      %v4079 = vadd.f32 %v3870, %v4078
      %v4080 = vpop.f32.mrb[0].mxu0
      %4081 = vmatprep.mubr.bf16.mxu0 0
      %4082 = vmatmul.mubr.bf16.gmra.mrb[0].mxu0 %v3602
      %v4083 = vpop.f32.mrb[0].mxu0
      %v4084 = vadd.f32 %v3875, %v4083
      %v4085 = vpop.f32.mrb[0].mxu0
      %v4086 = vpop.f32.mrb[0].mxu0
      %v4087 = vadd.f32 %v3878, %v4086
      %v4088 = vpop.f32.mrb[0].mxu0
      %4089 = vmatprep.mubr.bf16.mxu0 0
      %4090 = vmatmul.mubr.bf16.gmra.mrb[0].mxu0 %v3614
      %v4091 = vpop.f32.mrb[0].mxu0
      %v4092 = vadd.f32 %v3883, %v4091
      %v4093 = vpop.f32.mrb[0].mxu0
      %v4094 = vpop.f32.mrb[0].mxu0
      %v4095 = vadd.f32 %v3886, %v4094
      %v4096 = vpop.f32.mrb[0].mxu0
      %4097 = vmatprep.mubr.bf16.mxu0 0
      %4098 = vmatmul.mubr.bf16.gmra.mrb[0].mxu0 %v3626
      %v4099 = vpop.f32.mrb[0].mxu0
      %v4100 = vadd.f32 %v3891, %v4099
      %v4101 = vpop.f32.mrb[0].mxu0
      %v4102 = vpop.f32.mrb[0].mxu0
      %v4103 = vadd.f32 %v3894, %v4102
      %v4104 = vpop.f32.mrb[0].mxu0
      %4105 = vmatprep.mubr.bf16.mxu0 0
      %4106 = vmatmul.mubr.bf16.gmra.mrb[0].mxu0 %v3638
      %v4107 = vpop.f32.mrb[0].mxu0
      %v4108 = vadd.f32 %v3899, %v4107
      %v4109 = vpop.f32.mrb[0].mxu0
      %v4110 = vpop.f32.mrb[0].mxu0
      %v4111 = vadd.f32 %v3902, %v4110
      %v4112 = vpop.f32.mrb[0].mxu0
      %4113 = vmatprep.mubr.bf16.mxu0 0
      %4114 = vmatmul.mubr.bf16.gmra.mrb[0].mxu0 %v3650
      %v4115 = vpop.f32.mrb[0].mxu0
      %v4116 = vadd.f32 %v3907, %v4115
      %v4117 = vpop.f32.mrb[0].mxu0
      %v4118 = vpop.f32.mrb[0].mxu0
      %v4119 = vadd.f32 %v3910, %v4118
      %v4120 = vpop.f32.mrb[0].mxu0
      %4121 = vmatprep.mubr.bf16.mxu0 0
      %4122 = vmatmul.mubr.bf16.gmra.mrb[0].mxu0 %v3662
      %v4123 = vpop.f32.mrb[0].mxu0
      %v4124 = vadd.f32 %v3915, %v4123
      %v4125 = vpop.f32.mrb[0].mxu0
      %v4126 = vpop.f32.mrb[0].mxu0
      %v4127 = vadd.f32 %v3918, %v4126
      %v4128 = vpop.f32.mrb[0].mxu0
      %4129 = vdwg.mxu0
      %v4131 = vshrl.u32 %v3434, 16
      %v4133 = vshll.u32 %v3434, 16
      %v4135 = vrot.slane %v4133, 1
      %v4136 = vor.u32 %v4131, %v4135
      %v4138 = vshll.u32 %v3435, 16
      %v4140 = vrot.slane %v4138, 1
      %v4141 = vsel %vm441, %v4136, %v4140
      %v4143 = vshrl.u32 %v3436, 16
      %v4145 = vshll.u32 %v3436, 16
      %v4147 = vrot.slane %v4145, 1
      %v4148 = vor.u32 %v4143, %v4147
      %v4150 = vshll.u32 %v3437, 16
      %v4152 = vrot.slane %v4150, 1
      %v4153 = vsel %vm441, %v4148, %v4152
      %v4155 = vshrl.u32 %v3438, 16
      %v4157 = vshll.u32 %v3438, 16
      %v4159 = vrot.slane %v4157, 1
      %v4160 = vor.u32 %v4155, %v4159
      %v4162 = vshll.u32 %v3439, 16
      %v4164 = vrot.slane %v4162, 1
      %v4165 = vsel %vm441, %v4160, %v4164
      %v4167 = vshrl.u32 %v3440, 16
      %v4169 = vshll.u32 %v3440, 16
      %v4171 = vrot.slane %v4169, 1
      %v4172 = vor.u32 %v4167, %v4171
      %v4174 = vshll.u32 %v3441, 16
      %v4176 = vrot.slane %v4174, 1
      %v4177 = vsel %vm441, %v4172, %v4176
      %v4179 = vshrl.u32 %v3442, 16
      %v4181 = vshll.u32 %v3442, 16
      %v4183 = vrot.slane %v4181, 1
      %v4184 = vor.u32 %v4179, %v4183
      %v4186 = vshll.u32 %v3443, 16
      %v4188 = vrot.slane %v4186, 1
      %v4189 = vsel %vm441, %v4184, %v4188
      %v4191 = vshrl.u32 %v3444, 16
      %v4193 = vshll.u32 %v3444, 16
      %v4195 = vrot.slane %v4193, 1
      %v4196 = vor.u32 %v4191, %v4195
      %v4198 = vshll.u32 %v3445, 16
      %v4200 = vrot.slane %v4198, 1
      %v4201 = vsel %vm441, %v4196, %v4200
      %v4203 = vshrl.u32 %v3446, 16
      %v4205 = vshll.u32 %v3446, 16
      %v4207 = vrot.slane %v4205, 1
      %v4208 = vor.u32 %v4203, %v4207
      %v4210 = vshll.u32 %v3447, 16
      %v4212 = vrot.slane %v4210, 1
      %v4213 = vsel %vm441, %v4208, %v4212
      %v4215 = vshrl.u32 %v3448, 16
      %v4217 = vshll.u32 %v3448, 16
      %v4219 = vrot.slane %v4217, 1
      %v4220 = vor.u32 %v4215, %v4219
      %v4222 = vshll.u32 %v3449, 16
      %v4224 = vrot.slane %v4222, 1
      %v4225 = vsel %vm441, %v4220, %v4224
      %v4227 = vshrl.u32 %v3450, 16
      %v4229 = vshll.u32 %v3450, 16
      %v4231 = vrot.slane %v4229, 1
      %v4232 = vor.u32 %v4227, %v4231
      %v4234 = vshll.u32 %v3451, 16
      %v4236 = vrot.slane %v4234, 1
      %v4237 = vsel %vm441, %v4232, %v4236
      %v4239 = vshrl.u32 %v3452, 16
      %v4241 = vshll.u32 %v3452, 16
      %v4243 = vrot.slane %v4241, 1
      %v4244 = vor.u32 %v4239, %v4243
      %v4246 = vshll.u32 %v3453, 16
      %v4248 = vrot.slane %v4246, 1
      %v4249 = vsel %vm441, %v4244, %v4248
      %v4251 = vshrl.u32 %v3454, 16
      %v4253 = vshll.u32 %v3454, 16
      %v4255 = vrot.slane %v4253, 1
      %v4256 = vor.u32 %v4251, %v4255
      %v4258 = vshll.u32 %v3455, 16
      %v4260 = vrot.slane %v4258, 1
      %v4261 = vsel %vm441, %v4256, %v4260
      %v4263 = vshrl.u32 %v3456, 16
      %v4265 = vshll.u32 %v3456, 16
      %v4267 = vrot.slane %v4265, 1
      %v4268 = vor.u32 %v4263, %v4267
      %v4270 = vshll.u32 %v3457, 16
      %v4272 = vrot.slane %v4270, 1
      %v4273 = vsel %vm441, %v4268, %v4272
      %v4275 = vshrl.u32 %v3458, 16
      %v4277 = vshll.u32 %v3458, 16
      %v4279 = vrot.slane %v4277, 1
      %v4280 = vor.u32 %v4275, %v4279
      %v4282 = vshll.u32 %v3459, 16
      %v4284 = vrot.slane %v4282, 1
      %v4285 = vsel %vm441, %v4280, %v4284
      %v4287 = vshrl.u32 %v3460, 16
      %v4289 = vshll.u32 %v3460, 16
      %v4291 = vrot.slane %v4289, 1
      %v4292 = vor.u32 %v4287, %v4291
      %v4294 = vshll.u32 %v3461, 16
      %v4296 = vrot.slane %v4294, 1
      %v4297 = vsel %vm441, %v4292, %v4296
      %v4299 = vshrl.u32 %v3462, 16
      %v4301 = vshll.u32 %v3462, 16
      %v4303 = vrot.slane %v4301, 1
      %v4304 = vor.u32 %v4299, %v4303
      %v4306 = vshll.u32 %v3463, 16
      %v4308 = vrot.slane %v4306, 1
      %v4309 = vsel %vm441, %v4304, %v4308
      %v4311 = vshrl.u32 %v3464, 16
      %v4313 = vshll.u32 %v3464, 16
      %v4315 = vrot.slane %v4313, 1
      %v4316 = vor.u32 %v4311, %v4315
      %v4318 = vshll.u32 %v3465, 16
      %v4320 = vrot.slane %v4318, 1
      %v4321 = vsel %vm441, %v4316, %v4320
      %s4338 = scalar_lea.vmem %s3, 128
      %v4339 = vld [vmem:[%s4338] sm:$0xf]
      %v4340 = vld [vmem:[%s4338 + $0x4] sm:$0xf]
      %v4341 = vld [vmem:[%s4338 + $0x8] sm:$0xf]
      %v4342 = vld [vmem:[%s4338 + $0xc] sm:$0xf]
      %v4343 = vld [vmem:[%s4338 + $0x10] sm:$0xf]
      %v4344 = vld [vmem:[%s4338 + $0x14] sm:$0xf]
      %v4345 = vld [vmem:[%s4338 + $0x18] sm:$0xf]
      %v4346 = vld [vmem:[%s4338 + $0x1c] sm:$0xf]
      %v4347 = vld [vmem:[%s4338 + $0x20] sm:$0xf]
      %v4348 = vld [vmem:[%s4338 + $0x24] sm:$0xf]
      %v4349 = vld [vmem:[%s4338 + $0x28] sm:$0xf]
      %v4350 = vld [vmem:[%s4338 + $0x2c] sm:$0xf]
      %v4351 = vld [vmem:[%s4338 + $0x30] sm:$0xf]
      %v4352 = vld [vmem:[%s4338 + $0x34] sm:$0xf]
      %v4353 = vld [vmem:[%s4338 + $0x38] sm:$0xf]
      %v4354 = vld [vmem:[%s4338 + $0x3c] sm:$0xf]
      %v4371 = vunpack.c.l.b16 %v4339
      %v4372 = vunpack.c.l.b16 %v4340
      %v4373 = vunpack.c.l.b16 %v4341
      %v4374 = vunpack.c.l.b16 %v4342
      %v4375 = vunpack.c.l.b16 %v4343
      %v4376 = vunpack.c.l.b16 %v4344
      %v4377 = vunpack.c.l.b16 %v4345
      %v4378 = vunpack.c.l.b16 %v4346
      %v4379 = vunpack.c.l.b16 %v4347
      %v4380 = vunpack.c.l.b16 %v4348
      %v4381 = vunpack.c.l.b16 %v4349
      %v4382 = vunpack.c.l.b16 %v4350
      %v4383 = vunpack.c.l.b16 %v4351
      %v4384 = vunpack.c.l.b16 %v4352
      %v4385 = vunpack.c.l.b16 %v4353
      %v4386 = vunpack.c.l.b16 %v4354
      %v4387 = vpack.c.b16 %v4372, %v4371
      %v4388 = vpack.c.b16 %v4374, %v4373
      %v4389 = vpack.c.b16 %v4376, %v4375
      %v4390 = vpack.c.b16 %v4378, %v4377
      %v4391 = vpack.c.b16 %v4380, %v4379
      %v4392 = vpack.c.b16 %v4382, %v4381
      %v4393 = vpack.c.b16 %v4384, %v4383
      %v4394 = vpack.c.b16 %v4386, %v4385
      %4403 = vmatprep.subr.bf16.mxu0 0
      %4404 = vmatpush1.bf16.msra.mxu0 %v4387
      %4405 = vmatprep.subr.bf16.mxu0 0
      %4406 = vmatpush1.bf16.msra.mxu0 %v4388
      %4407 = vmatprep.subr.bf16.mxu0 0
      %4408 = vmatpush1.bf16.msra.mxu0 %v4389
      %4409 = vmatprep.subr.bf16.mxu0 0
      %4410 = vmatpush1.bf16.msra.mxu0 %v4390
      %4411 = vmatprep.subr.bf16.mxu0 0
      %4412 = vmatpush1.bf16.msra.mxu0 %v4391
      %4413 = vmatprep.subr.bf16.mxu0 0
      %4414 = vmatpush1.bf16.msra.mxu0 %v4392
      %4415 = vmatprep.subr.bf16.mxu0 0
      %4416 = vmatpush1.bf16.msra.mxu0 %v4393
      %4417 = vmatprep.subr.bf16.mxu0 0
      %4418 = vmatpush1.bf16.msra.mxu0 %v4394
      %4419 = vmatprep.subr.bf16.mxu0 0
      %4420 = vmatpush1.bf16.msra.mxu0 0
      %4421 = vmatprep.subr.bf16.mxu0 0
      %4422 = vmatpush1.bf16.msra.mxu0 0
      %4423 = vmatprep.subr.bf16.mxu0 0
      %4424 = vmatpush1.bf16.msra.mxu0 0
      %4425 = vmatprep.subr.bf16.mxu0 0
      %4426 = vmatpush1.bf16.msra.mxu0 0
      %4427 = vmatprep.subr.bf16.mxu0 0
      %4428 = vmatpush1.bf16.msra.mxu0 0
      %4429 = vmatprep.subr.bf16.mxu0 0
      %4430 = vmatpush1.bf16.msra.mxu0 0
      %4431 = vmatprep.subr.bf16.mxu0 0
      %4432 = vmatpush1.bf16.msra.mxu0 0
      %4433 = vmatprep.subr.bf16.mxu0 0
      %4434 = vmatpush1.bf16.msra.mxu0 0
      %4435 = vmatprep.mubr.bf16.mxu0 0
      %4436 = vmatmul.mubr.bf16.gmra.mrb[0].mxu0 %v4141
      %v4437 = vpop.f32.mrb[0].mxu0
      %v4438 = vadd.f32 0.0, %v4437
      %v4439 = vpop.f32.mrb[0].mxu0
      %v4440 = vpop.f32.mrb[0].mxu0
      %v4441 = vadd.f32 0.0, %v4440
      %v4442 = vpop.f32.mrb[0].mxu0
      %4443 = vmatprep.mubr.bf16.mxu0 0
      %4444 = vmatmul.mubr.bf16.gmra.mrb[0].mxu0 %v4153
      %v4445 = vpop.f32.mrb[0].mxu0
      %v4446 = vadd.f32 0.0, %v4445
      %v4447 = vpop.f32.mrb[0].mxu0
      %v4448 = vpop.f32.mrb[0].mxu0
      %v4449 = vadd.f32 0.0, %v4448
      %v4450 = vpop.f32.mrb[0].mxu0
      %4451 = vmatprep.mubr.bf16.mxu0 0
      %4452 = vmatmul.mubr.bf16.gmra.mrb[0].mxu0 %v4165
      %v4453 = vpop.f32.mrb[0].mxu0
      %v4454 = vadd.f32 0.0, %v4453
      %v4455 = vpop.f32.mrb[0].mxu0
      %v4456 = vpop.f32.mrb[0].mxu0
      %v4457 = vadd.f32 0.0, %v4456
      %v4458 = vpop.f32.mrb[0].mxu0
      %4459 = vmatprep.mubr.bf16.mxu0 0
      %4460 = vmatmul.mubr.bf16.gmra.mrb[0].mxu0 %v4177
      %v4461 = vpop.f32.mrb[0].mxu0
      %v4462 = vadd.f32 0.0, %v4461
      %v4463 = vpop.f32.mrb[0].mxu0
      %v4464 = vpop.f32.mrb[0].mxu0
      %v4465 = vadd.f32 0.0, %v4464
      %v4466 = vpop.f32.mrb[0].mxu0
      %4467 = vmatprep.mubr.bf16.mxu0 0
      %4468 = vmatmul.mubr.bf16.gmra.mrb[0].mxu0 %v4189
      %v4469 = vpop.f32.mrb[0].mxu0
      %v4470 = vadd.f32 0.0, %v4469
      %v4471 = vpop.f32.mrb[0].mxu0
      %v4472 = vpop.f32.mrb[0].mxu0
      %v4473 = vadd.f32 0.0, %v4472
      %v4474 = vpop.f32.mrb[0].mxu0
      %4475 = vmatprep.mubr.bf16.mxu0 0
      %4476 = vmatmul.mubr.bf16.gmra.mrb[0].mxu0 %v4201
      %v4477 = vpop.f32.mrb[0].mxu0
      %v4478 = vadd.f32 0.0, %v4477
      %v4479 = vpop.f32.mrb[0].mxu0
      %v4480 = vpop.f32.mrb[0].mxu0
      %v4481 = vadd.f32 0.0, %v4480
      %v4482 = vpop.f32.mrb[0].mxu0
      %4483 = vmatprep.mubr.bf16.mxu0 0
      %4484 = vmatmul.mubr.bf16.gmra.mrb[0].mxu0 %v4213
      %v4485 = vpop.f32.mrb[0].mxu0
      %v4486 = vadd.f32 0.0, %v4485
      %v4487 = vpop.f32.mrb[0].mxu0
      %v4488 = vpop.f32.mrb[0].mxu0
      %v4489 = vadd.f32 0.0, %v4488
      %v4490 = vpop.f32.mrb[0].mxu0
      %4491 = vmatprep.mubr.bf16.mxu0 0
      %4492 = vmatmul.mubr.bf16.gmra.mrb[0].mxu0 %v4225
      %v4493 = vpop.f32.mrb[0].mxu0
      %v4494 = vadd.f32 0.0, %v4493
      %v4495 = vpop.f32.mrb[0].mxu0
      %v4496 = vpop.f32.mrb[0].mxu0
      %v4497 = vadd.f32 0.0, %v4496
      %v4498 = vpop.f32.mrb[0].mxu0
      %4499 = vmatprep.mubr.bf16.mxu0 0
      %4500 = vmatmul.mubr.bf16.gmra.mrb[0].mxu0 %v4237
      %v4501 = vpop.f32.mrb[0].mxu0
      %v4502 = vadd.f32 0.0, %v4501
      %v4503 = vpop.f32.mrb[0].mxu0
      %v4504 = vpop.f32.mrb[0].mxu0
      %v4505 = vadd.f32 0.0, %v4504
      %v4506 = vpop.f32.mrb[0].mxu0
      %4507 = vmatprep.mubr.bf16.mxu0 0
      %4508 = vmatmul.mubr.bf16.gmra.mrb[0].mxu0 %v4249
      %v4509 = vpop.f32.mrb[0].mxu0
      %v4510 = vadd.f32 0.0, %v4509
      %v4511 = vpop.f32.mrb[0].mxu0
      %v4512 = vpop.f32.mrb[0].mxu0
      %v4513 = vadd.f32 0.0, %v4512
      %v4514 = vpop.f32.mrb[0].mxu0
      %4515 = vmatprep.mubr.bf16.mxu0 0
      %4516 = vmatmul.mubr.bf16.gmra.mrb[0].mxu0 %v4261
      %v4517 = vpop.f32.mrb[0].mxu0
      %v4518 = vadd.f32 0.0, %v4517
      %v4519 = vpop.f32.mrb[0].mxu0
      %v4520 = vpop.f32.mrb[0].mxu0
      %v4521 = vadd.f32 0.0, %v4520
      %v4522 = vpop.f32.mrb[0].mxu0
      %4523 = vmatprep.mubr.bf16.mxu0 0
      %4524 = vmatmul.mubr.bf16.gmra.mrb[0].mxu0 %v4273
      %v4525 = vpop.f32.mrb[0].mxu0
      %v4526 = vadd.f32 0.0, %v4525
      %v4527 = vpop.f32.mrb[0].mxu0
      %v4528 = vpop.f32.mrb[0].mxu0
      %v4529 = vadd.f32 0.0, %v4528
      %v4530 = vpop.f32.mrb[0].mxu0
      %4531 = vmatprep.mubr.bf16.mxu0 0
      %4532 = vmatmul.mubr.bf16.gmra.mrb[0].mxu0 %v4285
      %v4533 = vpop.f32.mrb[0].mxu0
      %v4534 = vadd.f32 0.0, %v4533
      %v4535 = vpop.f32.mrb[0].mxu0
      %v4536 = vpop.f32.mrb[0].mxu0
      %v4537 = vadd.f32 0.0, %v4536
      %v4538 = vpop.f32.mrb[0].mxu0
      %4539 = vmatprep.mubr.bf16.mxu0 0
      %4540 = vmatmul.mubr.bf16.gmra.mrb[0].mxu0 %v4297
      %v4541 = vpop.f32.mrb[0].mxu0
      %v4542 = vadd.f32 0.0, %v4541
      %v4543 = vpop.f32.mrb[0].mxu0
      %v4544 = vpop.f32.mrb[0].mxu0
      %v4545 = vadd.f32 0.0, %v4544
      %v4546 = vpop.f32.mrb[0].mxu0
      %4547 = vmatprep.mubr.bf16.mxu0 0
      %4548 = vmatmul.mubr.bf16.gmra.mrb[0].mxu0 %v4309
      %v4549 = vpop.f32.mrb[0].mxu0
      %v4550 = vadd.f32 0.0, %v4549
      %v4551 = vpop.f32.mrb[0].mxu0
      %v4552 = vpop.f32.mrb[0].mxu0
      %v4553 = vadd.f32 0.0, %v4552
      %v4554 = vpop.f32.mrb[0].mxu0
      %4555 = vmatprep.mubr.bf16.mxu0 0
      %4556 = vmatmul.mubr.bf16.gmra.mrb[0].mxu0 %v4321
      %v4557 = vpop.f32.mrb[0].mxu0
      %v4558 = vadd.f32 0.0, %v4557
      %v4559 = vpop.f32.mrb[0].mxu0
      %v4560 = vpop.f32.mrb[0].mxu0
      %v4561 = vadd.f32 0.0, %v4560
      %v4562 = vpop.f32.mrb[0].mxu0
      %4563 = vdwg.mxu0
      %v4564 = vadd.f32 %v4004, %v4438
      %v4565 = vadd.f32 %v4007, %v4441
      %v4566 = vadd.f32 %v4012, %v4446
      %v4567 = vadd.f32 %v4015, %v4449
      %v4568 = vadd.f32 %v4020, %v4454
      %v4569 = vadd.f32 %v4023, %v4457
      %v4570 = vadd.f32 %v4028, %v4462
      %v4571 = vadd.f32 %v4031, %v4465
      %v4572 = vadd.f32 %v4036, %v4470
      %v4573 = vadd.f32 %v4039, %v4473
      %v4574 = vadd.f32 %v4044, %v4478
      %v4575 = vadd.f32 %v4047, %v4481
      %v4576 = vadd.f32 %v4052, %v4486
      %v4577 = vadd.f32 %v4055, %v4489
      %v4578 = vadd.f32 %v4060, %v4494
      %v4579 = vadd.f32 %v4063, %v4497
      %v4580 = vadd.f32 %v4068, %v4502
      %v4581 = vadd.f32 %v4071, %v4505
      %v4582 = vadd.f32 %v4076, %v4510
      %v4583 = vadd.f32 %v4079, %v4513
      %v4584 = vadd.f32 %v4084, %v4518
      %v4585 = vadd.f32 %v4087, %v4521
      %v4586 = vadd.f32 %v4092, %v4526
      %v4587 = vadd.f32 %v4095, %v4529
      %v4588 = vadd.f32 %v4100, %v4534
      %v4589 = vadd.f32 %v4103, %v4537
      %v4590 = vadd.f32 %v4108, %v4542
      %v4591 = vadd.f32 %v4111, %v4545
      %v4592 = vadd.f32 %v4116, %v4550
      %v4593 = vadd.f32 %v4119, %v4553
      %v4594 = vadd.f32 %v4124, %v4558
      %v4595 = vadd.f32 %v4127, %v4561
      %v4597 = vshrl.u32 %v3430, 16
      %v4599 = vrot.slane %v4597, 7
      %v4601 = vshrl.u32 %v3431, 16
      %v4603 = vrot.slane %v4601, 7
      %v4604 = vshll.u32 %v3431, 16
      %v4606 = vor.u32 %v4603, %v4604
      %v4607 = vsel %vm3470, %v4599, %v4606
      %s4609 = scalar_lea.vmem %s3, 192
      %v4610 = vld [vmem:[%s4609] sm:$0xf]
      %v4611 = vld [vmem:[%s4609 + $0x4] sm:$0xf]
      %v4612 = vld [vmem:[%s4609 + $0x8] sm:$0xf]
      %v4613 = vld [vmem:[%s4609 + $0xc] sm:$0xf]
      %v4614 = vld [vmem:[%s4609 + $0x10] sm:$0xf]
      %v4615 = vld [vmem:[%s4609 + $0x14] sm:$0xf]
      %v4616 = vld [vmem:[%s4609 + $0x18] sm:$0xf]
      %v4617 = vld [vmem:[%s4609 + $0x1c] sm:$0xf]
      %v4618 = vld [vmem:[%s4609 + $0x20] sm:$0xf]
      %v4619 = vld [vmem:[%s4609 + $0x24] sm:$0xf]
      %v4620 = vld [vmem:[%s4609 + $0x28] sm:$0xf]
      %v4621 = vld [vmem:[%s4609 + $0x2c] sm:$0xf]
      %v4622 = vld [vmem:[%s4609 + $0x30] sm:$0xf]
      %v4623 = vld [vmem:[%s4609 + $0x34] sm:$0xf]
      %v4624 = vld [vmem:[%s4609 + $0x38] sm:$0xf]
      %v4625 = vld [vmem:[%s4609 + $0x3c] sm:$0xf]
      %v4642 = vunpack.c.l.b16 %v4610
      %v4643 = vunpack.c.l.b16 %v4611
      %v4644 = vunpack.c.l.b16 %v4612
      %v4645 = vunpack.c.l.b16 %v4613
      %v4646 = vunpack.c.l.b16 %v4614
      %v4647 = vunpack.c.l.b16 %v4615
      %v4648 = vunpack.c.l.b16 %v4616
      %v4649 = vunpack.c.l.b16 %v4617
      %v4650 = vunpack.c.l.b16 %v4618
      %v4651 = vunpack.c.l.b16 %v4619
      %v4652 = vunpack.c.l.b16 %v4620
      %v4653 = vunpack.c.l.b16 %v4621
      %v4654 = vunpack.c.l.b16 %v4622
      %v4655 = vunpack.c.l.b16 %v4623
      %v4656 = vunpack.c.l.b16 %v4624
      %v4657 = vunpack.c.l.b16 %v4625
      %v4658 = vpack.c.b16 %v4643, %v4642
      %v4659 = vpack.c.b16 %v4645, %v4644
      %v4660 = vpack.c.b16 %v4647, %v4646
      %v4661 = vpack.c.b16 %v4649, %v4648
      %v4662 = vpack.c.b16 %v4651, %v4650
      %v4663 = vpack.c.b16 %v4653, %v4652
      %v4664 = vpack.c.b16 %v4655, %v4654
      %v4665 = vpack.c.b16 %v4657, %v4656
      %4674 = vmatprep.subr.bf16.mxu0 0
      %4675 = vmatpush1.bf16.msra.mxu0 %v4658
      %4676 = vmatprep.subr.bf16.mxu0 0
      %4677 = vmatpush1.bf16.msra.mxu0 %v4659
      %4678 = vmatprep.subr.bf16.mxu0 0
      %4679 = vmatpush1.bf16.msra.mxu0 %v4660
      %4680 = vmatprep.subr.bf16.mxu0 0
      %4681 = vmatpush1.bf16.msra.mxu0 %v4661
      %4682 = vmatprep.subr.bf16.mxu0 0
      %4683 = vmatpush1.bf16.msra.mxu0 %v4662
      %4684 = vmatprep.subr.bf16.mxu0 0
      %4685 = vmatpush1.bf16.msra.mxu0 %v4663
      %4686 = vmatprep.subr.bf16.mxu0 0
      %4687 = vmatpush1.bf16.msra.mxu0 %v4664
      %4688 = vmatprep.subr.bf16.mxu0 0
      %4689 = vmatpush1.bf16.msra.mxu0 %v4665
      %4690 = vmatprep.subr.bf16.mxu0 0
      %4691 = vmatpush1.bf16.msra.mxu0 0
      %4692 = vmatprep.subr.bf16.mxu0 0
      %4693 = vmatpush1.bf16.msra.mxu0 0
      %4694 = vmatprep.subr.bf16.mxu0 0
      %4695 = vmatpush1.bf16.msra.mxu0 0
      %4696 = vmatprep.subr.bf16.mxu0 0
      %4697 = vmatpush1.bf16.msra.mxu0 0
      %4698 = vmatprep.subr.bf16.mxu0 0
      %4699 = vmatpush1.bf16.msra.mxu0 0
      %4700 = vmatprep.subr.bf16.mxu0 0
      %4701 = vmatpush1.bf16.msra.mxu0 0
      %4702 = vmatprep.subr.bf16.mxu0 0
      %4703 = vmatpush1.bf16.msra.mxu0 0
      %4704 = vmatprep.subr.bf16.mxu0 0
      %4705 = vmatpush1.bf16.msra.mxu0 0
      %4706 = vmatprep.mubr.bf16.mxu0 0
      %4707 = vmatmul.mubr.bf16.gmra.mrb[0].mxu0 %v3494
      %v4708 = vpop.f32.mrb[0].mxu0
      %v4709 = vadd.f32 0.0, %v4708
      %v4710 = vpop.f32.mrb[0].mxu0
      %v4711 = vpop.f32.mrb[0].mxu0
      %v4712 = vadd.f32 0.0, %v4711
      %v4713 = vpop.f32.mrb[0].mxu0
      %4714 = vmatprep.mubr.bf16.mxu0 0
      %4715 = vmatmul.mubr.bf16.gmra.mrb[0].mxu0 %v3506
      %v4716 = vpop.f32.mrb[0].mxu0
      %v4717 = vadd.f32 0.0, %v4716
      %v4718 = vpop.f32.mrb[0].mxu0
      %v4719 = vpop.f32.mrb[0].mxu0
      %v4720 = vadd.f32 0.0, %v4719
      %v4721 = vpop.f32.mrb[0].mxu0
      %4722 = vmatprep.mubr.bf16.mxu0 0
      %4723 = vmatmul.mubr.bf16.gmra.mrb[0].mxu0 %v3518
      %v4724 = vpop.f32.mrb[0].mxu0
      %v4725 = vadd.f32 0.0, %v4724
      %v4726 = vpop.f32.mrb[0].mxu0
      %v4727 = vpop.f32.mrb[0].mxu0
      %v4728 = vadd.f32 0.0, %v4727
      %v4729 = vpop.f32.mrb[0].mxu0
      %4730 = vmatprep.mubr.bf16.mxu0 0
      %4731 = vmatmul.mubr.bf16.gmra.mrb[0].mxu0 %v3530
      %v4732 = vpop.f32.mrb[0].mxu0
      %v4733 = vadd.f32 0.0, %v4732
      %v4734 = vpop.f32.mrb[0].mxu0
      %v4735 = vpop.f32.mrb[0].mxu0
      %v4736 = vadd.f32 0.0, %v4735
      %v4737 = vpop.f32.mrb[0].mxu0
      %4738 = vmatprep.mubr.bf16.mxu0 0
      %4739 = vmatmul.mubr.bf16.gmra.mrb[0].mxu0 %v3542
      %v4740 = vpop.f32.mrb[0].mxu0
      %v4741 = vadd.f32 0.0, %v4740
      %v4742 = vpop.f32.mrb[0].mxu0
      %v4743 = vpop.f32.mrb[0].mxu0
      %v4744 = vadd.f32 0.0, %v4743
      %v4745 = vpop.f32.mrb[0].mxu0
      %4746 = vmatprep.mubr.bf16.mxu0 0
      %4747 = vmatmul.mubr.bf16.gmra.mrb[0].mxu0 %v3554
      %v4748 = vpop.f32.mrb[0].mxu0
      %v4749 = vadd.f32 0.0, %v4748
      %v4750 = vpop.f32.mrb[0].mxu0
      %v4751 = vpop.f32.mrb[0].mxu0
      %v4752 = vadd.f32 0.0, %v4751
      %v4753 = vpop.f32.mrb[0].mxu0
      %4754 = vmatprep.mubr.bf16.mxu0 0
      %4755 = vmatmul.mubr.bf16.gmra.mrb[0].mxu0 %v3566
      %v4756 = vpop.f32.mrb[0].mxu0
      %v4757 = vadd.f32 0.0, %v4756
      %v4758 = vpop.f32.mrb[0].mxu0
      %v4759 = vpop.f32.mrb[0].mxu0
      %v4760 = vadd.f32 0.0, %v4759
      %v4761 = vpop.f32.mrb[0].mxu0
      %4762 = vmatprep.mubr.bf16.mxu0 0
      %4763 = vmatmul.mubr.bf16.gmra.mrb[0].mxu0 %v3578
      %v4764 = vpop.f32.mrb[0].mxu0
      %v4765 = vadd.f32 0.0, %v4764
      %v4766 = vpop.f32.mrb[0].mxu0
      %v4767 = vpop.f32.mrb[0].mxu0
      %v4768 = vadd.f32 0.0, %v4767
      %v4769 = vpop.f32.mrb[0].mxu0
      %4770 = vmatprep.mubr.bf16.mxu0 0
      %4771 = vmatmul.mubr.bf16.gmra.mrb[0].mxu0 %v3590
      %v4772 = vpop.f32.mrb[0].mxu0
      %v4773 = vadd.f32 0.0, %v4772
      %v4774 = vpop.f32.mrb[0].mxu0
      %v4775 = vpop.f32.mrb[0].mxu0
      %v4776 = vadd.f32 0.0, %v4775
      %v4777 = vpop.f32.mrb[0].mxu0
      %4778 = vmatprep.mubr.bf16.mxu0 0
      %4779 = vmatmul.mubr.bf16.gmra.mrb[0].mxu0 %v3602
      %v4780 = vpop.f32.mrb[0].mxu0
      %v4781 = vadd.f32 0.0, %v4780
      %v4782 = vpop.f32.mrb[0].mxu0
      %v4783 = vpop.f32.mrb[0].mxu0
      %v4784 = vadd.f32 0.0, %v4783
      %v4785 = vpop.f32.mrb[0].mxu0
      %4786 = vmatprep.mubr.bf16.mxu0 0
      %4787 = vmatmul.mubr.bf16.gmra.mrb[0].mxu0 %v3614
      %v4788 = vpop.f32.mrb[0].mxu0
      %v4789 = vadd.f32 0.0, %v4788
      %v4790 = vpop.f32.mrb[0].mxu0
      %v4791 = vpop.f32.mrb[0].mxu0
      %v4792 = vadd.f32 0.0, %v4791
      %v4793 = vpop.f32.mrb[0].mxu0
      %4794 = vmatprep.mubr.bf16.mxu0 0
      %4795 = vmatmul.mubr.bf16.gmra.mrb[0].mxu0 %v3626
      %v4796 = vpop.f32.mrb[0].mxu0
      %v4797 = vadd.f32 0.0, %v4796
      %v4798 = vpop.f32.mrb[0].mxu0
      %v4799 = vpop.f32.mrb[0].mxu0
      %v4800 = vadd.f32 0.0, %v4799
      %v4801 = vpop.f32.mrb[0].mxu0
      %4802 = vmatprep.mubr.bf16.mxu0 0
      %4803 = vmatmul.mubr.bf16.gmra.mrb[0].mxu0 %v3638
      %v4804 = vpop.f32.mrb[0].mxu0
      %v4805 = vadd.f32 0.0, %v4804
      %v4806 = vpop.f32.mrb[0].mxu0
      %v4807 = vpop.f32.mrb[0].mxu0
      %v4808 = vadd.f32 0.0, %v4807
      %v4809 = vpop.f32.mrb[0].mxu0
      %4810 = vmatprep.mubr.bf16.mxu0 0
      %4811 = vmatmul.mubr.bf16.gmra.mrb[0].mxu0 %v3650
      %v4812 = vpop.f32.mrb[0].mxu0
      %v4813 = vadd.f32 0.0, %v4812
      %v4814 = vpop.f32.mrb[0].mxu0
      %v4815 = vpop.f32.mrb[0].mxu0
      %v4816 = vadd.f32 0.0, %v4815
      %v4817 = vpop.f32.mrb[0].mxu0
      %4818 = vmatprep.mubr.bf16.mxu0 0
      %4819 = vmatmul.mubr.bf16.gmra.mrb[0].mxu0 %v3662
      %v4820 = vpop.f32.mrb[0].mxu0
      %v4821 = vadd.f32 0.0, %v4820
      %v4822 = vpop.f32.mrb[0].mxu0
      %v4823 = vpop.f32.mrb[0].mxu0
      %v4824 = vadd.f32 0.0, %v4823
      %v4825 = vpop.f32.mrb[0].mxu0
      %4826 = vmatprep.mubr.bf16.mxu0 0
      %4827 = vmatmul.mubr.bf16.gmra.mrb[0].mxu0 %v4607
      %v4828 = vpop.f32.mrb[0].mxu0
      %v4829 = vadd.f32 0.0, %v4828
      %v4830 = vpop.f32.mrb[0].mxu0
      %v4831 = vpop.f32.mrb[0].mxu0
      %v4832 = vadd.f32 0.0, %v4831
      %v4833 = vpop.f32.mrb[0].mxu0
      %4834 = vdwg.mxu0
      %v4835 = vadd.f32 %v4564, %v4709
      %v4836 = vadd.f32 %v4565, %v4712
      %v4837 = vadd.f32 %v4566, %v4717
      %v4838 = vadd.f32 %v4567, %v4720
      %v4839 = vadd.f32 %v4568, %v4725
      %v4840 = vadd.f32 %v4569, %v4728
      %v4841 = vadd.f32 %v4570, %v4733
      %v4842 = vadd.f32 %v4571, %v4736
      %v4843 = vadd.f32 %v4572, %v4741
      %v4844 = vadd.f32 %v4573, %v4744
      %v4845 = vadd.f32 %v4574, %v4749
      %v4846 = vadd.f32 %v4575, %v4752
      %v4847 = vadd.f32 %v4576, %v4757
      %v4848 = vadd.f32 %v4577, %v4760
      %v4849 = vadd.f32 %v4578, %v4765
      %v4850 = vadd.f32 %v4579, %v4768
      %v4851 = vadd.f32 %v4580, %v4773
      %v4852 = vadd.f32 %v4581, %v4776
      %v4853 = vadd.f32 %v4582, %v4781
      %v4854 = vadd.f32 %v4583, %v4784
      %v4855 = vadd.f32 %v4584, %v4789
      %v4856 = vadd.f32 %v4585, %v4792
      %v4857 = vadd.f32 %v4586, %v4797
      %v4858 = vadd.f32 %v4587, %v4800
      %v4859 = vadd.f32 %v4588, %v4805
      %v4860 = vadd.f32 %v4589, %v4808
      %v4861 = vadd.f32 %v4590, %v4813
      %v4862 = vadd.f32 %v4591, %v4816
      %v4863 = vadd.f32 %v4592, %v4821
      %v4864 = vadd.f32 %v4593, %v4824
      %v4865 = vadd.f32 %v4594, %v4829
      %v4866 = vadd.f32 %v4595, %v4832
      %s4867 = scalar_lea.vmem %s3, 256
      %v4868 = vld [vmem:[%s4867] sm:$0xf]
      %v4869 = vld [vmem:[%s4867 + $0x4] sm:$0xf]
      %v4870 = vld [vmem:[%s4867 + $0x8] sm:$0xf]
      %v4871 = vld [vmem:[%s4867 + $0xc] sm:$0xf]
      %v4872 = vld [vmem:[%s4867 + $0x10] sm:$0xf]
      %v4873 = vld [vmem:[%s4867 + $0x14] sm:$0xf]
      %v4874 = vld [vmem:[%s4867 + $0x18] sm:$0xf]
      %v4875 = vld [vmem:[%s4867 + $0x1c] sm:$0xf]
      %v4876 = vld [vmem:[%s4867 + $0x20] sm:$0xf]
      %v4877 = vld [vmem:[%s4867 + $0x24] sm:$0xf]
      %v4878 = vld [vmem:[%s4867 + $0x28] sm:$0xf]
      %v4879 = vld [vmem:[%s4867 + $0x2c] sm:$0xf]
      %v4880 = vld [vmem:[%s4867 + $0x30] sm:$0xf]
      %v4881 = vld [vmem:[%s4867 + $0x34] sm:$0xf]
      %v4882 = vld [vmem:[%s4867 + $0x38] sm:$0xf]
      %v4883 = vld [vmem:[%s4867 + $0x3c] sm:$0xf]
      %v4900 = vunpack.c.l.b16 %v4868
      %v4901 = vunpack.c.l.b16 %v4869
      %v4902 = vunpack.c.l.b16 %v4870
      %v4903 = vunpack.c.l.b16 %v4871
      %v4904 = vunpack.c.l.b16 %v4872
      %v4905 = vunpack.c.l.b16 %v4873
      %v4906 = vunpack.c.l.b16 %v4874
      %v4907 = vunpack.c.l.b16 %v4875
      %v4908 = vunpack.c.l.b16 %v4876
      %v4909 = vunpack.c.l.b16 %v4877
      %v4910 = vunpack.c.l.b16 %v4878
      %v4911 = vunpack.c.l.b16 %v4879
      %v4912 = vunpack.c.l.b16 %v4880
      %v4913 = vunpack.c.l.b16 %v4881
      %v4914 = vunpack.c.l.b16 %v4882
      %v4915 = vunpack.c.l.b16 %v4883
      %v4916 = vpack.c.b16 %v4901, %v4900
      %v4917 = vpack.c.b16 %v4903, %v4902
      %v4918 = vpack.c.b16 %v4905, %v4904
      %v4919 = vpack.c.b16 %v4907, %v4906
      %v4920 = vpack.c.b16 %v4909, %v4908
      %v4921 = vpack.c.b16 %v4911, %v4910
      %v4922 = vpack.c.b16 %v4913, %v4912
      %v4923 = vpack.c.b16 %v4915, %v4914
      %4932 = vmatprep.subr.bf16.mxu0 0
      %4933 = vmatpush1.bf16.msra.mxu0 %v4916
      %4934 = vmatprep.subr.bf16.mxu0 0
      %4935 = vmatpush1.bf16.msra.mxu0 %v4917
      %4936 = vmatprep.subr.bf16.mxu0 0
      %4937 = vmatpush1.bf16.msra.mxu0 %v4918
      %4938 = vmatprep.subr.bf16.mxu0 0
      %4939 = vmatpush1.bf16.msra.mxu0 %v4919
      %4940 = vmatprep.subr.bf16.mxu0 0
      %4941 = vmatpush1.bf16.msra.mxu0 %v4920
      %4942 = vmatprep.subr.bf16.mxu0 0
      %4943 = vmatpush1.bf16.msra.mxu0 %v4921
      %4944 = vmatprep.subr.bf16.mxu0 0
      %4945 = vmatpush1.bf16.msra.mxu0 %v4922
      %4946 = vmatprep.subr.bf16.mxu0 0
      %4947 = vmatpush1.bf16.msra.mxu0 %v4923
      %4948 = vmatprep.subr.bf16.mxu0 0
      %4949 = vmatpush1.bf16.msra.mxu0 0
      %4950 = vmatprep.subr.bf16.mxu0 0
      %4951 = vmatpush1.bf16.msra.mxu0 0
      %4952 = vmatprep.subr.bf16.mxu0 0
      %4953 = vmatpush1.bf16.msra.mxu0 0
      %4954 = vmatprep.subr.bf16.mxu0 0
      %4955 = vmatpush1.bf16.msra.mxu0 0
      %4956 = vmatprep.subr.bf16.mxu0 0
      %4957 = vmatpush1.bf16.msra.mxu0 0
      %4958 = vmatprep.subr.bf16.mxu0 0
      %4959 = vmatpush1.bf16.msra.mxu0 0
      %4960 = vmatprep.subr.bf16.mxu0 0
      %4961 = vmatpush1.bf16.msra.mxu0 0
      %4962 = vmatprep.subr.bf16.mxu0 0
      %4963 = vmatpush1.bf16.msra.mxu0 0
      %4964 = vmatprep.mubr.bf16.mxu0 0
      %4965 = vmatmul.mubr.bf16.gmra.mrb[0].mxu0 %v3401
      %v4966 = vpop.f32.mrb[0].mxu0
      %v4967 = vadd.f32 0.0, %v4966
      %v4968 = vpop.f32.mrb[0].mxu0
      %v4969 = vpop.f32.mrb[0].mxu0
      %v4970 = vadd.f32 0.0, %v4969
      %v4971 = vpop.f32.mrb[0].mxu0
      %4972 = vmatprep.mubr.bf16.mxu0 0
      %4973 = vmatmul.mubr.bf16.gmra.mrb[0].mxu0 %v3403
      %v4974 = vpop.f32.mrb[0].mxu0
      %v4975 = vadd.f32 0.0, %v4974
      %v4976 = vpop.f32.mrb[0].mxu0
      %v4977 = vpop.f32.mrb[0].mxu0
      %v4978 = vadd.f32 0.0, %v4977
      %v4979 = vpop.f32.mrb[0].mxu0
      %4980 = vmatprep.mubr.bf16.mxu0 0
      %4981 = vmatmul.mubr.bf16.gmra.mrb[0].mxu0 %v3405
      %v4982 = vpop.f32.mrb[0].mxu0
      %v4983 = vadd.f32 0.0, %v4982
      %v4984 = vpop.f32.mrb[0].mxu0
      %v4985 = vpop.f32.mrb[0].mxu0
      %v4986 = vadd.f32 0.0, %v4985
      %v4987 = vpop.f32.mrb[0].mxu0
      %4988 = vmatprep.mubr.bf16.mxu0 0
      %4989 = vmatmul.mubr.bf16.gmra.mrb[0].mxu0 %v3407
      %v4990 = vpop.f32.mrb[0].mxu0
      %v4991 = vadd.f32 0.0, %v4990
      %v4992 = vpop.f32.mrb[0].mxu0
      %v4993 = vpop.f32.mrb[0].mxu0
      %v4994 = vadd.f32 0.0, %v4993
      %v4995 = vpop.f32.mrb[0].mxu0
      %4996 = vmatprep.mubr.bf16.mxu0 0
      %4997 = vmatmul.mubr.bf16.gmra.mrb[0].mxu0 %v3409
      %v4998 = vpop.f32.mrb[0].mxu0
      %v4999 = vadd.f32 0.0, %v4998
      %v5000 = vpop.f32.mrb[0].mxu0
      %v5001 = vpop.f32.mrb[0].mxu0
      %v5002 = vadd.f32 0.0, %v5001
      %v5003 = vpop.f32.mrb[0].mxu0
      %5004 = vmatprep.mubr.bf16.mxu0 0
      %5005 = vmatmul.mubr.bf16.gmra.mrb[0].mxu0 %v3411
      %v5006 = vpop.f32.mrb[0].mxu0
      %v5007 = vadd.f32 0.0, %v5006
      %v5008 = vpop.f32.mrb[0].mxu0
      %v5009 = vpop.f32.mrb[0].mxu0
      %v5010 = vadd.f32 0.0, %v5009
      %v5011 = vpop.f32.mrb[0].mxu0
      %5012 = vmatprep.mubr.bf16.mxu0 0
      %5013 = vmatmul.mubr.bf16.gmra.mrb[0].mxu0 %v3413
      %v5014 = vpop.f32.mrb[0].mxu0
      %v5015 = vadd.f32 0.0, %v5014
      %v5016 = vpop.f32.mrb[0].mxu0
      %v5017 = vpop.f32.mrb[0].mxu0
      %v5018 = vadd.f32 0.0, %v5017
      %v5019 = vpop.f32.mrb[0].mxu0
      %5020 = vmatprep.mubr.bf16.mxu0 0
      %5021 = vmatmul.mubr.bf16.gmra.mrb[0].mxu0 %v3415
      %v5022 = vpop.f32.mrb[0].mxu0
      %v5023 = vadd.f32 0.0, %v5022
      %v5024 = vpop.f32.mrb[0].mxu0
      %v5025 = vpop.f32.mrb[0].mxu0
      %v5026 = vadd.f32 0.0, %v5025
      %v5027 = vpop.f32.mrb[0].mxu0
      %5028 = vmatprep.mubr.bf16.mxu0 0
      %5029 = vmatmul.mubr.bf16.gmra.mrb[0].mxu0 %v3417
      %v5030 = vpop.f32.mrb[0].mxu0
      %v5031 = vadd.f32 0.0, %v5030
      %v5032 = vpop.f32.mrb[0].mxu0
      %v5033 = vpop.f32.mrb[0].mxu0
      %v5034 = vadd.f32 0.0, %v5033
      %v5035 = vpop.f32.mrb[0].mxu0
      %5036 = vmatprep.mubr.bf16.mxu0 0
      %5037 = vmatmul.mubr.bf16.gmra.mrb[0].mxu0 %v3419
      %v5038 = vpop.f32.mrb[0].mxu0
      %v5039 = vadd.f32 0.0, %v5038
      %v5040 = vpop.f32.mrb[0].mxu0
      %v5041 = vpop.f32.mrb[0].mxu0
      %v5042 = vadd.f32 0.0, %v5041
      %v5043 = vpop.f32.mrb[0].mxu0
      %5044 = vmatprep.mubr.bf16.mxu0 0
      %5045 = vmatmul.mubr.bf16.gmra.mrb[0].mxu0 %v3421
      %v5046 = vpop.f32.mrb[0].mxu0
      %v5047 = vadd.f32 0.0, %v5046
      %v5048 = vpop.f32.mrb[0].mxu0
      %v5049 = vpop.f32.mrb[0].mxu0
      %v5050 = vadd.f32 0.0, %v5049
      %v5051 = vpop.f32.mrb[0].mxu0
      %5052 = vmatprep.mubr.bf16.mxu0 0
      %5053 = vmatmul.mubr.bf16.gmra.mrb[0].mxu0 %v3423
      %v5054 = vpop.f32.mrb[0].mxu0
      %v5055 = vadd.f32 0.0, %v5054
      %v5056 = vpop.f32.mrb[0].mxu0
      %v5057 = vpop.f32.mrb[0].mxu0
      %v5058 = vadd.f32 0.0, %v5057
      %v5059 = vpop.f32.mrb[0].mxu0
      %5060 = vmatprep.mubr.bf16.mxu0 0
      %5061 = vmatmul.mubr.bf16.gmra.mrb[0].mxu0 %v3425
      %v5062 = vpop.f32.mrb[0].mxu0
      %v5063 = vadd.f32 0.0, %v5062
      %v5064 = vpop.f32.mrb[0].mxu0
      %v5065 = vpop.f32.mrb[0].mxu0
      %v5066 = vadd.f32 0.0, %v5065
      %v5067 = vpop.f32.mrb[0].mxu0
      %5068 = vmatprep.mubr.bf16.mxu0 0
      %5069 = vmatmul.mubr.bf16.gmra.mrb[0].mxu0 %v3427
      %v5070 = vpop.f32.mrb[0].mxu0
      %v5071 = vadd.f32 0.0, %v5070
      %v5072 = vpop.f32.mrb[0].mxu0
      %v5073 = vpop.f32.mrb[0].mxu0
      %v5074 = vadd.f32 0.0, %v5073
      %v5075 = vpop.f32.mrb[0].mxu0
      %5076 = vmatprep.mubr.bf16.mxu0 0
      %5077 = vmatmul.mubr.bf16.gmra.mrb[0].mxu0 %v3429
      %v5078 = vpop.f32.mrb[0].mxu0
      %v5079 = vadd.f32 0.0, %v5078
      %v5080 = vpop.f32.mrb[0].mxu0
      %v5081 = vpop.f32.mrb[0].mxu0
      %v5082 = vadd.f32 0.0, %v5081
      %v5083 = vpop.f32.mrb[0].mxu0
      %5084 = vmatprep.mubr.bf16.mxu0 0
      %5085 = vmatmul.mubr.bf16.gmra.mrb[0].mxu0 %v3431
      %v5086 = vpop.f32.mrb[0].mxu0
      %v5087 = vadd.f32 0.0, %v5086
      %v5088 = vpop.f32.mrb[0].mxu0
      %v5089 = vpop.f32.mrb[0].mxu0
      %v5090 = vadd.f32 0.0, %v5089
      %v5091 = vpop.f32.mrb[0].mxu0
      %5092 = vdwg.mxu0
      %v5093 = vadd.f32 %v4835, %v4967
      %v5094 = vadd.f32 %v4836, %v4970
      %v5095 = vadd.f32 %v4837, %v4975
      %v5096 = vadd.f32 %v4838, %v4978
      %v5097 = vadd.f32 %v4839, %v4983
      %v5098 = vadd.f32 %v4840, %v4986
      %v5099 = vadd.f32 %v4841, %v4991
      %v5100 = vadd.f32 %v4842, %v4994
      %v5101 = vadd.f32 %v4843, %v4999
      %v5102 = vadd.f32 %v4844, %v5002
      %v5103 = vadd.f32 %v4845, %v5007
      %v5104 = vadd.f32 %v4846, %v5010
      %v5105 = vadd.f32 %v4847, %v5015
      %v5106 = vadd.f32 %v4848, %v5018
      %v5107 = vadd.f32 %v4849, %v5023
      %v5108 = vadd.f32 %v4850, %v5026
      %v5109 = vadd.f32 %v4851, %v5031
      %v5110 = vadd.f32 %v4852, %v5034
      %v5111 = vadd.f32 %v4853, %v5039
      %v5112 = vadd.f32 %v4854, %v5042
      %v5113 = vadd.f32 %v4855, %v5047
      %v5114 = vadd.f32 %v4856, %v5050
      %v5115 = vadd.f32 %v4857, %v5055
      %v5116 = vadd.f32 %v4858, %v5058
      %v5117 = vadd.f32 %v4859, %v5063
      %v5118 = vadd.f32 %v4860, %v5066
      %v5119 = vadd.f32 %v4861, %v5071
      %v5120 = vadd.f32 %v4862, %v5074
      %v5121 = vadd.f32 %v4863, %v5079
      %v5122 = vadd.f32 %v4864, %v5082
      %v5123 = vadd.f32 %v4865, %v5087
      %v5124 = vadd.f32 %v4866, %v5090
      %v5126 = vshrl.u32 %v3466, 16
      %v5128 = vshll.u32 %v3466, 16
      %v5130 = vrot.slane %v5128, 1
      %v5131 = vor.u32 %v5126, %v5130
      %v5133 = vshll.u32 %v3467, 16
      %v5135 = vrot.slane %v5133, 1
      %v5136 = vsel %vm441, %v5131, %v5135
      %s5138 = scalar_lea.vmem %s3, 320
      %v5139 = vld [vmem:[%s5138] sm:$0xf]
      %v5140 = vld [vmem:[%s5138 + $0x4] sm:$0xf]
      %v5141 = vld [vmem:[%s5138 + $0x8] sm:$0xf]
      %v5142 = vld [vmem:[%s5138 + $0xc] sm:$0xf]
      %v5143 = vld [vmem:[%s5138 + $0x10] sm:$0xf]
      %v5144 = vld [vmem:[%s5138 + $0x14] sm:$0xf]
      %v5145 = vld [vmem:[%s5138 + $0x18] sm:$0xf]
      %v5146 = vld [vmem:[%s5138 + $0x1c] sm:$0xf]
      %v5147 = vld [vmem:[%s5138 + $0x20] sm:$0xf]
      %v5148 = vld [vmem:[%s5138 + $0x24] sm:$0xf]
      %v5149 = vld [vmem:[%s5138 + $0x28] sm:$0xf]
      %v5150 = vld [vmem:[%s5138 + $0x2c] sm:$0xf]
      %v5151 = vld [vmem:[%s5138 + $0x30] sm:$0xf]
      %v5152 = vld [vmem:[%s5138 + $0x34] sm:$0xf]
      %v5153 = vld [vmem:[%s5138 + $0x38] sm:$0xf]
      %v5154 = vld [vmem:[%s5138 + $0x3c] sm:$0xf]
      %v5171 = vunpack.c.l.b16 %v5139
      %v5172 = vunpack.c.l.b16 %v5140
      %v5173 = vunpack.c.l.b16 %v5141
      %v5174 = vunpack.c.l.b16 %v5142
      %v5175 = vunpack.c.l.b16 %v5143
      %v5176 = vunpack.c.l.b16 %v5144
      %v5177 = vunpack.c.l.b16 %v5145
      %v5178 = vunpack.c.l.b16 %v5146
      %v5179 = vunpack.c.l.b16 %v5147
      %v5180 = vunpack.c.l.b16 %v5148
      %v5181 = vunpack.c.l.b16 %v5149
      %v5182 = vunpack.c.l.b16 %v5150
      %v5183 = vunpack.c.l.b16 %v5151
      %v5184 = vunpack.c.l.b16 %v5152
      %v5185 = vunpack.c.l.b16 %v5153
      %v5186 = vunpack.c.l.b16 %v5154
      %v5187 = vpack.c.b16 %v5172, %v5171
      %v5188 = vpack.c.b16 %v5174, %v5173
      %v5189 = vpack.c.b16 %v5176, %v5175
      %v5190 = vpack.c.b16 %v5178, %v5177
      %v5191 = vpack.c.b16 %v5180, %v5179
      %v5192 = vpack.c.b16 %v5182, %v5181
      %v5193 = vpack.c.b16 %v5184, %v5183
      %v5194 = vpack.c.b16 %v5186, %v5185
      %5203 = vmatprep.subr.bf16.mxu0 0
      %5204 = vmatpush1.bf16.msra.mxu0 %v5187
      %5205 = vmatprep.subr.bf16.mxu0 0
      %5206 = vmatpush1.bf16.msra.mxu0 %v5188
      %5207 = vmatprep.subr.bf16.mxu0 0
      %5208 = vmatpush1.bf16.msra.mxu0 %v5189
      %5209 = vmatprep.subr.bf16.mxu0 0
      %5210 = vmatpush1.bf16.msra.mxu0 %v5190
      %5211 = vmatprep.subr.bf16.mxu0 0
      %5212 = vmatpush1.bf16.msra.mxu0 %v5191
      %5213 = vmatprep.subr.bf16.mxu0 0
      %5214 = vmatpush1.bf16.msra.mxu0 %v5192
      %5215 = vmatprep.subr.bf16.mxu0 0
      %5216 = vmatpush1.bf16.msra.mxu0 %v5193
      %5217 = vmatprep.subr.bf16.mxu0 0
      %5218 = vmatpush1.bf16.msra.mxu0 %v5194
      %5219 = vmatprep.subr.bf16.mxu0 0
      %5220 = vmatpush1.bf16.msra.mxu0 0
      %5221 = vmatprep.subr.bf16.mxu0 0
      %5222 = vmatpush1.bf16.msra.mxu0 0
      %5223 = vmatprep.subr.bf16.mxu0 0
      %5224 = vmatpush1.bf16.msra.mxu0 0
      %5225 = vmatprep.subr.bf16.mxu0 0
      %5226 = vmatpush1.bf16.msra.mxu0 0
      %5227 = vmatprep.subr.bf16.mxu0 0
      %5228 = vmatpush1.bf16.msra.mxu0 0
      %5229 = vmatprep.subr.bf16.mxu0 0
      %5230 = vmatpush1.bf16.msra.mxu0 0
      %5231 = vmatprep.subr.bf16.mxu0 0
      %5232 = vmatpush1.bf16.msra.mxu0 0
      %5233 = vmatprep.subr.bf16.mxu0 0
      %5234 = vmatpush1.bf16.msra.mxu0 0
      %5235 = vmatprep.mubr.bf16.mxu0 0
      %5236 = vmatmul.mubr.bf16.gmra.mrb[0].mxu0 %v4153
      %v5237 = vpop.f32.mrb[0].mxu0
      %v5238 = vadd.f32 0.0, %v5237
      %v5239 = vpop.f32.mrb[0].mxu0
      %v5240 = vpop.f32.mrb[0].mxu0
      %v5241 = vadd.f32 0.0, %v5240
      %v5242 = vpop.f32.mrb[0].mxu0
      %5243 = vmatprep.mubr.bf16.mxu0 0
      %5244 = vmatmul.mubr.bf16.gmra.mrb[0].mxu0 %v4165
      %v5245 = vpop.f32.mrb[0].mxu0
      %v5246 = vadd.f32 0.0, %v5245
      %v5247 = vpop.f32.mrb[0].mxu0
      %v5248 = vpop.f32.mrb[0].mxu0
      %v5249 = vadd.f32 0.0, %v5248
      %v5250 = vpop.f32.mrb[0].mxu0
      %5251 = vmatprep.mubr.bf16.mxu0 0
      %5252 = vmatmul.mubr.bf16.gmra.mrb[0].mxu0 %v4177
      %v5253 = vpop.f32.mrb[0].mxu0
      %v5254 = vadd.f32 0.0, %v5253
      %v5255 = vpop.f32.mrb[0].mxu0
      %v5256 = vpop.f32.mrb[0].mxu0
      %v5257 = vadd.f32 0.0, %v5256
      %v5258 = vpop.f32.mrb[0].mxu0
      %5259 = vmatprep.mubr.bf16.mxu0 0
      %5260 = vmatmul.mubr.bf16.gmra.mrb[0].mxu0 %v4189
      %v5261 = vpop.f32.mrb[0].mxu0
      %v5262 = vadd.f32 0.0, %v5261
      %v5263 = vpop.f32.mrb[0].mxu0
      %v5264 = vpop.f32.mrb[0].mxu0
      %v5265 = vadd.f32 0.0, %v5264
      %v5266 = vpop.f32.mrb[0].mxu0
      %5267 = vmatprep.mubr.bf16.mxu0 0
      %5268 = vmatmul.mubr.bf16.gmra.mrb[0].mxu0 %v4201
      %v5269 = vpop.f32.mrb[0].mxu0
      %v5270 = vadd.f32 0.0, %v5269
      %v5271 = vpop.f32.mrb[0].mxu0
      %v5272 = vpop.f32.mrb[0].mxu0
      %v5273 = vadd.f32 0.0, %v5272
      %v5274 = vpop.f32.mrb[0].mxu0
      %5275 = vmatprep.mubr.bf16.mxu0 0
      %5276 = vmatmul.mubr.bf16.gmra.mrb[0].mxu0 %v4213
      %v5277 = vpop.f32.mrb[0].mxu0
      %v5278 = vadd.f32 0.0, %v5277
      %v5279 = vpop.f32.mrb[0].mxu0
      %v5280 = vpop.f32.mrb[0].mxu0
      %v5281 = vadd.f32 0.0, %v5280
      %v5282 = vpop.f32.mrb[0].mxu0
      %5283 = vmatprep.mubr.bf16.mxu0 0
      %5284 = vmatmul.mubr.bf16.gmra.mrb[0].mxu0 %v4225
      %v5285 = vpop.f32.mrb[0].mxu0
      %v5286 = vadd.f32 0.0, %v5285
      %v5287 = vpop.f32.mrb[0].mxu0
      %v5288 = vpop.f32.mrb[0].mxu0
      %v5289 = vadd.f32 0.0, %v5288
      %v5290 = vpop.f32.mrb[0].mxu0
      %5291 = vmatprep.mubr.bf16.mxu0 0
      %5292 = vmatmul.mubr.bf16.gmra.mrb[0].mxu0 %v4237
      %v5293 = vpop.f32.mrb[0].mxu0
      %v5294 = vadd.f32 0.0, %v5293
      %v5295 = vpop.f32.mrb[0].mxu0
      %v5296 = vpop.f32.mrb[0].mxu0
      %v5297 = vadd.f32 0.0, %v5296
      %v5298 = vpop.f32.mrb[0].mxu0
      %5299 = vmatprep.mubr.bf16.mxu0 0
      %5300 = vmatmul.mubr.bf16.gmra.mrb[0].mxu0 %v4249
      %v5301 = vpop.f32.mrb[0].mxu0
      %v5302 = vadd.f32 0.0, %v5301
      %v5303 = vpop.f32.mrb[0].mxu0
      %v5304 = vpop.f32.mrb[0].mxu0
      %v5305 = vadd.f32 0.0, %v5304
      %v5306 = vpop.f32.mrb[0].mxu0
      %5307 = vmatprep.mubr.bf16.mxu0 0
      %5308 = vmatmul.mubr.bf16.gmra.mrb[0].mxu0 %v4261
      %v5309 = vpop.f32.mrb[0].mxu0
      %v5310 = vadd.f32 0.0, %v5309
      %v5311 = vpop.f32.mrb[0].mxu0
      %v5312 = vpop.f32.mrb[0].mxu0
      %v5313 = vadd.f32 0.0, %v5312
      %v5314 = vpop.f32.mrb[0].mxu0
      %5315 = vmatprep.mubr.bf16.mxu0 0
      %5316 = vmatmul.mubr.bf16.gmra.mrb[0].mxu0 %v4273
      %v5317 = vpop.f32.mrb[0].mxu0
      %v5318 = vadd.f32 0.0, %v5317
      %v5319 = vpop.f32.mrb[0].mxu0
      %v5320 = vpop.f32.mrb[0].mxu0
      %v5321 = vadd.f32 0.0, %v5320
      %v5322 = vpop.f32.mrb[0].mxu0
      %5323 = vmatprep.mubr.bf16.mxu0 0
      %5324 = vmatmul.mubr.bf16.gmra.mrb[0].mxu0 %v4285
      %v5325 = vpop.f32.mrb[0].mxu0
      %v5326 = vadd.f32 0.0, %v5325
      %v5327 = vpop.f32.mrb[0].mxu0
      %v5328 = vpop.f32.mrb[0].mxu0
      %v5329 = vadd.f32 0.0, %v5328
      %v5330 = vpop.f32.mrb[0].mxu0
      %5331 = vmatprep.mubr.bf16.mxu0 0
      %5332 = vmatmul.mubr.bf16.gmra.mrb[0].mxu0 %v4297
      %v5333 = vpop.f32.mrb[0].mxu0
      %v5334 = vadd.f32 0.0, %v5333
      %v5335 = vpop.f32.mrb[0].mxu0
      %v5336 = vpop.f32.mrb[0].mxu0
      %v5337 = vadd.f32 0.0, %v5336
      %v5338 = vpop.f32.mrb[0].mxu0
      %5339 = vmatprep.mubr.bf16.mxu0 0
      %5340 = vmatmul.mubr.bf16.gmra.mrb[0].mxu0 %v4309
      %v5341 = vpop.f32.mrb[0].mxu0
      %v5342 = vadd.f32 0.0, %v5341
      %v5343 = vpop.f32.mrb[0].mxu0
      %v5344 = vpop.f32.mrb[0].mxu0
      %v5345 = vadd.f32 0.0, %v5344
      %v5346 = vpop.f32.mrb[0].mxu0
      %5347 = vmatprep.mubr.bf16.mxu0 0
      %5348 = vmatmul.mubr.bf16.gmra.mrb[0].mxu0 %v4321
      %v5349 = vpop.f32.mrb[0].mxu0
      %v5350 = vadd.f32 0.0, %v5349
      %v5351 = vpop.f32.mrb[0].mxu0
      %v5352 = vpop.f32.mrb[0].mxu0
      %v5353 = vadd.f32 0.0, %v5352
      %v5354 = vpop.f32.mrb[0].mxu0
      %5355 = vmatprep.mubr.bf16.mxu0 0
      %5356 = vmatmul.mubr.bf16.gmra.mrb[0].mxu0 %v5136
      %v5357 = vpop.f32.mrb[0].mxu0
      %v5358 = vadd.f32 0.0, %v5357
      %v5359 = vpop.f32.mrb[0].mxu0
      %v5360 = vpop.f32.mrb[0].mxu0
      %v5361 = vadd.f32 0.0, %v5360
      %v5362 = vpop.f32.mrb[0].mxu0
      %5363 = vdwg.mxu0
      %v5364 = vadd.f32 %v5093, %v5238
      %v5365 = vadd.f32 %v5094, %v5241
      %v5366 = vadd.f32 %v5095, %v5246
      %v5367 = vadd.f32 %v5096, %v5249
      %v5368 = vadd.f32 %v5097, %v5254
      %v5369 = vadd.f32 %v5098, %v5257
      %v5370 = vadd.f32 %v5099, %v5262
      %v5371 = vadd.f32 %v5100, %v5265
      %v5372 = vadd.f32 %v5101, %v5270
      %v5373 = vadd.f32 %v5102, %v5273
      %v5374 = vadd.f32 %v5103, %v5278
      %v5375 = vadd.f32 %v5104, %v5281
      %v5376 = vadd.f32 %v5105, %v5286
      %v5377 = vadd.f32 %v5106, %v5289
      %v5378 = vadd.f32 %v5107, %v5294
      %v5379 = vadd.f32 %v5108, %v5297
      %v5380 = vadd.f32 %v5109, %v5302
      %v5381 = vadd.f32 %v5110, %v5305
      %v5382 = vadd.f32 %v5111, %v5310
      %v5383 = vadd.f32 %v5112, %v5313
      %v5384 = vadd.f32 %v5113, %v5318
      %v5385 = vadd.f32 %v5114, %v5321
      %v5386 = vadd.f32 %v5115, %v5326
      %v5387 = vadd.f32 %v5116, %v5329
      %v5388 = vadd.f32 %v5117, %v5334
      %v5389 = vadd.f32 %v5118, %v5337
      %v5390 = vadd.f32 %v5119, %v5342
      %v5391 = vadd.f32 %v5120, %v5345
      %v5392 = vadd.f32 %v5121, %v5350
      %v5393 = vadd.f32 %v5122, %v5353
      %v5394 = vadd.f32 %v5123, %v5358
      %v5395 = vadd.f32 %v5124, %v5361
      %v5397 = vshrl.u32 %v3432, 16
      %v5399 = vrot.slane %v5397, 7
      %v5401 = vshrl.u32 %v3433, 16
      %v5403 = vrot.slane %v5401, 7
      %v5404 = vshll.u32 %v3433, 16
      %v5406 = vor.u32 %v5403, %v5404
      %v5407 = vsel %vm3470, %v5399, %v5406
      %s5409 = scalar_lea.vmem %s3, 384
      %v5410 = vld [vmem:[%s5409] sm:$0xf]
      %v5411 = vld [vmem:[%s5409 + $0x4] sm:$0xf]
      %v5412 = vld [vmem:[%s5409 + $0x8] sm:$0xf]
      %v5413 = vld [vmem:[%s5409 + $0xc] sm:$0xf]
      %v5414 = vld [vmem:[%s5409 + $0x10] sm:$0xf]
      %v5415 = vld [vmem:[%s5409 + $0x14] sm:$0xf]
      %v5416 = vld [vmem:[%s5409 + $0x18] sm:$0xf]
      %v5417 = vld [vmem:[%s5409 + $0x1c] sm:$0xf]
      %v5418 = vld [vmem:[%s5409 + $0x20] sm:$0xf]
      %v5419 = vld [vmem:[%s5409 + $0x24] sm:$0xf]
      %v5420 = vld [vmem:[%s5409 + $0x28] sm:$0xf]
      %v5421 = vld [vmem:[%s5409 + $0x2c] sm:$0xf]
      %v5422 = vld [vmem:[%s5409 + $0x30] sm:$0xf]
      %v5423 = vld [vmem:[%s5409 + $0x34] sm:$0xf]
      %v5424 = vld [vmem:[%s5409 + $0x38] sm:$0xf]
      %v5425 = vld [vmem:[%s5409 + $0x3c] sm:$0xf]
      %v5442 = vunpack.c.l.b16 %v5410
      %v5443 = vunpack.c.l.b16 %v5411
      %v5444 = vunpack.c.l.b16 %v5412
      %v5445 = vunpack.c.l.b16 %v5413
      %v5446 = vunpack.c.l.b16 %v5414
      %v5447 = vunpack.c.l.b16 %v5415
      %v5448 = vunpack.c.l.b16 %v5416
      %v5449 = vunpack.c.l.b16 %v5417
      %v5450 = vunpack.c.l.b16 %v5418
      %v5451 = vunpack.c.l.b16 %v5419
      %v5452 = vunpack.c.l.b16 %v5420
      %v5453 = vunpack.c.l.b16 %v5421
      %v5454 = vunpack.c.l.b16 %v5422
      %v5455 = vunpack.c.l.b16 %v5423
      %v5456 = vunpack.c.l.b16 %v5424
      %v5457 = vunpack.c.l.b16 %v5425
      %v5458 = vpack.c.b16 %v5443, %v5442
      %v5459 = vpack.c.b16 %v5445, %v5444
      %v5460 = vpack.c.b16 %v5447, %v5446
      %v5461 = vpack.c.b16 %v5449, %v5448
      %v5462 = vpack.c.b16 %v5451, %v5450
      %v5463 = vpack.c.b16 %v5453, %v5452
      %v5464 = vpack.c.b16 %v5455, %v5454
      %v5465 = vpack.c.b16 %v5457, %v5456
      %5474 = vmatprep.subr.bf16.mxu0 0
      %5475 = vmatpush1.bf16.msra.mxu0 %v5458
      %5476 = vmatprep.subr.bf16.mxu0 0
      %5477 = vmatpush1.bf16.msra.mxu0 %v5459
      %5478 = vmatprep.subr.bf16.mxu0 0
      %5479 = vmatpush1.bf16.msra.mxu0 %v5460
      %5480 = vmatprep.subr.bf16.mxu0 0
      %5481 = vmatpush1.bf16.msra.mxu0 %v5461
      %5482 = vmatprep.subr.bf16.mxu0 0
      %5483 = vmatpush1.bf16.msra.mxu0 %v5462
      %5484 = vmatprep.subr.bf16.mxu0 0
      %5485 = vmatpush1.bf16.msra.mxu0 %v5463
      %5486 = vmatprep.subr.bf16.mxu0 0
      %5487 = vmatpush1.bf16.msra.mxu0 %v5464
      %5488 = vmatprep.subr.bf16.mxu0 0
      %5489 = vmatpush1.bf16.msra.mxu0 %v5465
      %5490 = vmatprep.subr.bf16.mxu0 0
      %5491 = vmatpush1.bf16.msra.mxu0 0
      %5492 = vmatprep.subr.bf16.mxu0 0
      %5493 = vmatpush1.bf16.msra.mxu0 0
      %5494 = vmatprep.subr.bf16.mxu0 0
      %5495 = vmatpush1.bf16.msra.mxu0 0
      %5496 = vmatprep.subr.bf16.mxu0 0
      %5497 = vmatpush1.bf16.msra.mxu0 0
      %5498 = vmatprep.subr.bf16.mxu0 0
      %5499 = vmatpush1.bf16.msra.mxu0 0
      %5500 = vmatprep.subr.bf16.mxu0 0
      %5501 = vmatpush1.bf16.msra.mxu0 0
      %5502 = vmatprep.subr.bf16.mxu0 0
      %5503 = vmatpush1.bf16.msra.mxu0 0
      %5504 = vmatprep.subr.bf16.mxu0 0
      %5505 = vmatpush1.bf16.msra.mxu0 0
      %5506 = vmatprep.mubr.bf16.mxu0 0
      %5507 = vmatmul.mubr.bf16.gmra.mrb[0].mxu0 %v3506
      %v5508 = vpop.f32.mrb[0].mxu0
      %v5509 = vadd.f32 0.0, %v5508
      %v5510 = vpop.f32.mrb[0].mxu0
      %v5511 = vpop.f32.mrb[0].mxu0
      %v5512 = vadd.f32 0.0, %v5511
      %v5513 = vpop.f32.mrb[0].mxu0
      %5514 = vmatprep.mubr.bf16.mxu0 0
      %5515 = vmatmul.mubr.bf16.gmra.mrb[0].mxu0 %v3518
      %v5516 = vpop.f32.mrb[0].mxu0
      %v5517 = vadd.f32 0.0, %v5516
      %v5518 = vpop.f32.mrb[0].mxu0
      %v5519 = vpop.f32.mrb[0].mxu0
      %v5520 = vadd.f32 0.0, %v5519
      %v5521 = vpop.f32.mrb[0].mxu0
      %5522 = vmatprep.mubr.bf16.mxu0 0
      %5523 = vmatmul.mubr.bf16.gmra.mrb[0].mxu0 %v3530
      %v5524 = vpop.f32.mrb[0].mxu0
      %v5525 = vadd.f32 0.0, %v5524
      %v5526 = vpop.f32.mrb[0].mxu0
      %v5527 = vpop.f32.mrb[0].mxu0
      %v5528 = vadd.f32 0.0, %v5527
      %v5529 = vpop.f32.mrb[0].mxu0
      %5530 = vmatprep.mubr.bf16.mxu0 0
      %5531 = vmatmul.mubr.bf16.gmra.mrb[0].mxu0 %v3542
      %v5532 = vpop.f32.mrb[0].mxu0
      %v5533 = vadd.f32 0.0, %v5532
      %v5534 = vpop.f32.mrb[0].mxu0
      %v5535 = vpop.f32.mrb[0].mxu0
      %v5536 = vadd.f32 0.0, %v5535
      %v5537 = vpop.f32.mrb[0].mxu0
      %5538 = vmatprep.mubr.bf16.mxu0 0
      %5539 = vmatmul.mubr.bf16.gmra.mrb[0].mxu0 %v3554
      %v5540 = vpop.f32.mrb[0].mxu0
      %v5541 = vadd.f32 0.0, %v5540
      %v5542 = vpop.f32.mrb[0].mxu0
      %v5543 = vpop.f32.mrb[0].mxu0
      %v5544 = vadd.f32 0.0, %v5543
      %v5545 = vpop.f32.mrb[0].mxu0
      %5546 = vmatprep.mubr.bf16.mxu0 0
      %5547 = vmatmul.mubr.bf16.gmra.mrb[0].mxu0 %v3566
      %v5548 = vpop.f32.mrb[0].mxu0
      %v5549 = vadd.f32 0.0, %v5548
      %v5550 = vpop.f32.mrb[0].mxu0
      %v5551 = vpop.f32.mrb[0].mxu0
      %v5552 = vadd.f32 0.0, %v5551
      %v5553 = vpop.f32.mrb[0].mxu0
      %5554 = vmatprep.mubr.bf16.mxu0 0
      %5555 = vmatmul.mubr.bf16.gmra.mrb[0].mxu0 %v3578
      %v5556 = vpop.f32.mrb[0].mxu0
      %v5557 = vadd.f32 0.0, %v5556
      %v5558 = vpop.f32.mrb[0].mxu0
      %v5559 = vpop.f32.mrb[0].mxu0
      %v5560 = vadd.f32 0.0, %v5559
      %v5561 = vpop.f32.mrb[0].mxu0
      %5562 = vmatprep.mubr.bf16.mxu0 0
      %5563 = vmatmul.mubr.bf16.gmra.mrb[0].mxu0 %v3590
      %v5564 = vpop.f32.mrb[0].mxu0
      %v5565 = vadd.f32 0.0, %v5564
      %v5566 = vpop.f32.mrb[0].mxu0
      %v5567 = vpop.f32.mrb[0].mxu0
      %v5568 = vadd.f32 0.0, %v5567
      %v5569 = vpop.f32.mrb[0].mxu0
      %5570 = vmatprep.mubr.bf16.mxu0 0
      %5571 = vmatmul.mubr.bf16.gmra.mrb[0].mxu0 %v3602
      %v5572 = vpop.f32.mrb[0].mxu0
      %v5573 = vadd.f32 0.0, %v5572
      %v5574 = vpop.f32.mrb[0].mxu0
      %v5575 = vpop.f32.mrb[0].mxu0
      %v5576 = vadd.f32 0.0, %v5575
      %v5577 = vpop.f32.mrb[0].mxu0
      %5578 = vmatprep.mubr.bf16.mxu0 0
      %5579 = vmatmul.mubr.bf16.gmra.mrb[0].mxu0 %v3614
      %v5580 = vpop.f32.mrb[0].mxu0
      %v5581 = vadd.f32 0.0, %v5580
      %v5582 = vpop.f32.mrb[0].mxu0
      %v5583 = vpop.f32.mrb[0].mxu0
      %v5584 = vadd.f32 0.0, %v5583
      %v5585 = vpop.f32.mrb[0].mxu0
      %5586 = vmatprep.mubr.bf16.mxu0 0
      %5587 = vmatmul.mubr.bf16.gmra.mrb[0].mxu0 %v3626
      %v5588 = vpop.f32.mrb[0].mxu0
      %v5589 = vadd.f32 0.0, %v5588
      %v5590 = vpop.f32.mrb[0].mxu0
      %v5591 = vpop.f32.mrb[0].mxu0
      %v5592 = vadd.f32 0.0, %v5591
      %v5593 = vpop.f32.mrb[0].mxu0
      %5594 = vmatprep.mubr.bf16.mxu0 0
      %5595 = vmatmul.mubr.bf16.gmra.mrb[0].mxu0 %v3638
      %v5596 = vpop.f32.mrb[0].mxu0
      %v5597 = vadd.f32 0.0, %v5596
      %v5598 = vpop.f32.mrb[0].mxu0
      %v5599 = vpop.f32.mrb[0].mxu0
      %v5600 = vadd.f32 0.0, %v5599
      %v5601 = vpop.f32.mrb[0].mxu0
      %5602 = vmatprep.mubr.bf16.mxu0 0
      %5603 = vmatmul.mubr.bf16.gmra.mrb[0].mxu0 %v3650
      %v5604 = vpop.f32.mrb[0].mxu0
      %v5605 = vadd.f32 0.0, %v5604
      %v5606 = vpop.f32.mrb[0].mxu0
      %v5607 = vpop.f32.mrb[0].mxu0
      %v5608 = vadd.f32 0.0, %v5607
      %v5609 = vpop.f32.mrb[0].mxu0
      %5610 = vmatprep.mubr.bf16.mxu0 0
      %5611 = vmatmul.mubr.bf16.gmra.mrb[0].mxu0 %v3662
      %v5612 = vpop.f32.mrb[0].mxu0
      %v5613 = vadd.f32 0.0, %v5612
      %v5614 = vpop.f32.mrb[0].mxu0
      %v5615 = vpop.f32.mrb[0].mxu0
      %v5616 = vadd.f32 0.0, %v5615
      %v5617 = vpop.f32.mrb[0].mxu0
      %5618 = vmatprep.mubr.bf16.mxu0 0
      %5619 = vmatmul.mubr.bf16.gmra.mrb[0].mxu0 %v4607
      %v5620 = vpop.f32.mrb[0].mxu0
      %v5621 = vadd.f32 0.0, %v5620
      %v5622 = vpop.f32.mrb[0].mxu0
      %v5623 = vpop.f32.mrb[0].mxu0
      %v5624 = vadd.f32 0.0, %v5623
      %v5625 = vpop.f32.mrb[0].mxu0
      %5626 = vmatprep.mubr.bf16.mxu0 0
      %5627 = vmatmul.mubr.bf16.gmra.mrb[0].mxu0 %v5407
      %v5628 = vpop.f32.mrb[0].mxu0
      %v5629 = vadd.f32 0.0, %v5628
      %v5630 = vpop.f32.mrb[0].mxu0
      %v5631 = vpop.f32.mrb[0].mxu0
      %v5632 = vadd.f32 0.0, %v5631
      %v5633 = vpop.f32.mrb[0].mxu0
      %5634 = vdwg.mxu0
      %v5635 = vadd.f32 %v5364, %v5509
      %v5636 = vadd.f32 %v5365, %v5512
      %v5637 = vadd.f32 %v5366, %v5517
      %v5638 = vadd.f32 %v5367, %v5520
      %v5639 = vadd.f32 %v5368, %v5525
      %v5640 = vadd.f32 %v5369, %v5528
      %v5641 = vadd.f32 %v5370, %v5533
      %v5642 = vadd.f32 %v5371, %v5536
      %v5643 = vadd.f32 %v5372, %v5541
      %v5644 = vadd.f32 %v5373, %v5544
      %v5645 = vadd.f32 %v5374, %v5549
      %v5646 = vadd.f32 %v5375, %v5552
      %v5647 = vadd.f32 %v5376, %v5557
      %v5648 = vadd.f32 %v5377, %v5560
      %v5649 = vadd.f32 %v5378, %v5565
      %v5650 = vadd.f32 %v5379, %v5568
      %v5651 = vadd.f32 %v5380, %v5573
      %v5652 = vadd.f32 %v5381, %v5576
      %v5653 = vadd.f32 %v5382, %v5581
      %v5654 = vadd.f32 %v5383, %v5584
      %v5655 = vadd.f32 %v5384, %v5589
      %v5656 = vadd.f32 %v5385, %v5592
      %v5657 = vadd.f32 %v5386, %v5597
      %v5658 = vadd.f32 %v5387, %v5600
      %v5659 = vadd.f32 %v5388, %v5605
      %v5660 = vadd.f32 %v5389, %v5608
      %v5661 = vadd.f32 %v5390, %v5613
      %v5662 = vadd.f32 %v5391, %v5616
      %v5663 = vadd.f32 %v5392, %v5621
      %v5664 = vadd.f32 %v5393, %v5624
      %v5665 = vadd.f32 %v5394, %v5629
      %v5666 = vadd.f32 %v5395, %v5632
      %s5667 = scalar_lea.vmem %s3, 448
      %v5668 = vld [vmem:[%s5667] sm:$0xf]
      %v5669 = vld [vmem:[%s5667 + $0x4] sm:$0xf]
      %v5670 = vld [vmem:[%s5667 + $0x8] sm:$0xf]
      %v5671 = vld [vmem:[%s5667 + $0xc] sm:$0xf]
      %v5672 = vld [vmem:[%s5667 + $0x10] sm:$0xf]
      %v5673 = vld [vmem:[%s5667 + $0x14] sm:$0xf]
      %v5674 = vld [vmem:[%s5667 + $0x18] sm:$0xf]
      %v5675 = vld [vmem:[%s5667 + $0x1c] sm:$0xf]
      %v5676 = vld [vmem:[%s5667 + $0x20] sm:$0xf]
      %v5677 = vld [vmem:[%s5667 + $0x24] sm:$0xf]
      %v5678 = vld [vmem:[%s5667 + $0x28] sm:$0xf]
      %v5679 = vld [vmem:[%s5667 + $0x2c] sm:$0xf]
      %v5680 = vld [vmem:[%s5667 + $0x30] sm:$0xf]
      %v5681 = vld [vmem:[%s5667 + $0x34] sm:$0xf]
      %v5682 = vld [vmem:[%s5667 + $0x38] sm:$0xf]
      %v5683 = vld [vmem:[%s5667 + $0x3c] sm:$0xf]
      %v5700 = vunpack.c.l.b16 %v5668
      %v5701 = vunpack.c.l.b16 %v5669
      %v5702 = vunpack.c.l.b16 %v5670
      %v5703 = vunpack.c.l.b16 %v5671
      %v5704 = vunpack.c.l.b16 %v5672
      %v5705 = vunpack.c.l.b16 %v5673
      %v5706 = vunpack.c.l.b16 %v5674
      %v5707 = vunpack.c.l.b16 %v5675
      %v5708 = vunpack.c.l.b16 %v5676
      %v5709 = vunpack.c.l.b16 %v5677
      %v5710 = vunpack.c.l.b16 %v5678
      %v5711 = vunpack.c.l.b16 %v5679
      %v5712 = vunpack.c.l.b16 %v5680
      %v5713 = vunpack.c.l.b16 %v5681
      %v5714 = vunpack.c.l.b16 %v5682
      %v5715 = vunpack.c.l.b16 %v5683
      %v5716 = vpack.c.b16 %v5701, %v5700
      %v5717 = vpack.c.b16 %v5703, %v5702
      %v5718 = vpack.c.b16 %v5705, %v5704
      %v5719 = vpack.c.b16 %v5707, %v5706
      %v5720 = vpack.c.b16 %v5709, %v5708
      %v5721 = vpack.c.b16 %v5711, %v5710
      %v5722 = vpack.c.b16 %v5713, %v5712
      %v5723 = vpack.c.b16 %v5715, %v5714
      %5732 = vmatprep.subr.bf16.mxu0 0
      %5733 = vmatpush1.bf16.msra.mxu0 %v5716
      %5734 = vmatprep.subr.bf16.mxu0 0
      %5735 = vmatpush1.bf16.msra.mxu0 %v5717
      %5736 = vmatprep.subr.bf16.mxu0 0
      %5737 = vmatpush1.bf16.msra.mxu0 %v5718
      %5738 = vmatprep.subr.bf16.mxu0 0
      %5739 = vmatpush1.bf16.msra.mxu0 %v5719
      %5740 = vmatprep.subr.bf16.mxu0 0
      %5741 = vmatpush1.bf16.msra.mxu0 %v5720
      %5742 = vmatprep.subr.bf16.mxu0 0
      %5743 = vmatpush1.bf16.msra.mxu0 %v5721
      %5744 = vmatprep.subr.bf16.mxu0 0
      %5745 = vmatpush1.bf16.msra.mxu0 %v5722
      %5746 = vmatprep.subr.bf16.mxu0 0
      %5747 = vmatpush1.bf16.msra.mxu0 %v5723
      %5748 = vmatprep.subr.bf16.mxu0 0
      %5749 = vmatpush1.bf16.msra.mxu0 0
      %5750 = vmatprep.subr.bf16.mxu0 0
      %5751 = vmatpush1.bf16.msra.mxu0 0
      %5752 = vmatprep.subr.bf16.mxu0 0
      %5753 = vmatpush1.bf16.msra.mxu0 0
      %5754 = vmatprep.subr.bf16.mxu0 0
      %5755 = vmatpush1.bf16.msra.mxu0 0
      %5756 = vmatprep.subr.bf16.mxu0 0
      %5757 = vmatpush1.bf16.msra.mxu0 0
      %5758 = vmatprep.subr.bf16.mxu0 0
      %5759 = vmatpush1.bf16.msra.mxu0 0
      %5760 = vmatprep.subr.bf16.mxu0 0
      %5761 = vmatpush1.bf16.msra.mxu0 0
      %5762 = vmatprep.subr.bf16.mxu0 0
      %5763 = vmatpush1.bf16.msra.mxu0 0
      %5764 = vmatprep.mubr.bf16.mxu0 0
      %5765 = vmatmul.mubr.bf16.gmra.mrb[0].mxu0 %v3403
      %v5766 = vpop.f32.mrb[0].mxu0
      %v5767 = vadd.f32 0.0, %v5766
      %v5768 = vpop.f32.mrb[0].mxu0
      %v5769 = vpop.f32.mrb[0].mxu0
      %v5770 = vadd.f32 0.0, %v5769
      %v5771 = vpop.f32.mrb[0].mxu0
      %5772 = vmatprep.mubr.bf16.mxu0 0
      %5773 = vmatmul.mubr.bf16.gmra.mrb[0].mxu0 %v3405
      %v5774 = vpop.f32.mrb[0].mxu0
      %v5775 = vadd.f32 0.0, %v5774
      %v5776 = vpop.f32.mrb[0].mxu0
      %v5777 = vpop.f32.mrb[0].mxu0
      %v5778 = vadd.f32 0.0, %v5777
      %v5779 = vpop.f32.mrb[0].mxu0
      %5780 = vmatprep.mubr.bf16.mxu0 0
      %5781 = vmatmul.mubr.bf16.gmra.mrb[0].mxu0 %v3407
      %v5782 = vpop.f32.mrb[0].mxu0
      %v5783 = vadd.f32 0.0, %v5782
      %v5784 = vpop.f32.mrb[0].mxu0
      %v5785 = vpop.f32.mrb[0].mxu0
      %v5786 = vadd.f32 0.0, %v5785
      %v5787 = vpop.f32.mrb[0].mxu0
      %5788 = vmatprep.mubr.bf16.mxu0 0
      %5789 = vmatmul.mubr.bf16.gmra.mrb[0].mxu0 %v3409
      %v5790 = vpop.f32.mrb[0].mxu0
      %v5791 = vadd.f32 0.0, %v5790
      %v5792 = vpop.f32.mrb[0].mxu0
      %v5793 = vpop.f32.mrb[0].mxu0
      %v5794 = vadd.f32 0.0, %v5793
      %v5795 = vpop.f32.mrb[0].mxu0
      %5796 = vmatprep.mubr.bf16.mxu0 0
      %5797 = vmatmul.mubr.bf16.gmra.mrb[0].mxu0 %v3411
      %v5798 = vpop.f32.mrb[0].mxu0
      %v5799 = vadd.f32 0.0, %v5798
      %v5800 = vpop.f32.mrb[0].mxu0
      %v5801 = vpop.f32.mrb[0].mxu0
      %v5802 = vadd.f32 0.0, %v5801
      %v5803 = vpop.f32.mrb[0].mxu0
      %5804 = vmatprep.mubr.bf16.mxu0 0
      %5805 = vmatmul.mubr.bf16.gmra.mrb[0].mxu0 %v3413
      %v5806 = vpop.f32.mrb[0].mxu0
      %v5807 = vadd.f32 0.0, %v5806
      %v5808 = vpop.f32.mrb[0].mxu0
      %v5809 = vpop.f32.mrb[0].mxu0
      %v5810 = vadd.f32 0.0, %v5809
      %v5811 = vpop.f32.mrb[0].mxu0
      %5812 = vmatprep.mubr.bf16.mxu0 0
      %5813 = vmatmul.mubr.bf16.gmra.mrb[0].mxu0 %v3415
      %v5814 = vpop.f32.mrb[0].mxu0
      %v5815 = vadd.f32 0.0, %v5814
      %v5816 = vpop.f32.mrb[0].mxu0
      %v5817 = vpop.f32.mrb[0].mxu0
      %v5818 = vadd.f32 0.0, %v5817
      %v5819 = vpop.f32.mrb[0].mxu0
      %5820 = vmatprep.mubr.bf16.mxu0 0
      %5821 = vmatmul.mubr.bf16.gmra.mrb[0].mxu0 %v3417
      %v5822 = vpop.f32.mrb[0].mxu0
      %v5823 = vadd.f32 0.0, %v5822
      %v5824 = vpop.f32.mrb[0].mxu0
      %v5825 = vpop.f32.mrb[0].mxu0
      %v5826 = vadd.f32 0.0, %v5825
      %v5827 = vpop.f32.mrb[0].mxu0
      %5828 = vmatprep.mubr.bf16.mxu0 0
      %5829 = vmatmul.mubr.bf16.gmra.mrb[0].mxu0 %v3419
      %v5830 = vpop.f32.mrb[0].mxu0
      %v5831 = vadd.f32 0.0, %v5830
      %v5832 = vpop.f32.mrb[0].mxu0
      %v5833 = vpop.f32.mrb[0].mxu0
      %v5834 = vadd.f32 0.0, %v5833
      %v5835 = vpop.f32.mrb[0].mxu0
      %5836 = vmatprep.mubr.bf16.mxu0 0
      %5837 = vmatmul.mubr.bf16.gmra.mrb[0].mxu0 %v3421
      %v5838 = vpop.f32.mrb[0].mxu0
      %v5839 = vadd.f32 0.0, %v5838
      %v5840 = vpop.f32.mrb[0].mxu0
      %v5841 = vpop.f32.mrb[0].mxu0
      %v5842 = vadd.f32 0.0, %v5841
      %v5843 = vpop.f32.mrb[0].mxu0
      %5844 = vmatprep.mubr.bf16.mxu0 0
      %5845 = vmatmul.mubr.bf16.gmra.mrb[0].mxu0 %v3423
      %v5846 = vpop.f32.mrb[0].mxu0
      %v5847 = vadd.f32 0.0, %v5846
      %v5848 = vpop.f32.mrb[0].mxu0
      %v5849 = vpop.f32.mrb[0].mxu0
      %v5850 = vadd.f32 0.0, %v5849
      %v5851 = vpop.f32.mrb[0].mxu0
      %5852 = vmatprep.mubr.bf16.mxu0 0
      %5853 = vmatmul.mubr.bf16.gmra.mrb[0].mxu0 %v3425
      %v5854 = vpop.f32.mrb[0].mxu0
      %v5855 = vadd.f32 0.0, %v5854
      %v5856 = vpop.f32.mrb[0].mxu0
      %v5857 = vpop.f32.mrb[0].mxu0
      %v5858 = vadd.f32 0.0, %v5857
      %v5859 = vpop.f32.mrb[0].mxu0
      %5860 = vmatprep.mubr.bf16.mxu0 0
      %5861 = vmatmul.mubr.bf16.gmra.mrb[0].mxu0 %v3427
      %v5862 = vpop.f32.mrb[0].mxu0
      %v5863 = vadd.f32 0.0, %v5862
      %v5864 = vpop.f32.mrb[0].mxu0
      %v5865 = vpop.f32.mrb[0].mxu0
      %v5866 = vadd.f32 0.0, %v5865
      %v5867 = vpop.f32.mrb[0].mxu0
      %5868 = vmatprep.mubr.bf16.mxu0 0
      %5869 = vmatmul.mubr.bf16.gmra.mrb[0].mxu0 %v3429
      %v5870 = vpop.f32.mrb[0].mxu0
      %v5871 = vadd.f32 0.0, %v5870
      %v5872 = vpop.f32.mrb[0].mxu0
      %v5873 = vpop.f32.mrb[0].mxu0
      %v5874 = vadd.f32 0.0, %v5873
      %v5875 = vpop.f32.mrb[0].mxu0
      %5876 = vmatprep.mubr.bf16.mxu0 0
      %5877 = vmatmul.mubr.bf16.gmra.mrb[0].mxu0 %v3431
      %v5878 = vpop.f32.mrb[0].mxu0
      %v5879 = vadd.f32 0.0, %v5878
      %v5880 = vpop.f32.mrb[0].mxu0
      %v5881 = vpop.f32.mrb[0].mxu0
      %v5882 = vadd.f32 0.0, %v5881
      %v5883 = vpop.f32.mrb[0].mxu0
      %5884 = vmatprep.mubr.bf16.mxu0 0
      %5885 = vmatmul.mubr.bf16.gmra.mrb[0].mxu0 %v3433
      %v5886 = vpop.f32.mrb[0].mxu0
      %v5887 = vadd.f32 0.0, %v5886
      %v5888 = vpop.f32.mrb[0].mxu0
      %v5889 = vpop.f32.mrb[0].mxu0
      %v5890 = vadd.f32 0.0, %v5889
      %v5891 = vpop.f32.mrb[0].mxu0
      %5892 = vdwg.mxu0
      %v5893 = vadd.f32 %v5635, %v5767
      %v5894 = vadd.f32 %v5636, %v5770
      %v5895 = vadd.f32 %v5637, %v5775
      %v5896 = vadd.f32 %v5638, %v5778
      %v5897 = vadd.f32 %v5639, %v5783
      %v5898 = vadd.f32 %v5640, %v5786
      %v5899 = vadd.f32 %v5641, %v5791
      %v5900 = vadd.f32 %v5642, %v5794
      %v5901 = vadd.f32 %v5643, %v5799
      %v5902 = vadd.f32 %v5644, %v5802
      %v5903 = vadd.f32 %v5645, %v5807
      %v5904 = vadd.f32 %v5646, %v5810
      %v5905 = vadd.f32 %v5647, %v5815
      %v5906 = vadd.f32 %v5648, %v5818
      %v5907 = vadd.f32 %v5649, %v5823
      %v5908 = vadd.f32 %v5650, %v5826
      %v5909 = vadd.f32 %v5651, %v5831
      %v5910 = vadd.f32 %v5652, %v5834
      %v5911 = vadd.f32 %v5653, %v5839
      %v5912 = vadd.f32 %v5654, %v5842
      %v5913 = vadd.f32 %v5655, %v5847
      %v5914 = vadd.f32 %v5656, %v5850
      %v5915 = vadd.f32 %v5657, %v5855
      %v5916 = vadd.f32 %v5658, %v5858
      %v5917 = vadd.f32 %v5659, %v5863
      %v5918 = vadd.f32 %v5660, %v5866
      %v5919 = vadd.f32 %v5661, %v5871
      %v5920 = vadd.f32 %v5662, %v5874
      %v5921 = vadd.f32 %v5663, %v5879
      %v5922 = vadd.f32 %v5664, %v5882
      %v5923 = vadd.f32 %v5665, %v5887
      %v5924 = vadd.f32 %v5666, %v5890
      %v5926 = vshrl.u32 %v3468, 16
      %v5928 = vshll.u32 %v3468, 16
      %v5930 = vrot.slane %v5928, 1
      %v5931 = vor.u32 %v5926, %v5930
      %v5933 = vshll.u32 %v3469, 16
      %v5935 = vrot.slane %v5933, 1
      %v5936 = vsel %vm441, %v5931, %v5935
      %s5938 = scalar_lea.vmem %s3, 512
      %v5939 = vld [vmem:[%s5938] sm:$0xf]
      %v5940 = vld [vmem:[%s5938 + $0x4] sm:$0xf]
      %v5941 = vld [vmem:[%s5938 + $0x8] sm:$0xf]
      %v5942 = vld [vmem:[%s5938 + $0xc] sm:$0xf]
      %v5943 = vld [vmem:[%s5938 + $0x10] sm:$0xf]
      %v5944 = vld [vmem:[%s5938 + $0x14] sm:$0xf]
      %v5945 = vld [vmem:[%s5938 + $0x18] sm:$0xf]
      %v5946 = vld [vmem:[%s5938 + $0x1c] sm:$0xf]
      %v5947 = vld [vmem:[%s5938 + $0x20] sm:$0xf]
      %v5948 = vld [vmem:[%s5938 + $0x24] sm:$0xf]
      %v5949 = vld [vmem:[%s5938 + $0x28] sm:$0xf]
      %v5950 = vld [vmem:[%s5938 + $0x2c] sm:$0xf]
      %v5951 = vld [vmem:[%s5938 + $0x30] sm:$0xf]
      %v5952 = vld [vmem:[%s5938 + $0x34] sm:$0xf]
      %v5953 = vld [vmem:[%s5938 + $0x38] sm:$0xf]
      %v5954 = vld [vmem:[%s5938 + $0x3c] sm:$0xf]
      %v5971 = vunpack.c.l.b16 %v5939
      %v5972 = vunpack.c.l.b16 %v5940
      %v5973 = vunpack.c.l.b16 %v5941
      %v5974 = vunpack.c.l.b16 %v5942
      %v5975 = vunpack.c.l.b16 %v5943
      %v5976 = vunpack.c.l.b16 %v5944
      %v5977 = vunpack.c.l.b16 %v5945
      %v5978 = vunpack.c.l.b16 %v5946
      %v5979 = vunpack.c.l.b16 %v5947
      %v5980 = vunpack.c.l.b16 %v5948
      %v5981 = vunpack.c.l.b16 %v5949
      %v5982 = vunpack.c.l.b16 %v5950
      %v5983 = vunpack.c.l.b16 %v5951
      %v5984 = vunpack.c.l.b16 %v5952
      %v5985 = vunpack.c.l.b16 %v5953
      %v5986 = vunpack.c.l.b16 %v5954
      %v5987 = vpack.c.b16 %v5972, %v5971
      %v5988 = vpack.c.b16 %v5974, %v5973
      %v5989 = vpack.c.b16 %v5976, %v5975
      %v5990 = vpack.c.b16 %v5978, %v5977
      %v5991 = vpack.c.b16 %v5980, %v5979
      %v5992 = vpack.c.b16 %v5982, %v5981
      %v5993 = vpack.c.b16 %v5984, %v5983
      %v5994 = vpack.c.b16 %v5986, %v5985
      %6003 = vmatprep.subr.bf16.mxu0 0
      %6004 = vmatpush1.bf16.msra.mxu0 %v5987
      %6005 = vmatprep.subr.bf16.mxu0 0
      %6006 = vmatpush1.bf16.msra.mxu0 %v5988
      %6007 = vmatprep.subr.bf16.mxu0 0
      %6008 = vmatpush1.bf16.msra.mxu0 %v5989
      %6009 = vmatprep.subr.bf16.mxu0 0
      %6010 = vmatpush1.bf16.msra.mxu0 %v5990
      %6011 = vmatprep.subr.bf16.mxu0 0
      %6012 = vmatpush1.bf16.msra.mxu0 %v5991
      %6013 = vmatprep.subr.bf16.mxu0 0
      %6014 = vmatpush1.bf16.msra.mxu0 %v5992
      %6015 = vmatprep.subr.bf16.mxu0 0
      %6016 = vmatpush1.bf16.msra.mxu0 %v5993
      %6017 = vmatprep.subr.bf16.mxu0 0
      %6018 = vmatpush1.bf16.msra.mxu0 %v5994
      %6019 = vmatprep.subr.bf16.mxu0 0
      %6020 = vmatpush1.bf16.msra.mxu0 0
      %6021 = vmatprep.subr.bf16.mxu0 0
      %6022 = vmatpush1.bf16.msra.mxu0 0
      %6023 = vmatprep.subr.bf16.mxu0 0
      %6024 = vmatpush1.bf16.msra.mxu0 0
      %6025 = vmatprep.subr.bf16.mxu0 0
      %6026 = vmatpush1.bf16.msra.mxu0 0
      %6027 = vmatprep.subr.bf16.mxu0 0
      %6028 = vmatpush1.bf16.msra.mxu0 0
      %6029 = vmatprep.subr.bf16.mxu0 0
      %6030 = vmatpush1.bf16.msra.mxu0 0
      %6031 = vmatprep.subr.bf16.mxu0 0
      %6032 = vmatpush1.bf16.msra.mxu0 0
      %6033 = vmatprep.subr.bf16.mxu0 0
      %6034 = vmatpush1.bf16.msra.mxu0 0
      %6035 = vmatprep.mubr.bf16.mxu0 0
      %6036 = vmatmul.mubr.bf16.gmra.mrb[0].mxu0 %v4165
      %v6037 = vpop.f32.mrb[0].mxu0
      %v6038 = vadd.f32 0.0, %v6037
      %v6039 = vpop.f32.mrb[0].mxu0
      %v6040 = vpop.f32.mrb[0].mxu0
      %v6041 = vadd.f32 0.0, %v6040
      %v6042 = vpop.f32.mrb[0].mxu0
      %6043 = vmatprep.mubr.bf16.mxu0 0
      %6044 = vmatmul.mubr.bf16.gmra.mrb[0].mxu0 %v4177
      %v6045 = vpop.f32.mrb[0].mxu0
      %v6046 = vadd.f32 0.0, %v6045
      %v6047 = vpop.f32.mrb[0].mxu0
      %v6048 = vpop.f32.mrb[0].mxu0
      %v6049 = vadd.f32 0.0, %v6048
      %v6050 = vpop.f32.mrb[0].mxu0
      %6051 = vmatprep.mubr.bf16.mxu0 0
      %6052 = vmatmul.mubr.bf16.gmra.mrb[0].mxu0 %v4189
      %v6053 = vpop.f32.mrb[0].mxu0
      %v6054 = vadd.f32 0.0, %v6053
      %v6055 = vpop.f32.mrb[0].mxu0
      %v6056 = vpop.f32.mrb[0].mxu0
      %v6057 = vadd.f32 0.0, %v6056
      %v6058 = vpop.f32.mrb[0].mxu0
      %6059 = vmatprep.mubr.bf16.mxu0 0
      %6060 = vmatmul.mubr.bf16.gmra.mrb[0].mxu0 %v4201
      %v6061 = vpop.f32.mrb[0].mxu0
      %v6062 = vadd.f32 0.0, %v6061
      %v6063 = vpop.f32.mrb[0].mxu0
      %v6064 = vpop.f32.mrb[0].mxu0
      %v6065 = vadd.f32 0.0, %v6064
      %v6066 = vpop.f32.mrb[0].mxu0
      %6067 = vmatprep.mubr.bf16.mxu0 0
      %6068 = vmatmul.mubr.bf16.gmra.mrb[0].mxu0 %v4213
      %v6069 = vpop.f32.mrb[0].mxu0
      %v6070 = vadd.f32 0.0, %v6069
      %v6071 = vpop.f32.mrb[0].mxu0
      %v6072 = vpop.f32.mrb[0].mxu0
      %v6073 = vadd.f32 0.0, %v6072
      %v6074 = vpop.f32.mrb[0].mxu0
      %6075 = vmatprep.mubr.bf16.mxu0 0
      %6076 = vmatmul.mubr.bf16.gmra.mrb[0].mxu0 %v4225
      %v6077 = vpop.f32.mrb[0].mxu0
      %v6078 = vadd.f32 0.0, %v6077
      %v6079 = vpop.f32.mrb[0].mxu0
      %v6080 = vpop.f32.mrb[0].mxu0
      %v6081 = vadd.f32 0.0, %v6080
      %v6082 = vpop.f32.mrb[0].mxu0
      %6083 = vmatprep.mubr.bf16.mxu0 0
      %6084 = vmatmul.mubr.bf16.gmra.mrb[0].mxu0 %v4237
      %v6085 = vpop.f32.mrb[0].mxu0
      %v6086 = vadd.f32 0.0, %v6085
      %v6087 = vpop.f32.mrb[0].mxu0
      %v6088 = vpop.f32.mrb[0].mxu0
      %v6089 = vadd.f32 0.0, %v6088
      %v6090 = vpop.f32.mrb[0].mxu0
      %6091 = vmatprep.mubr.bf16.mxu0 0
      %6092 = vmatmul.mubr.bf16.gmra.mrb[0].mxu0 %v4249
      %v6093 = vpop.f32.mrb[0].mxu0
      %v6094 = vadd.f32 0.0, %v6093
      %v6095 = vpop.f32.mrb[0].mxu0
      %v6096 = vpop.f32.mrb[0].mxu0
      %v6097 = vadd.f32 0.0, %v6096
      %v6098 = vpop.f32.mrb[0].mxu0
      %6099 = vmatprep.mubr.bf16.mxu0 0
      %6100 = vmatmul.mubr.bf16.gmra.mrb[0].mxu0 %v4261
      %v6101 = vpop.f32.mrb[0].mxu0
      %v6102 = vadd.f32 0.0, %v6101
      %v6103 = vpop.f32.mrb[0].mxu0
      %v6104 = vpop.f32.mrb[0].mxu0
      %v6105 = vadd.f32 0.0, %v6104
      %v6106 = vpop.f32.mrb[0].mxu0
      %6107 = vmatprep.mubr.bf16.mxu0 0
      %6108 = vmatmul.mubr.bf16.gmra.mrb[0].mxu0 %v4273
      %v6109 = vpop.f32.mrb[0].mxu0
      %v6110 = vadd.f32 0.0, %v6109
      %v6111 = vpop.f32.mrb[0].mxu0
      %v6112 = vpop.f32.mrb[0].mxu0
      %v6113 = vadd.f32 0.0, %v6112
      %v6114 = vpop.f32.mrb[0].mxu0
      %6115 = vmatprep.mubr.bf16.mxu0 0
      %6116 = vmatmul.mubr.bf16.gmra.mrb[0].mxu0 %v4285
      %v6117 = vpop.f32.mrb[0].mxu0
      %v6118 = vadd.f32 0.0, %v6117
      %v6119 = vpop.f32.mrb[0].mxu0
      %v6120 = vpop.f32.mrb[0].mxu0
      %v6121 = vadd.f32 0.0, %v6120
      %v6122 = vpop.f32.mrb[0].mxu0
      %6123 = vmatprep.mubr.bf16.mxu0 0
      %6124 = vmatmul.mubr.bf16.gmra.mrb[0].mxu0 %v4297
      %v6125 = vpop.f32.mrb[0].mxu0
      %v6126 = vadd.f32 0.0, %v6125
      %v6127 = vpop.f32.mrb[0].mxu0
      %v6128 = vpop.f32.mrb[0].mxu0
      %v6129 = vadd.f32 0.0, %v6128
      %v6130 = vpop.f32.mrb[0].mxu0
      %6131 = vmatprep.mubr.bf16.mxu0 0
      %6132 = vmatmul.mubr.bf16.gmra.mrb[0].mxu0 %v4309
      %v6133 = vpop.f32.mrb[0].mxu0
      %v6134 = vadd.f32 0.0, %v6133
      %v6135 = vpop.f32.mrb[0].mxu0
      %v6136 = vpop.f32.mrb[0].mxu0
      %v6137 = vadd.f32 0.0, %v6136
      %v6138 = vpop.f32.mrb[0].mxu0
      %6139 = vmatprep.mubr.bf16.mxu0 0
      %6140 = vmatmul.mubr.bf16.gmra.mrb[0].mxu0 %v4321
      %v6141 = vpop.f32.mrb[0].mxu0
      %v6142 = vadd.f32 0.0, %v6141
      %v6143 = vpop.f32.mrb[0].mxu0
      %v6144 = vpop.f32.mrb[0].mxu0
      %v6145 = vadd.f32 0.0, %v6144
      %v6146 = vpop.f32.mrb[0].mxu0
      %6147 = vmatprep.mubr.bf16.mxu0 0
      %6148 = vmatmul.mubr.bf16.gmra.mrb[0].mxu0 %v5136
      %v6149 = vpop.f32.mrb[0].mxu0
      %v6150 = vadd.f32 0.0, %v6149
      %v6151 = vpop.f32.mrb[0].mxu0
      %v6152 = vpop.f32.mrb[0].mxu0
      %v6153 = vadd.f32 0.0, %v6152
      %v6154 = vpop.f32.mrb[0].mxu0
      %6155 = vmatprep.mubr.bf16.mxu0 0
      %6156 = vmatmul.mubr.bf16.gmra.mrb[0].mxu0 %v5936
      %v6157 = vpop.f32.mrb[0].mxu0
      %v6158 = vadd.f32 0.0, %v6157
      %v6159 = vpop.f32.mrb[0].mxu0
      %v6160 = vpop.f32.mrb[0].mxu0
      %v6161 = vadd.f32 0.0, %v6160
      %v6162 = vpop.f32.mrb[0].mxu0
      %6163 = vdwg.mxu0
      %v6164 = vadd.f32 %v5893, %v6038
      %v6165 = vadd.f32 %v5894, %v6041
      %v6166 = vadd.f32 %v5895, %v6046
      %v6167 = vadd.f32 %v5896, %v6049
      %v6168 = vadd.f32 %v5897, %v6054
      %v6169 = vadd.f32 %v5898, %v6057
      %v6170 = vadd.f32 %v5899, %v6062
      %v6171 = vadd.f32 %v5900, %v6065
      %v6172 = vadd.f32 %v5901, %v6070
      %v6173 = vadd.f32 %v5902, %v6073
      %v6174 = vadd.f32 %v5903, %v6078
      %v6175 = vadd.f32 %v5904, %v6081
      %v6176 = vadd.f32 %v5905, %v6086
      %v6177 = vadd.f32 %v5906, %v6089
      %v6178 = vadd.f32 %v5907, %v6094
      %v6179 = vadd.f32 %v5908, %v6097
      %v6180 = vadd.f32 %v5909, %v6102
      %v6181 = vadd.f32 %v5910, %v6105
      %v6182 = vadd.f32 %v5911, %v6110
      %v6183 = vadd.f32 %v5912, %v6113
      %v6184 = vadd.f32 %v5913, %v6118
      %v6185 = vadd.f32 %v5914, %v6121
      %v6186 = vadd.f32 %v5915, %v6126
      %v6187 = vadd.f32 %v5916, %v6129
      %v6188 = vadd.f32 %v5917, %v6134
      %v6189 = vadd.f32 %v5918, %v6137
      %v6190 = vadd.f32 %v5919, %v6142
      %v6191 = vadd.f32 %v5920, %v6145
      %v6192 = vadd.f32 %v5921, %v6150
      %v6193 = vadd.f32 %v5922, %v6153
      %v6194 = vadd.f32 %v5923, %v6158
      %v6195 = vadd.f32 %v5924, %v6161
      %v6196 = vld [vmem:[%s4] sm:$0x1]
      %v6198 = vlaneseq
      %v6199 = vshrl.u32 %v6198, 7
      %v6200 = vsub.s32 0, %v6199
      %v6201 = vrot.slane %v6196, %v6200
      %v6203 = vadd.f32 %v6164, %v6201
      %v6204 = vadd.f32 %v6165, %v6201
      %v6205 = vadd.f32 %v6166, %v6201
      %v6206 = vadd.f32 %v6167, %v6201
      %v6207 = vadd.f32 %v6168, %v6201
      %v6208 = vadd.f32 %v6169, %v6201
      %v6209 = vadd.f32 %v6170, %v6201
      %v6210 = vadd.f32 %v6171, %v6201
      %v6211 = vadd.f32 %v6172, %v6201
      %v6212 = vadd.f32 %v6173, %v6201
      %v6213 = vadd.f32 %v6174, %v6201
      %v6214 = vadd.f32 %v6175, %v6201
      %v6215 = vadd.f32 %v6176, %v6201
      %v6216 = vadd.f32 %v6177, %v6201
      %v6217 = vadd.f32 %v6178, %v6201
      %v6218 = vadd.f32 %v6179, %v6201
      %v6219 = vadd.f32 %v6180, %v6201
      %v6220 = vadd.f32 %v6181, %v6201
      %v6221 = vadd.f32 %v6182, %v6201
      %v6222 = vadd.f32 %v6183, %v6201
      %v6223 = vadd.f32 %v6184, %v6201
      %v6224 = vadd.f32 %v6185, %v6201
      %v6225 = vadd.f32 %v6186, %v6201
      %v6226 = vadd.f32 %v6187, %v6201
      %v6227 = vadd.f32 %v6188, %v6201
      %v6228 = vadd.f32 %v6189, %v6201
      %v6229 = vadd.f32 %v6190, %v6201
      %v6230 = vadd.f32 %v6191, %v6201
      %v6231 = vadd.f32 %v6192, %v6201
      %v6232 = vadd.f32 %v6193, %v6201
      %v6233 = vadd.f32 %v6194, %v6201
      %v6234 = vadd.f32 %v6195, %v6201
      %s6235 = scalar_lea.vmem %s252, 48
      %v6236 = vld [vmem:[%s6235 + $0x1] sm:$0xff]
      %v6237 = vld [vmem:[%s6235 + $0x9] sm:$0xff]
      %v6238 = vld [vmem:[%s6235 + $0x19] sm:$0xff]
      %v6239 = vld [vmem:[%s6235 + $0x21] sm:$0xff]
      %v6240 = vld [vmem:[%s6235 + $0x31] sm:$0xff]
      %v6241 = vld [vmem:[%s6235 + $0x39] sm:$0xff]
      %v6242 = vld [vmem:[%s6235 + $0x49] sm:$0xff]
      %v6243 = vld [vmem:[%s6235 + $0x51] sm:$0xff]
      %v6244 = vld [vmem:[%s6235 + $0x61] sm:$0xff]
      %v6245 = vld [vmem:[%s6235 + $0x69] sm:$0xff]
      %v6246 = vld [vmem:[%s6235 + $0x79] sm:$0xff]
      %v6247 = vld [vmem:[%s6235 + $0x81] sm:$0xff]
      %v6248 = vld [vmem:[%s6235 + $0x91] sm:$0xff]
      %v6249 = vld [vmem:[%s6235 + $0x99] sm:$0xff]
      %v6250 = vld [vmem:[%s6235 + $0xa9] sm:$0xff]
      %v6251 = vld [vmem:[%s6235 + $0xb1] sm:$0xff]
      %v6252 = vld [vmem:[%s6235 + $0xc1] sm:$0xff]
      %v6253 = vld [vmem:[%s6235 + $0xc9] sm:$0xff]
      %v6254 = vld [vmem:[%s6235 + $0xd9] sm:$0xff]
      %v6255 = vld [vmem:[%s6235 + $0xe1] sm:$0xff]
      %v6256 = vld [vmem:[%s6235 + $0xf1] sm:$0xff]
      %v6257 = vld [vmem:[%s6235 + $0xf9] sm:$0xff]
      %v6258 = vld [vmem:[%s6235 + $0x109] sm:$0xff]
      %v6259 = vld [vmem:[%s6235 + $0x111] sm:$0xff]
      %v6260 = vld [vmem:[%s6235 + $0x121] sm:$0xff]
      %v6261 = vld [vmem:[%s6235 + $0x129] sm:$0xff]
      %v6262 = vld [vmem:[%s6235 + $0x139] sm:$0xff]
      %v6263 = vld [vmem:[%s6235 + $0x141] sm:$0xff]
      %v6264 = vld [vmem:[%s6235 + $0x151] sm:$0xff]
      %v6265 = vld [vmem:[%s6235 + $0x159] sm:$0xff]
      %v6266 = vld [vmem:[%s6235 + $0x169] sm:$0xff]
      %v6267 = vld [vmem:[%s6235 + $0x171] sm:$0xff]
      %v6268 = vadd.f32 %v6203, %v6236
      %v6269 = vadd.f32 %v6204, %v6237
      %v6270 = vadd.f32 %v6205, %v6238
      %v6271 = vadd.f32 %v6206, %v6239
      %v6272 = vadd.f32 %v6207, %v6240
      %v6273 = vadd.f32 %v6208, %v6241
      %v6274 = vadd.f32 %v6209, %v6242
      %v6275 = vadd.f32 %v6210, %v6243
      %v6276 = vadd.f32 %v6211, %v6244
      %v6277 = vadd.f32 %v6212, %v6245
      %v6278 = vadd.f32 %v6213, %v6246
      %v6279 = vadd.f32 %v6214, %v6247
      %v6280 = vadd.f32 %v6215, %v6248
      %v6281 = vadd.f32 %v6216, %v6249
      %v6282 = vadd.f32 %v6217, %v6250
      %v6283 = vadd.f32 %v6218, %v6251
      %v6284 = vadd.f32 %v6219, %v6252
      %v6285 = vadd.f32 %v6220, %v6253
      %v6286 = vadd.f32 %v6221, %v6254
      %v6287 = vadd.f32 %v6222, %v6255
      %v6288 = vadd.f32 %v6223, %v6256
      %v6289 = vadd.f32 %v6224, %v6257
      %v6290 = vadd.f32 %v6225, %v6258
      %v6291 = vadd.f32 %v6226, %v6259
      %v6292 = vadd.f32 %v6227, %v6260
      %v6293 = vadd.f32 %v6228, %v6261
      %v6294 = vadd.f32 %v6229, %v6262
      %v6295 = vadd.f32 %v6230, %v6263
      %v6296 = vadd.f32 %v6231, %v6264
      %v6297 = vadd.f32 %v6232, %v6265
      %v6298 = vadd.f32 %v6233, %v6266
      %v6299 = vadd.f32 %v6234, %v6267
      %6300 = vst [vmem:[%s262] sm:$0xff] %v6268
      %6301 = vst [vmem:[%s262 + $0x8] sm:$0xff] %v6269
      %6302 = vst [vmem:[%s262 + $0x10] sm:$0xff] %v6270
      %6303 = vst [vmem:[%s262 + $0x18] sm:$0xff] %v6271
      %6304 = vst [vmem:[%s262 + $0x20] sm:$0xff] %v6272
      %6305 = vst [vmem:[%s262 + $0x28] sm:$0xff] %v6273
      %6306 = vst [vmem:[%s262 + $0x30] sm:$0xff] %v6274
      %6307 = vst [vmem:[%s262 + $0x38] sm:$0xff] %v6275
      %6308 = vst [vmem:[%s262 + $0x40] sm:$0xff] %v6276
      %6309 = vst [vmem:[%s262 + $0x48] sm:$0xff] %v6277
      %6310 = vst [vmem:[%s262 + $0x50] sm:$0xff] %v6278
      %6311 = vst [vmem:[%s262 + $0x58] sm:$0xff] %v6279
      %6312 = vst [vmem:[%s262 + $0x60] sm:$0xff] %v6280
      %6313 = vst [vmem:[%s262 + $0x68] sm:$0xff] %v6281
      %6314 = vst [vmem:[%s262 + $0x70] sm:$0xff] %v6282
      %6315 = vst [vmem:[%s262 + $0x78] sm:$0xff] %v6283
      %6316 = vst [vmem:[%s262 + $0x80] sm:$0xff] %v6284
      %6317 = vst [vmem:[%s262 + $0x88] sm:$0xff] %v6285
      %6318 = vst [vmem:[%s262 + $0x90] sm:$0xff] %v6286
      %6319 = vst [vmem:[%s262 + $0x98] sm:$0xff] %v6287
      %6320 = vst [vmem:[%s262 + $0xa0] sm:$0xff] %v6288
      %6321 = vst [vmem:[%s262 + $0xa8] sm:$0xff] %v6289
      %6322 = vst [vmem:[%s262 + $0xb0] sm:$0xff] %v6290
      %6323 = vst [vmem:[%s262 + $0xb8] sm:$0xff] %v6291
      %6324 = vst [vmem:[%s262 + $0xc0] sm:$0xff] %v6292
      %6325 = vst [vmem:[%s262 + $0xc8] sm:$0xff] %v6293
      %6326 = vst [vmem:[%s262 + $0xd0] sm:$0xff] %v6294
      %6327 = vst [vmem:[%s262 + $0xd8] sm:$0xff] %v6295
      %6328 = vst [vmem:[%s262 + $0xe0] sm:$0xff] %v6296
      %6329 = vst [vmem:[%s262 + $0xe8] sm:$0xff] %v6297
      %6330 = vst [vmem:[%s262 + $0xf0] sm:$0xff] %v6298
      %6331 = vst [vmem:[%s262 + $0xf8] sm:$0xff] %v6299
      %s6332 = smul.u32 16, %s21
      %p6333 = scmp.lt.s32.totalorder %s20, 1
      %s6334 = scalar_select %p6333, %s20, 1
      %p6335 = scmp.lt.s32.totalorder %s6332, 15
      %s6336 = scalar_select %p6335, %s6332, 15
      %s6337 = smul.addr %s6336, 2
      %s6338 = smul.addr %s6334, 32
      %s6339 = sadd.s32 %s6337, %s6338
      %s6340 = smul.addr %s6339, 8
      %s6341 = scalar_lea.vmem %s5, %s6340
      // Predicated region
      $region45: #{residual_block_pallas.1} parent=39 // pred_check
        %p6342 = pneg %p160
      $region46: #{residual_block_pallas.1} parent=39 // pred_check_branch
        %6344 = sbr.rel (%p6342) target = $region48
      $region47: #{residual_block_pallas.1} parent=39 // pred_region
        %s6345 = smul.u32 16, %s21
      $region48: #{residual_block_pallas.1} parent=39 // pred_fallthru
        _
    $region40: #{residual_block_pallas.1} parent=5 // pred_fallthru
      _
    %p6346 = scmp.le.s32.totalorder 2, %s11
    // Predicated region
    $region49: #{residual_block_pallas.1} parent=5 // pred_check
      %p6347 = pneg %p6346
    $region50: #{residual_block_pallas.1} parent=5 // pred_check_branch
      %6349 = sbr.rel (%p6347) target = $region52
    $region51: #{residual_block_pallas.1} parent=5 // pred_region
      %s6350 = ssub.s32 %s11, 2
      // Predicated region
      $region53: #{residual_block_pallas.1} parent=51 // pred_check
        %p6351 = pneg %p166
      $region54: #{residual_block_pallas.1} parent=51 // pred_check_branch
        %6353 = sbr.rel (%p6351) target = $region56
      $region55: #{residual_block_pallas.1} parent=51 // pred_region
        %s6354 = smul.u32 16, %s23
        %p6355 = scmp.lt.s32.totalorder %s22, 1
        %s6356 = scalar_select %p6355, %s22, 1
        %p6357 = scmp.lt.s32.totalorder %s6354, 15
        %s6358 = scalar_select %p6357, %s6354, 15
        %s6359 = smul.addr %s6358, 2
        %s6360 = smul.addr %s6356, 32
        %s6361 = sadd.s32 %s6359, %s6360
        %s6362 = smul.addr %s6361, 8
        %s6363 = scalar_lea.vmem %s5, %s6362
      $region56: #{residual_block_pallas.1} parent=51 // pred_fallthru
        _
    $region52: #{residual_block_pallas.1} parent=5 // pred_fallthru
      _
  $region6: #{residual_block_pallas.1} parent=0 // loop_footer
    %s15 = sadd.s32 1, %s11
  $region7: #{residual_block_pallas.1} parent=0 // loop_footer_branch
    %10 = sbr.rel target = $region3
  $region8: #{residual_block_pallas.1} parent=0 // loop_exit
    _

</llo_original>
